<compile_context>
chip_gen: v7x
topology: tpu7x:2x2x1
jax: 0.10.0
libtpu: 0.0.40
codegen_flags: <defaults>
</compile_context>

<pallas_src>
import functools

import jax
import jax.numpy as jnp
from jax.experimental import pallas as pl
from jax.experimental.pallas import tpu as pltpu

HEADS = 8            # GraphTransformer default
DIM_HEAD = 64        # GraphTransformer default
INNER = HEADS * DIM_HEAD
LN_EPS = 1e-5        # nn.LayerNorm default
MXU_DTYPE = jnp.bfloat16   # matmul-operand dtype; accumulation stays f32

# rows of the packed per-layer parameter slab (single f32 VMEM DMA)
ROW_LN1_G, ROW_LN1_B = 0, 1
ROW_BQ, ROW_BQR, ROW_BK, ROW_BKR, ROW_BV = 2, 3, 4, 5, 6
ROW_BE, ROW_BO = 7, 8
ROW_WGX_A, ROW_WGR_A = 9, 10
ROW_LN2_G, ROW_LN2_B = 11, 12
ROW_B1, ROW_B2 = 13, 14
ROW_WGX_F, ROW_WGR_F = 15, 16
N_SLAB_ROWS = 17


def _full_spec(shape):
    zeros = (0,) * len(shape)
    return pl.BlockSpec(shape, lambda *_: zeros)


# --------------------------- small linear kernel -----------------------------

def _linear_kernel(x_ref, w_ref, b_ref, o_ref):
    o_ref[...] = (jnp.dot(x_ref[...].astype(MXU_DTYPE),
                          w_ref[...].astype(MXU_DTYPE),
                          preferred_element_type=jnp.float32) + b_ref[...])


def linear(x, w, b):
    M, K = x.shape
    N = w.shape[1]
    return pl.pallas_call(
        _linear_kernel,
        out_shape=jax.ShapeDtypeStruct((M, N), jnp.float32),
        grid=(1,),
        in_specs=[_full_spec((M, K)), _full_spec((K, N)), _full_spec((1, N))],
        out_specs=_full_spec((M, N)),
    )(x, w, b.reshape(1, N))


# ------------------------ fused transformer layer ----------------------------

def _layer_kernel(nodes_ref, edges_ref, mrow_ref, mcol_ref, cos_ref, sin_ref,
                  slab_ref, wqkv_ref, we_ref, wo_ref, w1_ref, w2_ref,
                  out_ref, *, n, tq, d, hidden):
    f32 = jnp.float32
    mxu = MXU_DTYPE
    scale = DIM_HEAD ** -0.5

    q_lo = pl.program_id(0) * tq
    if tq % 8 == 0:
        q_lo = pl.multiple_of(q_lo, 8)

    def row(r, w):                                   # (1, w) slice of param slab
        return slab_ref[r:r + 1, :w]

    def layer_norm(x, g, b):
        mu = jnp.mean(x, axis=-1, keepdims=True)
        var = jnp.mean(jnp.square(x - mu), axis=-1, keepdims=True)
        return (x - mu) * jax.lax.rsqrt(var + LN_EPS) * g + b

    nodes_all = nodes_ref[...]                        # (n, d)  f32
    nodes_q = nodes_ref[pl.ds(q_lo, tq), :]           # (tq, d) residual rows

    # ---- PreNorm + fused projections ----------------------------------------
    ln1_g, ln1_b = row(ROW_LN1_G, d), row(ROW_LN1_B, d)
    x_all = layer_norm(nodes_all, ln1_g, ln1_b)       # keys / values need all rows
    x_q = layer_norm(nodes_q, ln1_g, ln1_b)           # queries only tile rows

    # wqkv = [wq | rot(wq) | wk | rot(wk) | wv]  (d, 5*INNER) bf16  (RoPE folded)
    proj_q = jnp.dot(x_q.astype(mxu), wqkv_ref[:, :2 * INNER],
                     preferred_element_type=f32)      # (tq, 2*INNER)
    proj_kv = jnp.dot(x_all.astype(mxu), wqkv_ref[:, 2 * INNER:],
                      preferred_element_type=f32)     # (n, 3*INNER)
    q_pre = proj_q[:, :INNER] + row(ROW_BQ, INNER)
    q_rot = proj_q[:, INNER:] + row(ROW_BQR, INNER)
    k_pre = proj_kv[:, :INNER] + row(ROW_BK, INNER)
    k_rot = proj_kv[:, INNER:2 * INNER] + row(ROW_BKR, INNER)
    v_all = proj_kv[:, 2 * INNER:] + row(ROW_BV, INNER)

    # ---- per-tile edge projection (never the full (N,N,H*Dh) tensor) ---------
    e_flat = jnp.dot(edges_ref[...], we_ref[...],
                     preferred_element_type=f32) + row(ROW_BE, INNER)
    e3 = e_flat.reshape(tq, n, INNER)                 # (tq, n, H*Dh)

    # ---- RoPE tables (one (N, Dh) table, broadcast per head in-kernel) -------
    cos_q = cos_ref[pl.ds(q_lo, tq), :]               # (tq, Dh)
    sin_q = sin_ref[pl.ds(q_lo, tq), :]
    cos_k = cos_ref[...]                              # (n, Dh)
    sin_k = sin_ref[...]

    # ---- attention mask built in-kernel from the 1-D node mask ----------------
    allowed = (mrow_ref[...] > 0.0) & (mcol_ref[...] > 0.0)   # (tq, n)
    neg = -jnp.finfo(f32).max

    # ---- attention: heads accumulate straight into the output projection ------
    o_acc = jnp.zeros((tq, d), f32)
    for h in range(HEADS):
        sl = slice(h * DIM_HEAD, (h + 1) * DIM_HEAD)
        qh = q_pre[:, sl] * cos_q + q_rot[:, sl] * sin_q       # RoPE, VPU
        kh = k_pre[:, sl] * cos_k + k_rot[:, sl] * sin_k
        vh = v_all[:, sl]
        eh = e3[:, :, sl]                                      # (tq, n, Dh)

        # sim[i,j] = scale * q[i] . (k[j] + e[i,j])
        sim_qk = jax.lax.dot_general(qh.astype(mxu), kh.astype(mxu),
                                     (((1,), (1,)), ((), ())),
                                     preferred_element_type=f32)   # MXU
        sim_e = jnp.sum(qh[:, None, :] * eh, axis=-1)              # VPU + XLU
        sim = (sim_qk + sim_e) * scale
        sim = jnp.where(allowed, sim, neg)
        sim = sim - jnp.max(sim, axis=-1, keepdims=True)
        p = jnp.exp(sim)
        p = p / jnp.sum(p, axis=-1, keepdims=True)                 # f32 softmax

        # out[i] = sum_j p[i,j] * (v[j] + e[i,j]), folded into Wo rows
        out_h = jnp.dot(p.astype(mxu), vh.astype(mxu),
                        preferred_element_type=f32)                # MXU
        out_e = jnp.sum(p[:, :, None] * eh, axis=1)                # VPU + XLU
        o_acc = o_acc + jnp.dot((out_h + out_e).astype(mxu), wo_ref[sl, :],
                                preferred_element_type=f32)
    o_attn = o_acc + row(ROW_BO, d)

    # ---- gated residual #1 (VPU mul + lane reduce; no (d,1) matmul) -----------
    gl = (jnp.sum(o_attn * row(ROW_WGX_A, d), axis=-1, keepdims=True)
          + jnp.sum(nodes_q * row(ROW_WGR_A, d), axis=-1, keepdims=True))
    gate = jax.nn.sigmoid(gl)
    mid = o_attn * gate + nodes_q * (1.0 - gate)

    # ---- feed-forward (PreNorm -> W1 -> GELU -> W2) + gated residual #2 -------
    x2 = layer_norm(mid, row(ROW_LN2_G, d), row(ROW_LN2_B, d))
    hid = jnp.dot(x2.astype(mxu), w1_ref[...],
                  preferred_element_type=f32) + row(ROW_B1, hidden)
    # TODO(synk): exact erf-GELU replaced by in-kernel tanh-approx GELU (erf lowering in Mosaic not guaranteed).
    hid = 0.5 * hid * (1.0 + jnp.tanh(
        0.7978845608028654 * (hid + 0.044715 * hid * hid * hid)))
    y = jnp.dot(hid.astype(mxu), w2_ref[...],
                preferred_element_type=f32) + row(ROW_B2, d)

    gl2 = (jnp.sum(y * row(ROW_WGX_F, d), axis=-1, keepdims=True)
           + jnp.sum(mid * row(ROW_WGR_F, d), axis=-1, keepdims=True))
    gate2 = jax.nn.sigmoid(gl2)
    out_ref[...] = y * gate2 + mid * (1.0 - gate2)


def _pick_tq(n):
    """Largest query-row tile such that the f32 edge tile stays under ~8 MiB."""
    budget_rows = max(1, (8 * 1024 * 1024) // (n * INNER * 4))
    for tq in range(n, 0, -1):
        if n % tq:
            continue
        ok_out = (tq % 8 == 0) or (tq == n)
        ok_edges = ((tq * n) % 8 == 0) or (tq == n)
        if tq <= budget_rows and ok_out and ok_edges:
            return tq
    return n


def _vmem_limit(n, tq, d, e_dim, hidden):
    est = 4 * tq * n * INNER                          # f32 projected edge tile
    est += 2 * 2 * tq * n * e_dim                     # bf16 edge rows, dbl-buffered
    est += 4 * (n * 3 * INNER + tq * 2 * INNER)       # q/kv projections (f32)
    est += 2 * (d * 5 * INNER + e_dim * INNER + INNER * d
                + d * hidden + hidden * d)            # bf16 weights
    est += 4 * (2 * n * d + 2 * n * DIM_HEAD
                + N_SLAB_ROWS * max(INNER, hidden, d, 128))
    est = 2 * est + (8 << 20)
    return int(min(max(est, 32 << 20), 64 << 20))     # safe on v5e/v6e/v7x


def transformer_layer(nodes, edges_bf16, mask_row, mask_col, cosf, sinf,
                      kp, tq, vmem_limit):
    n, d = nodes.shape
    e_dim = edges_bf16.shape[1]
    hidden = kp["w1"].shape[1]
    n_tiles = n // tq
    slab = kp["slab"]

    kern = functools.partial(_layer_kernel, n=n, tq=tq, d=d, hidden=hidden)
    in_specs = [
        pl.BlockSpec((n, d), lambda i: (0, 0)),                 # nodes (full)
        pl.BlockSpec((tq * n, e_dim), lambda i: (i, 0)),        # edge rows of q-tile
        pl.BlockSpec((tq, 1), lambda i: (i, 0)),                # node mask (rows)
        pl.BlockSpec((1, n), lambda i: (0, 0)),                 # node mask (cols)
        pl.BlockSpec((n, DIM_HEAD), lambda i: (0, 0)),          # RoPE cos
        pl.BlockSpec((n, DIM_HEAD), lambda i: (0, 0)),          # RoPE sin
        pl.BlockSpec(slab.shape, lambda i: (0, 0)),             # packed param slab
        pl.BlockSpec(kp["wqkv"].shape, lambda i: (0, 0)),
        pl.BlockSpec(kp["we"].shape, lambda i: (0, 0)),
        pl.BlockSpec(kp["wo"].shape, lambda i: (0, 0)),
        pl.BlockSpec(kp["w1"].shape, lambda i: (0, 0)),
        pl.BlockSpec(kp["w2"].shape, lambda i: (0, 0)),
    ]
    return pl.pallas_call(
        kern,
        out_shape=jax.ShapeDtypeStruct((n, d), jnp.float32),
        grid=(n_tiles,),
        in_specs=in_specs,
        out_specs=pl.BlockSpec((tq, d), lambda i: (i, 0)),
        compiler_params=pltpu.CompilerParams(
            dimension_semantics=("parallel",),      # megacore split on v7x
            vmem_limit_bytes=vmem_limit),
    )(nodes, edges_bf16, mask_row, mask_col, cosf, sinf, slab,
      kp["wqkv"], kp["we"], kp["wo"], kp["w1"], kp["w2"])


# ---------------- wrapper-side param preparation (RoPE folding etc.) ----------

def _rot_half_cols(w):
    """out[:, 2t] = -w[:, 2t+1], out[:, 2t+1] = w[:, 2t]  (rotate_half on cols)."""
    io, oo = w.shape
    w3 = w.reshape(io, oo // 2, 2)
    return jnp.stack([-w3[:, :, 1], w3[:, :, 0]], axis=-1).reshape(io, oo)


def _rot_half_vec(b):
    b2 = b.reshape(-1, 2)
    return jnp.stack([-b2[:, 1], b2[:, 0]], axis=-1).reshape(-1)


def _prep_layer(lp, d, slab_w):
    wq, bq = lp["wq"], lp["bq"]
    wkv, bkv = lp["wkv"], lp["bkv"]
    wk, wv = wkv[:, :INNER], wkv[:, INNER:]
    bk, bv = bkv[:INNER], bkv[INNER:]
    wqkv = jnp.concatenate(
        [wq, _rot_half_cols(wq), wk, _rot_half_cols(wk), wv], axis=1)

    wg_a = lp["wg_attn"][:, 0]        # GatedResidual: gate([x, res, x-res]) split
    wgx_a = wg_a[:d] + wg_a[2 * d:]
    wgr_a = wg_a[d:2 * d] - wg_a[2 * d:]
    wg_f = lp["wg_ff"][:, 0]
    wgx_f = wg_f[:d] + wg_f[2 * d:]
    wgr_f = wg_f[d:2 * d] - wg_f[2 * d:]

    def pad(v):
        return jnp.zeros((slab_w,), jnp.float32).at[:v.shape[0]].set(v)

    rows = [lp["ln1_g"], lp["ln1_b"],
            bq, _rot_half_vec(bq), bk, _rot_half_vec(bk), bv,
            lp["be"], lp["bo"], wgx_a, wgr_a,
            lp["ln2_g"], lp["ln2_b"], lp["b1"], lp["b2"], wgx_f, wgr_f]
    slab = jnp.stack([pad(r) for r in rows], axis=0)

    return {"slab": slab,
            "wqkv": wqkv.astype(MXU_DTYPE),
            "we": lp["we"].astype(MXU_DTYPE),
            "wo": lp["wo"].astype(MXU_DTYPE),
            "w1": lp["w1"].astype(MXU_DTYPE),
            "w2": lp["w2"].astype(MXU_DTYPE)}


# ------------------------------- forward -------------------------------------

def forward(params, x, adj, mask):
    n = x.shape[0]
    d = params["in_w"].shape[1]

    nodes = linear(x, params["in_w"], params["in_b"])          # input_proj

    # nn.Embedding(2, edge_dim) lookup on the adjacency matrix (wrapper gather);
    # shared across layers, projected per-layer / per-tile inside the kernel.
    edges_flat = params["adj_emb"][adj].reshape(n * n, -1).astype(MXU_DTYPE)
    e_dim = edges_flat.shape[1]

    maskf = mask.astype(jnp.float32)
    mask_row = maskf.reshape(n, 1)
    mask_col = maskf.reshape(1, n)

    # RoPE tables (rotary_embedding_torch style, interleaved pairs), (N, Dh):
    inv_freq = 1.0 / (10000.0 ** (jnp.arange(0, DIM_HEAD, 2,
                                              dtype=jnp.float32) / DIM_HEAD))
    freqs = jnp.arange(n, dtype=jnp.float32)[:, None] * inv_freq[None, :]
    freqs = jnp.repeat(freqs, 2, axis=-1)                      # (N, Dh)
    cosf = jnp.cos(freqs)
    sinf = jnp.sin(freqs)

    hidden = params["layers"][0]["w1"].shape[1]
    slab_w = ((max(INNER, hidden, d) + 127) // 128) * 128
    tq = _pick_tq(n)
    vmem_limit = _vmem_limit(n, tq, d, e_dim, hidden)

    for lp in params["layers"]:
        kp = _prep_layer(lp, d, slab_w)
        nodes = transformer_layer(nodes, edges_flat, mask_row, mask_col,
                                  cosf, sinf, kp, tq, vmem_limit)

    return linear(nodes, params["cls_w"], params["cls_b"])     # classifier


# ------------------------------ init ------------------------------------------

def init_params(key, input_dim, model_dim, edge_dim, depth, num_classes):
    keys = iter(jax.random.split(key, 128))

    def lin(in_d, out_d):
        lim = 1.0 / (in_d ** 0.5)
        w = jax.random.uniform(next(keys), (in_d, out_d), jnp.float32, -lim, lim)
        b = jax.random.uniform(next(keys), (out_d,), jnp.float32, -lim, lim)
        return w, b

    params = {}
    params["in_w"], params["in_b"] = lin(input_dim, model_dim)
    params["adj_emb"] = jax.random.normal(next(keys), (2, edge_dim), jnp.float32)
    layers = []
    for _ in range(depth):
        lp = {}
        lp["ln1_g"] = jnp.ones((model_dim,), jnp.float32)
        lp["ln1_b"] = jnp.zeros((model_dim,), jnp.float32)
        lp["wq"], lp["bq"] = lin(model_dim, INNER)
        lp["wkv"], lp["bkv"] = lin(model_dim, 2 * INNER)
        lp["we"], lp["be"] = lin(edge_dim, INNER)
        lp["wo"], lp["bo"] = lin(INNER, model_dim)
        lp["wg_attn"], _ = lin(3 * model_dim, 1)          # GatedResidual (no bias)
        lp["ln2_g"] = jnp.ones((model_dim,), jnp.float32)
        lp["ln2_b"] = jnp.zeros((model_dim,), jnp.float32)
        lp["w1"], lp["b1"] = lin(model_dim, 4 * model_dim)
        lp["w2"], lp["b2"] = lin(4 * model_dim, model_dim)
        lp["wg_ff"], _ = lin(3 * model_dim, 1)
        layers.append(lp)
    params["layers"] = layers
    params["cls_w"], params["cls_b"] = lin(model_dim, num_classes)
    return params


# ------------------------------ main -------------------------------------------

if __name__ == "__main__":
    N_NODES, INPUT_DIM, MODEL_DIM = 8, 16, 32
    EDGE_DIM, DEPTH, NUM_CLASSES = 16, 2, 4

    key = jax.random.PRNGKey(0)
    kp, kx, ka = jax.random.split(key, 3)
    params = init_params(kp, INPUT_DIM, MODEL_DIM, EDGE_DIM, DEPTH, NUM_CLASSES)

    x = jax.random.normal(kx, (N_NODES, INPUT_DIM), jnp.float32)
    adj = (jax.random.uniform(ka, (N_NODES, N_NODES)) > 0.5).astype(jnp.int32)
    adj = jnp.maximum(adj, adj.T)                 # symmetric {0,1} adjacency
    mask = jnp.ones((N_NODES,), dtype=bool)

    logits = jax.jit(forward)(params, x, adj, mask)
    jax.block_until_ready(logits)
    assert logits.shape == (N_NODES, NUM_CLASSES)
    assert bool(jnp.all(jnp.isfinite(logits)))
    print("KERNEL_OK")
</pallas_src>

<mosaic_0001>
module attributes {stable_mosaic.version = 11 : i64} {
  func.func @_linear_kernel(%arg0: i32, %arg1: memref<8x16xf32, #tpu.memory_space<vmem>>, %arg2: memref<16x32xf32, #tpu.memory_space<vmem>>, %arg3: memref<1x32xf32, #tpu.memory_space<vmem>>, %arg4: memref<8x32xf32, #tpu.memory_space<vmem>>) attributes {dimension_semantics = [#tpu.dimension_semantics<arbitrary>], iteration_bounds = array<i64: 1>, scalar_prefetch = 0 : i64, scratch_operands = 0 : i64, tpu.core_type = #tpu.core_type<tc>, window_params = [{pipeline_mode = #tpu.pipeline_mode<synchronous>, transform_indices = @transform_0, window_bounds = array<i64: 8, 16>}, {pipeline_mode = #tpu.pipeline_mode<synchronous>, transform_indices = @transform_1, window_bounds = array<i64: 16, 32>}, {pipeline_mode = #tpu.pipeline_mode<synchronous>, transform_indices = @transform_2, window_bounds = array<i64: 1, 32>}, {pipeline_mode = #tpu.pipeline_mode<synchronous>, transform_indices = @transform_3, window_bounds = array<i64: 8, 32>}]} {
    %c0 = arith.constant 0 : index
    %c0_0 = arith.constant 0 : index
    %0 = vector.load %arg1[%c0, %c0_0] : memref<8x16xf32, #tpu.memory_space<vmem>>, vector<8x16xf32>
    %1 = arith.truncf %0 : vector<8x16xf32> to vector<8x16xbf16>
    %c0_1 = arith.constant 0 : index
    %c0_2 = arith.constant 0 : index
    %2 = vector.load %arg2[%c0_1, %c0_2] : memref<16x32xf32, #tpu.memory_space<vmem>>, vector<16x32xf32>
    %3 = arith.truncf %2 : vector<16x32xf32> to vector<16x32xbf16>
    %cst = arith.constant dense<0.000000e+00> : vector<8x32xf32>
    %4 = tpu.matmul %1, %3, %cst {dimension_numbers = #tpu.dot_dimension_numbers<[1], [0], [0], [1], [0, 0, 1, 1], [], []>} : vector<8x16xbf16>, vector<16x32xbf16>, vector<8x32xf32> -> vector<8x32xf32>
    %c0_3 = arith.constant 0 : index
    %c0_4 = arith.constant 0 : index
    %5 = vector.load %arg3[%c0_3, %c0_4] : memref<1x32xf32, #tpu.memory_space<vmem>>, vector<1x32xf32>
    %6 = vector.broadcast %5 : vector<1x32xf32> to vector<8x32xf32>
    %7 = arith.addf %4, %6 : vector<8x32xf32>
    %c0_5 = arith.constant 0 : index
    %c0_6 = arith.constant 0 : index
    %8 = vector.load %arg4[%c0_5, %c0_6] : memref<8x32xf32, #tpu.memory_space<vmem>>, vector<8x32xf32>
    tpu.vector_store %arg4[%c0_5, %c0_6], %7 {strides = array<i32>} : memref<8x32xf32, #tpu.memory_space<vmem>>, vector<8x32xf32>,
    return
  }
  func.func @transform_0(%arg0: i32) -> (i32, i32) {
    %c0_i32 = arith.constant 0 : i32
    %c0_i32_0 = arith.constant 0 : i32
    %c0_i32_1 = arith.constant 0 : i32
    return %c0_i32, %c0_i32_0 : i32, i32
  }
  func.func @transform_1(%arg0: i32) -> (i32, i32) {
    %c0_i32 = arith.constant 0 : i32
    %c0_i32_0 = arith.constant 0 : i32
    %c0_i32_1 = arith.constant 0 : i32
    return %c0_i32, %c0_i32_0 : i32, i32
  }
  func.func @transform_2(%arg0: i32) -> (i32, i32) {
    %c0_i32 = arith.constant 0 : i32
    %c0_i32_0 = arith.constant 0 : i32
    %c0_i32_1 = arith.constant 0 : i32
    return %c0_i32, %c0_i32_0 : i32, i32
  }
  func.func @transform_3(%arg0: i32) -> (i32, i32) {
    %c0_i32 = arith.constant 0 : i32
    %c0_i32_0 = arith.constant 0 : i32
    %c0_i32_1 = arith.constant 0 : i32
    return %c0_i32, %c0_i32_0 : i32, i32
  }
}

module attributes {stable_mosaic.version = 11 : i64} {
  func.func @_linear_kernel(%arg0: i32, %arg1: memref<8x32xf32, #tpu.memory_space<vmem>>, %arg2: memref<32x4xf32, #tpu.memory_space<vmem>>, %arg3: memref<1x4xf32, #tpu.memory_space<vmem>>, %arg4: memref<8x4xf32, #tpu.memory_space<vmem>>) attributes {dimension_semantics = [#tpu.dimension_semantics<arbitrary>], iteration_bounds = array<i64: 1>, scalar_prefetch = 0 : i64, scratch_operands = 0 : i64, tpu.core_type = #tpu.core_type<tc>, window_params = [{pipeline_mode = #tpu.pipeline_mode<synchronous>, transform_indices = @transform_0, window_bounds = array<i64: 8, 32>}, {pipeline_mode = #tpu.pipeline_mode<synchronous>, transform_indices = @transform_1, window_bounds = array<i64: 32, 4>}, {pipeline_mode = #tpu.pipeline_mode<synchronous>, transform_indices = @transform_2, window_bounds = array<i64: 1, 4>}, {pipeline_mode = #tpu.pipeline_mode<synchronous>, transform_indices = @transform_3, window_bounds = array<i64: 8, 4>}]} {
    %c0 = arith.constant 0 : index
    %c0_0 = arith.constant 0 : index
    %0 = vector.load %arg1[%c0, %c0_0] : memref<8x32xf32, #tpu.memory_space<vmem>>, vector<8x32xf32>
    %1 = arith.truncf %0 : vector<8x32xf32> to vector<8x32xbf16>
    %c0_1 = arith.constant 0 : index
    %c0_2 = arith.constant 0 : index
    %2 = vector.load %arg2[%c0_1, %c0_2] : memref<32x4xf32, #tpu.memory_space<vmem>>, vector<32x4xf32>
    %3 = arith.truncf %2 : vector<32x4xf32> to vector<32x4xbf16>
    %cst = arith.constant dense<0.000000e+00> : vector<8x4xf32>
    %4 = tpu.matmul %1, %3, %cst {dimension_numbers = #tpu.dot_dimension_numbers<[1], [0], [0], [1], [0, 0, 1, 1], [], []>} : vector<8x32xbf16>, vector<32x4xbf16>, vector<8x4xf32> -> vector<8x4xf32>
    %c0_3 = arith.constant 0 : index
    %c0_4 = arith.constant 0 : index
    %5 = vector.load %arg3[%c0_3, %c0_4] : memref<1x4xf32, #tpu.memory_space<vmem>>, vector<1x4xf32>
    %6 = vector.broadcast %5 : vector<1x4xf32> to vector<8x4xf32>
    %7 = arith.addf %4, %6 : vector<8x4xf32>
    %c0_5 = arith.constant 0 : index
    %c0_6 = arith.constant 0 : index
    %8 = vector.load %arg4[%c0_5, %c0_6] : memref<8x4xf32, #tpu.memory_space<vmem>>, vector<8x4xf32>
    tpu.vector_store %arg4[%c0_5, %c0_6], %7 {strides = array<i32>} : memref<8x4xf32, #tpu.memory_space<vmem>>, vector<8x4xf32>,
    return
  }
  func.func @transform_0(%arg0: i32) -> (i32, i32) {
    %c0_i32 = arith.constant 0 : i32
    %c0_i32_0 = arith.constant 0 : i32
    %c0_i32_1 = arith.constant 0 : i32
    return %c0_i32, %c0_i32_0 : i32, i32
  }
  func.func @transform_1(%arg0: i32) -> (i32, i32) {
    %c0_i32 = arith.constant 0 : i32
    %c0_i32_0 = arith.constant 0 : i32
    %c0_i32_1 = arith.constant 0 : i32
    return %c0_i32, %c0_i32_0 : i32, i32
  }
  func.func @transform_2(%arg0: i32) -> (i32, i32) {
    %c0_i32 = arith.constant 0 : i32
    %c0_i32_0 = arith.constant 0 : i32
    %c0_i32_1 = arith.constant 0 : i32
    return %c0_i32, %c0_i32_0 : i32, i32
  }
  func.func @transform_3(%arg0: i32) -> (i32, i32) {
    %c0_i32 = arith.constant 0 : i32
    %c0_i32_0 = arith.constant 0 : i32
    %c0_i32_1 = arith.constant 0 : i32
    return %c0_i32, %c0_i32_0 : i32, i32
  }
}

module attributes {stable_mosaic.version = 11 : i64} {
  func.func @_layer_kernel(%arg0: i32, %arg1: memref<8x32xf32, #tpu.memory_space<vmem>>, %arg2: memref<64x16xbf16, #tpu.memory_space<vmem>>, %arg3: memref<8x1xf32, #tpu.memory_space<vmem>>, %arg4: memref<1x8xf32, #tpu.memory_space<vmem>>, %arg5: memref<8x64xf32, #tpu.memory_space<vmem>>, %arg6: memref<8x64xf32, #tpu.memory_space<vmem>>, %arg7: memref<17x512xf32, #tpu.memory_space<vmem>>, %arg8: memref<32x2560xbf16, #tpu.memory_space<vmem>>, %arg9: memref<16x512xbf16, #tpu.memory_space<vmem>>, %arg10: memref<512x32xbf16, #tpu.memory_space<vmem>>, %arg11: memref<32x128xbf16, #tpu.memory_space<vmem>>, %arg12: memref<128x32xbf16, #tpu.memory_space<vmem>>, %arg13: memref<8x32xf32, #tpu.memory_space<vmem>>) attributes {dimension_semantics = [#tpu.dimension_semantics<parallel>], iteration_bounds = array<i64: 1>, scalar_prefetch = 0 : i64, scratch_operands = 0 : i64, tpu.core_type = #tpu.core_type<tc>, window_params = [{pipeline_mode = #tpu.pipeline_mode<synchronous>, transform_indices = @transform_0, window_bounds = array<i64: 8, 32>}, {transform_indices = @transform_1, window_bounds = array<i64: 64, 16>}, {transform_indices = @transform_2, window_bounds = array<i64: 8, 1>}, {pipeline_mode = #tpu.pipeline_mode<synchronous>, transform_indices = @transform_3, window_bounds = array<i64: 1, 8>}, {pipeline_mode = #tpu.pipeline_mode<synchronous>, transform_indices = @transform_4, window_bounds = array<i64: 8, 64>}, {pipeline_mode = #tpu.pipeline_mode<synchronous>, transform_indices = @transform_5, window_bounds = array<i64: 8, 64>}, {pipeline_mode = #tpu.pipeline_mode<synchronous>, transform_indices = @transform_6, window_bounds = array<i64: 17, 512>}, {pipeline_mode = #tpu.pipeline_mode<synchronous>, transform_indices = @transform_7, window_bounds = array<i64: 32, 2560>}, {pipeline_mode = #tpu.pipeline_mode<synchronous>, transform_indices = @transform_8, window_bounds = array<i64: 16, 512>}, {pipeline_mode = #tpu.pipeline_mode<synchronous>, transform_indices = @transform_9, window_bounds = array<i64: 512, 32>}, {pipeline_mode = #tpu.pipeline_mode<synchronous>, transform_indices = @transform_10, window_bounds = array<i64: 32, 128>}, {pipeline_mode = #tpu.pipeline_mode<synchronous>, transform_indices = @transform_11, window_bounds = array<i64: 128, 32>}, {transform_indices = @transform_12, window_bounds = array<i64: 8, 32>}]} {
    %c8_i32 = arith.constant 8 : i32
    %0 = arith.muli %arg0, %c8_i32 : i32
    %1 = tpu.assume_multiple %0, 8 : i32
    %c0 = arith.constant 0 : index
    %c0_0 = arith.constant 0 : index
    %2 = vector.load %arg1[%c0, %c0_0] : memref<8x32xf32, #tpu.memory_space<vmem>>, vector<8x32xf32>
    %3 = arith.index_cast %1 : i32 to index
    %c0_1 = arith.constant 0 : index
    %4 = vector.load %arg1[%3, %c0_1] : memref<8x32xf32, #tpu.memory_space<vmem>>, vector<8x32xf32>
    %c0_2 = arith.constant 0 : index
    %c0_3 = arith.constant 0 : index
    %5 = vector.load %arg7[%c0_2, %c0_3] : memref<17x512xf32, #tpu.memory_space<vmem>>, vector<1x32xf32>
    %c1 = arith.constant 1 : index
    %c0_4 = arith.constant 0 : index
    %6 = vector.load %arg7[%c1, %c0_4] : memref<17x512xf32, #tpu.memory_space<vmem>>, vector<1x32xf32>
    %cst = arith.constant dense<0.000000e+00> : vector<8xf32>
    %7 = vector.multi_reduction <add>, %2, %cst [1] : vector<8x32xf32> to vector<8xf32>
    %8 = vector.shape_cast %7 : vector<8xf32> to vector<8x1xf32>
    %cst_5 = arith.constant 3.200000e+01 : f32
    %9 = vector.broadcast %cst_5 : f32 to vector<8x1xf32>
    %10 = arith.divf %8, %9 : vector<8x1xf32>
    %11 = vector.broadcast %10 : vector<8x1xf32> to vector<8x32xf32>
    %12 = arith.subf %2, %11 : vector<8x32xf32>
    %13 = arith.mulf %12, %12 : vector<8x32xf32>
    %cst_6 = arith.constant dense<0.000000e+00> : vector<8xf32>
    %14 = vector.multi_reduction <add>, %13, %cst_6 [1] : vector<8x32xf32> to vector<8xf32>
    %15 = vector.shape_cast %14 : vector<8xf32> to vector<8x1xf32>
    %cst_7 = arith.constant 3.200000e+01 : f32
    %16 = vector.broadcast %cst_7 : f32 to vector<8x1xf32>
    %17 = arith.divf %15, %16 : vector<8x1xf32>
    %18 = vector.broadcast %10 : vector<8x1xf32> to vector<8x32xf32>
    %19 = arith.subf %2, %18 : vector<8x32xf32>
    %cst_8 = arith.constant 9.99999974E-6 : f32
    %20 = vector.broadcast %cst_8 : f32 to vector<8x1xf32>
    %21 = arith.addf %17, %20 : vector<8x1xf32>
    %22 = math.rsqrt %21 : vector<8x1xf32>
    %23 = vector.broadcast %22 : vector<8x1xf32> to vector<8x32xf32>
    %24 = arith.mulf %19, %23 : vector<8x32xf32>
    %25 = vector.broadcast %5 : vector<1x32xf32> to vector<8x32xf32>
    %26 = arith.mulf %24, %25 : vector<8x32xf32>
    %27 = vector.broadcast %6 : vector<1x32xf32> to vector<8x32xf32>
    %28 = arith.addf %26, %27 : vector<8x32xf32>
    %cst_9 = arith.constant dense<0.000000e+00> : vector<8xf32>
    %29 = vector.multi_reduction <add>, %4, %cst_9 [1] : vector<8x32xf32> to vector<8xf32>
    %30 = vector.shape_cast %29 : vector<8xf32> to vector<8x1xf32>
    %cst_10 = arith.constant 3.200000e+01 : f32
    %31 = vector.broadcast %cst_10 : f32 to vector<8x1xf32>
    %32 = arith.divf %30, %31 : vector<8x1xf32>
    %33 = vector.broadcast %32 : vector<8x1xf32> to vector<8x32xf32>
    %34 = arith.subf %4, %33 : vector<8x32xf32>
    %35 = arith.mulf %34, %34 : vector<8x32xf32>
    %cst_11 = arith.constant dense<0.000000e+00> : vector<8xf32>
    %36 = vector.multi_reduction <add>, %35, %cst_11 [1] : vector<8x32xf32> to vector<8xf32>
    %37 = vector.shape_cast %36 : vector<8xf32> to vector<8x1xf32>
    %cst_12 = arith.constant 3.200000e+01 : f32
    %38 = vector.broadcast %cst_12 : f32 to vector<8x1xf32>
    %39 = arith.divf %37, %38 : vector<8x1xf32>
    %40 = vector.broadcast %32 : vector<8x1xf32> to vector<8x32xf32>
    %41 = arith.subf %4, %40 : vector<8x32xf32>
    %cst_13 = arith.constant 9.99999974E-6 : f32
    %42 = vector.broadcast %cst_13 : f32 to vector<8x1xf32>
    %43 = arith.addf %39, %42 : vector<8x1xf32>
    %44 = math.rsqrt %43 : vector<8x1xf32>
    %45 = vector.broadcast %44 : vector<8x1xf32> to vector<8x32xf32>
    %46 = arith.mulf %41, %45 : vector<8x32xf32>
    %47 = vector.broadcast %5 : vector<1x32xf32> to vector<8x32xf32>
    %48 = arith.mulf %46, %47 : vector<8x32xf32>
    %49 = vector.broadcast %6 : vector<1x32xf32> to vector<8x32xf32>
    %50 = arith.addf %48, %49 : vector<8x32xf32>
    %51 = arith.truncf %50 : vector<8x32xf32> to vector<8x32xbf16>
    %c0_14 = arith.constant 0 : index
    %c0_15 = arith.constant 0 : index
    %52 = vector.load %arg8[%c0_14, %c0_15] : memref<32x2560xbf16, #tpu.memory_space<vmem>>, vector<32x1024xbf16>
    %cst_16 = arith.constant dense<0.000000e+00> : vector<8x1024xf32>
    %53 = tpu.matmul %51, %52, %cst_16 {dimension_numbers = #tpu.dot_dimension_numbers<[1], [0], [0], [1], [0, 0, 1, 1], [], []>} : vector<8x32xbf16>, vector<32x1024xbf16>, vector<8x1024xf32> -> vector<8x1024xf32>
    %54 = arith.truncf %28 : vector<8x32xf32> to vector<8x32xbf16>
    %c0_17 = arith.constant 0 : index
    %c1024 = arith.constant 1024 : index
    %55 = vector.load %arg8[%c0_17, %c1024] : memref<32x2560xbf16, #tpu.memory_space<vmem>>, vector<32x1536xbf16>
    %cst_18 = arith.constant dense<0.000000e+00> : vector<8x1536xf32>
    %56 = tpu.matmul %54, %55, %cst_18 {dimension_numbers = #tpu.dot_dimension_numbers<[1], [0], [0], [1], [0, 0, 1, 1], [], []>} : vector<8x32xbf16>, vector<32x1536xbf16>, vector<8x1536xf32> -> vector<8x1536xf32>
    %57 = vector.extract_strided_slice %53 {offsets = [0, 0], sizes = [8, 512], strides = [1, 1]} : vector<8x1024xf32> to vector<8x512xf32>
    %c2 = arith.constant 2 : index
    %c0_19 = arith.constant 0 : index
    %58 = vector.load %arg7[%c2, %c0_19] : memref<17x512xf32, #tpu.memory_space<vmem>>, vector<1x512xf32>
    %59 = vector.broadcast %58 : vector<1x512xf32> to vector<8x512xf32>
    %60 = arith.addf %57, %59 : vector<8x512xf32>
    %61 = vector.extract_strided_slice %53 {offsets = [0, 512], sizes = [8, 512], strides = [1, 1]} : vector<8x1024xf32> to vector<8x512xf32>
    %c3 = arith.constant 3 : index
    %c0_20 = arith.constant 0 : index
    %62 = vector.load %arg7[%c3, %c0_20] : memref<17x512xf32, #tpu.memory_space<vmem>>, vector<1x512xf32>
    %63 = vector.broadcast %62 : vector<1x512xf32> to vector<8x512xf32>
    %64 = arith.addf %61, %63 : vector<8x512xf32>
    %65 = vector.extract_strided_slice %56 {offsets = [0, 0], sizes = [8, 512], strides = [1, 1]} : vector<8x1536xf32> to vector<8x512xf32>
    %c4 = arith.constant 4 : index
    %c0_21 = arith.constant 0 : index
    %66 = vector.load %arg7[%c4, %c0_21] : memref<17x512xf32, #tpu.memory_space<vmem>>, vector<1x512xf32>
    %67 = vector.broadcast %66 : vector<1x512xf32> to vector<8x512xf32>
    %68 = arith.addf %65, %67 : vector<8x512xf32>
    %69 = vector.extract_strided_slice %56 {offsets = [0, 512], sizes = [8, 512], strides = [1, 1]} : vector<8x1536xf32> to vector<8x512xf32>
    %c5 = arith.constant 5 : index
    %c0_22 = arith.constant 0 : index
    %70 = vector.load %arg7[%c5, %c0_22] : memref<17x512xf32, #tpu.memory_space<vmem>>, vector<1x512xf32>
    %71 = vector.broadcast %70 : vector<1x512xf32> to vector<8x512xf32>
    %72 = arith.addf %69, %71 : vector<8x512xf32>
    %73 = vector.extract_strided_slice %56 {offsets = [0, 1024], sizes = [8, 512], strides = [1, 1]} : vector<8x1536xf32> to vector<8x512xf32>
    %c6 = arith.constant 6 : index
    %c0_23 = arith.constant 0 : index
    %74 = vector.load %arg7[%c6, %c0_23] : memref<17x512xf32, #tpu.memory_space<vmem>>, vector<1x512xf32>
    %75 = vector.broadcast %74 : vector<1x512xf32> to vector<8x512xf32>
    %76 = arith.addf %73, %75 : vector<8x512xf32>
    %c0_24 = arith.constant 0 : index
    %c0_25 = arith.constant 0 : index
    %77 = vector.load %arg2[%c0_24, %c0_25] : memref<64x16xbf16, #tpu.memory_space<vmem>>, vector<64x16xbf16>
    %c0_26 = arith.constant 0 : index
    %c0_27 = arith.constant 0 : index
    %78 = vector.load %arg9[%c0_26, %c0_27] : memref<16x512xbf16, #tpu.memory_space<vmem>>, vector<16x512xbf16>
    %cst_28 = arith.constant dense<0.000000e+00> : vector<64x512xf32>
    %79 = tpu.matmul %77, %78, %cst_28 {dimension_numbers = #tpu.dot_dimension_numbers<[1], [0], [0], [1], [0, 0, 1, 1], [], []>} : vector<64x16xbf16>, vector<16x512xbf16>, vector<64x512xf32> -> vector<64x512xf32>
    %c7 = arith.constant 7 : index
    %c0_29 = arith.constant 0 : index
    %80 = vector.load %arg7[%c7, %c0_29] : memref<17x512xf32, #tpu.memory_space<vmem>>, vector<1x512xf32>
    %81 = vector.broadcast %80 : vector<1x512xf32> to vector<64x512xf32>
    %82 = arith.addf %79, %81 : vector<64x512xf32>
    %83 = vector.shape_cast %82 : vector<64x512xf32> to vector<8x8x512xf32>
    %84 = arith.index_cast %1 : i32 to index
    %c0_30 = arith.constant 0 : index
    %85 = vector.load %arg5[%84, %c0_30] : memref<8x64xf32, #tpu.memory_space<vmem>>, vector<8x64xf32>
    %86 = arith.index_cast %1 : i32 to index
    %c0_31 = arith.constant 0 : index
    %87 = vector.load %arg6[%86, %c0_31] : memref<8x64xf32, #tpu.memory_space<vmem>>, vector<8x64xf32>
    %c0_32 = arith.constant 0 : index
    %c0_33 = arith.constant 0 : index
    %88 = vector.load %arg5[%c0_32, %c0_33] : memref<8x64xf32, #tpu.memory_space<vmem>>, vector<8x64xf32>
    %c0_34 = arith.constant 0 : index
    %c0_35 = arith.constant 0 : index
    %89 = vector.load %arg6[%c0_34, %c0_35] : memref<8x64xf32, #tpu.memory_space<vmem>>, vector<8x64xf32>
    %c0_36 = arith.constant 0 : index
    %c0_37 = arith.constant 0 : index
    %90 = vector.load %arg3[%c0_36, %c0_37] : memref<8x1xf32, #tpu.memory_space<vmem>>, vector<8x1xf32>
    %cst_38 = arith.constant 0.000000e+00 : f32
    %91 = vector.broadcast %cst_38 : f32 to vector<8x1xf32>
    %92 = arith.cmpf ogt, %90, %91 : vector<8x1xf32>
    %c0_39 = arith.constant 0 : index
    %c0_40 = arith.constant 0 : index
    %93 = vector.load %arg4[%c0_39, %c0_40] : memref<1x8xf32, #tpu.memory_space<vmem>>, vector<1x8xf32>
    %cst_41 = arith.constant 0.000000e+00 : f32
    %94 = vector.broadcast %cst_41 : f32 to vector<1x8xf32>
    %95 = arith.cmpf ogt, %93, %94 : vector<1x8xf32>
    %96 = vector.broadcast %92 : vector<8x1xi1> to vector<8x8xi1>
    %97 = vector.broadcast %95 : vector<1x8xi1> to vector<8x8xi1>
    %98 = arith.andi %96, %97 : vector<8x8xi1>
    %cst_42 = arith.constant 0.000000e+00 : f32
    %99 = vector.broadcast %cst_42 : f32 to vector<8x32xf32>
    %100 = vector.extract_strided_slice %60 {offsets = [0, 0], sizes = [8, 64], strides = [1, 1]} : vector<8x512xf32> to vector<8x64xf32>
    %101 = arith.mulf %100, %85 : vector<8x64xf32>
    %102 = vector.extract_strided_slice %64 {offsets = [0, 0], sizes = [8, 64], strides = [1, 1]} : vector<8x512xf32> to vector<8x64xf32>
    %103 = arith.mulf %102, %87 : vector<8x64xf32>
    %104 = arith.addf %101, %103 : vector<8x64xf32>
    %105 = vector.extract_strided_slice %68 {offsets = [0, 0], sizes = [8, 64], strides = [1, 1]} : vector<8x512xf32> to vector<8x64xf32>
    %106 = arith.mulf %105, %88 : vector<8x64xf32>
    %107 = vector.extract_strided_slice %72 {offsets = [0, 0], sizes = [8, 64], strides = [1, 1]} : vector<8x512xf32> to vector<8x64xf32>
    %108 = arith.mulf %107, %89 : vector<8x64xf32>
    %109 = arith.addf %106, %108 : vector<8x64xf32>
    %110 = vector.extract_strided_slice %76 {offsets = [0, 0], sizes = [8, 64], strides = [1, 1]} : vector<8x512xf32> to vector<8x64xf32>
    %111 = vector.extract_strided_slice %83 {offsets = [0, 0, 0], sizes = [8, 8, 64], strides = [1, 1, 1]} : vector<8x8x512xf32> to vector<8x8x64xf32>
    %112 = arith.truncf %104 : vector<8x64xf32> to vector<8x64xbf16>
    %113 = arith.truncf %109 : vector<8x64xf32> to vector<8x64xbf16>
    %cst_43 = arith.constant dense<0.000000e+00> : vector<8x8xf32>
    %114 = tpu.matmul %112, %113, %cst_43 {dimension_numbers = #tpu.dot_dimension_numbers<[1], [1], [0], [0], [0, 0, 1, 0], [], []>} : vector<8x64xbf16>, vector<8x64xbf16>, vector<8x8xf32> -> vector<8x8xf32>
    %115 = vector.shape_cast %104 : vector<8x64xf32> to vector<8x1x64xf32>
    %116 = vector.broadcast %115 : vector<8x1x64xf32> to vector<8x8x64xf32>
    %117 = arith.mulf %116, %111 : vector<8x8x64xf32>
    %cst_44 = arith.constant dense<0.000000e+00> : vector<8x8xf32>
    %118 = vector.multi_reduction <add>, %117, %cst_44 [2] : vector<8x8x64xf32> to vector<8x8xf32>
    %119 = arith.addf %114, %118 : vector<8x8xf32>
    %cst_45 = arith.constant 1.250000e-01 : f32
    %120 = vector.broadcast %cst_45 : f32 to vector<8x8xf32>
    %121 = arith.mulf %119, %120 : vector<8x8xf32>
    %cst_46 = arith.constant -3.40282347E+38 : f32
    %122 = vector.broadcast %cst_46 : f32 to vector<8x8xf32>
    %123 = arith.select %98, %121, %122 : vector<8x8xi1>, vector<8x8xf32>
    %cst_47 = arith.constant dense<0xFF800000> : vector<8xf32>
    %124 = vector.multi_reduction <maximumf>, %123, %cst_47 [1] : vector<8x8xf32> to vector<8xf32>
    %125 = vector.shape_cast %124 : vector<8xf32> to vector<8x1xf32>
    %126 = vector.broadcast %125 : vector<8x1xf32> to vector<8x8xf32>
    %127 = arith.subf %123, %126 : vector<8x8xf32>
    %128 = math.exp %127 : vector<8x8xf32>
    %cst_48 = arith.constant dense<0.000000e+00> : vector<8xf32>
    %129 = vector.multi_reduction <add>, %128, %cst_48 [1] : vector<8x8xf32> to vector<8xf32>
    %130 = vector.shape_cast %129 : vector<8xf32> to vector<8x1xf32>
    %131 = vector.broadcast %130 : vector<8x1xf32> to vector<8x8xf32>
    %132 = arith.divf %128, %131 : vector<8x8xf32>
    %133 = arith.truncf %132 : vector<8x8xf32> to vector<8x8xbf16>
    %134 = arith.truncf %110 : vector<8x64xf32> to vector<8x64xbf16>
    %cst_49 = arith.constant dense<0.000000e+00> : vector<8x64xf32>
    %135 = tpu.matmul %133, %134, %cst_49 {dimension_numbers = #tpu.dot_dimension_numbers<[1], [0], [0], [1], [0, 0, 1, 1], [], []>} : vector<8x8xbf16>, vector<8x64xbf16>, vector<8x64xf32> -> vector<8x64xf32>
    %136 = vector.shape_cast %132 : vector<8x8xf32> to vector<8x8x1xf32>
    %137 = vector.broadcast %136 : vector<8x8x1xf32> to vector<8x8x64xf32>
    %138 = arith.mulf %137, %111 : vector<8x8x64xf32>
    %cst_50 = arith.constant dense<0.000000e+00> : vector<8x64xf32>
    %139 = vector.multi_reduction <add>, %138, %cst_50 [1] : vector<8x8x64xf32> to vector<8x64xf32>
    %140 = arith.addf %135, %139 : vector<8x64xf32>
    %141 = arith.truncf %140 : vector<8x64xf32> to vector<8x64xbf16>
    %c0_51 = arith.constant 0 : index
    %c0_52 = arith.constant 0 : index
    %142 = vector.load %arg10[%c0_51, %c0_52] : memref<512x32xbf16, #tpu.memory_space<vmem>>, vector<64x32xbf16>
    %cst_53 = arith.constant dense<0.000000e+00> : vector<8x32xf32>
    %143 = tpu.matmul %141, %142, %cst_53 {dimension_numbers = #tpu.dot_dimension_numbers<[1], [0], [0], [1], [0, 0, 1, 1], [], []>} : vector<8x64xbf16>, vector<64x32xbf16>, vector<8x32xf32> -> vector<8x32xf32>
    %144 = arith.addf %99, %143 : vector<8x32xf32>
    %145 = vector.extract_strided_slice %60 {offsets = [0, 64], sizes = [8, 64], strides = [1, 1]} : vector<8x512xf32> to vector<8x64xf32>
    %146 = arith.mulf %145, %85 : vector<8x64xf32>
    %147 = vector.extract_strided_slice %64 {offsets = [0, 64], sizes = [8, 64], strides = [1, 1]} : vector<8x512xf32> to vector<8x64xf32>
    %148 = arith.mulf %147, %87 : vector<8x64xf32>
    %149 = arith.addf %146, %148 : vector<8x64xf32>
    %150 = vector.extract_strided_slice %68 {offsets = [0, 64], sizes = [8, 64], strides = [1, 1]} : vector<8x512xf32> to vector<8x64xf32>
    %151 = arith.mulf %150, %88 : vector<8x64xf32>
    %152 = vector.extract_strided_slice %72 {offsets = [0, 64], sizes = [8, 64], strides = [1, 1]} : vector<8x512xf32> to vector<8x64xf32>
    %153 = arith.mulf %152, %89 : vector<8x64xf32>
    %154 = arith.addf %151, %153 : vector<8x64xf32>
    %155 = vector.extract_strided_slice %76 {offsets = [0, 64], sizes = [8, 64], strides = [1, 1]} : vector<8x512xf32> to vector<8x64xf32>
    %156 = vector.extract_strided_slice %83 {offsets = [0, 0, 64], sizes = [8, 8, 64], strides = [1, 1, 1]} : vector<8x8x512xf32> to vector<8x8x64xf32>
    %157 = arith.truncf %149 : vector<8x64xf32> to vector<8x64xbf16>
    %158 = arith.truncf %154 : vector<8x64xf32> to vector<8x64xbf16>
    %cst_54 = arith.constant dense<0.000000e+00> : vector<8x8xf32>
    %159 = tpu.matmul %157, %158, %cst_54 {dimension_numbers = #tpu.dot_dimension_numbers<[1], [1], [0], [0], [0, 0, 1, 0], [], []>} : vector<8x64xbf16>, vector<8x64xbf16>, vector<8x8xf32> -> vector<8x8xf32>
    %160 = vector.shape_cast %149 : vector<8x64xf32> to vector<8x1x64xf32>
    %161 = vector.broadcast %160 : vector<8x1x64xf32> to vector<8x8x64xf32>
    %162 = arith.mulf %161, %156 : vector<8x8x64xf32>
    %cst_55 = arith.constant dense<0.000000e+00> : vector<8x8xf32>
    %163 = vector.multi_reduction <add>, %162, %cst_55 [2] : vector<8x8x64xf32> to vector<8x8xf32>
    %164 = arith.addf %159, %163 : vector<8x8xf32>
    %cst_56 = arith.constant 1.250000e-01 : f32
    %165 = vector.broadcast %cst_56 : f32 to vector<8x8xf32>
    %166 = arith.mulf %164, %165 : vector<8x8xf32>
    %cst_57 = arith.constant -3.40282347E+38 : f32
    %167 = vector.broadcast %cst_57 : f32 to vector<8x8xf32>
    %168 = arith.select %98, %166, %167 : vector<8x8xi1>, vector<8x8xf32>
    %cst_58 = arith.constant dense<0xFF800000> : vector<8xf32>
    %169 = vector.multi_reduction <maximumf>, %168, %cst_58 [1] : vector<8x8xf32> to vector<8xf32>
    %170 = vector.shape_cast %169 : vector<8xf32> to vector<8x1xf32>
    %171 = vector.broadcast %170 : vector<8x1xf32> to vector<8x8xf32>
    %172 = arith.subf %168, %171 : vector<8x8xf32>
    %173 = math.exp %172 : vector<8x8xf32>
    %cst_59 = arith.constant dense<0.000000e+00> : vector<8xf32>
    %174 = vector.multi_reduction <add>, %173, %cst_59 [1] : vector<8x8xf32> to vector<8xf32>
    %175 = vector.shape_cast %174 : vector<8xf32> to vector<8x1xf32>
    %176 = vector.broadcast %175 : vector<8x1xf32> to vector<8x8xf32>
    %177 = arith.divf %173, %176 : vector<8x8xf32>
    %178 = arith.truncf %177 : vector<8x8xf32> to vector<8x8xbf16>
    %179 = arith.truncf %155 : vector<8x64xf32> to vector<8x64xbf16>
    %cst_60 = arith.constant dense<0.000000e+00> : vector<8x64xf32>
    %180 = tpu.matmul %178, %179, %cst_60 {dimension_numbers = #tpu.dot_dimension_numbers<[1], [0], [0], [1], [0, 0, 1, 1], [], []>} : vector<8x8xbf16>, vector<8x64xbf16>, vector<8x64xf32> -> vector<8x64xf32>
    %181 = vector.shape_cast %177 : vector<8x8xf32> to vector<8x8x1xf32>
    %182 = vector.broadcast %181 : vector<8x8x1xf32> to vector<8x8x64xf32>
    %183 = arith.mulf %182, %156 : vector<8x8x64xf32>
    %cst_61 = arith.constant dense<0.000000e+00> : vector<8x64xf32>
    %184 = vector.multi_reduction <add>, %183, %cst_61 [1] : vector<8x8x64xf32> to vector<8x64xf32>
    %185 = arith.addf %180, %184 : vector<8x64xf32>
    %186 = arith.truncf %185 : vector<8x64xf32> to vector<8x64xbf16>
    %c64 = arith.constant 64 : index
    %c0_62 = arith.constant 0 : index
    %187 = vector.load %arg10[%c64, %c0_62] : memref<512x32xbf16, #tpu.memory_space<vmem>>, vector<64x32xbf16>
    %cst_63 = arith.constant dense<0.000000e+00> : vector<8x32xf32>
    %188 = tpu.matmul %186, %187, %cst_63 {dimension_numbers = #tpu.dot_dimension_numbers<[1], [0], [0], [1], [0, 0, 1, 1], [], []>} : vector<8x64xbf16>, vector<64x32xbf16>, vector<8x32xf32> -> vector<8x32xf32>
    %189 = arith.addf %144, %188 : vector<8x32xf32>
    %190 = vector.extract_strided_slice %60 {offsets = [0, 128], sizes = [8, 64], strides = [1, 1]} : vector<8x512xf32> to vector<8x64xf32>
    %191 = arith.mulf %190, %85 : vector<8x64xf32>
    %192 = vector.extract_strided_slice %64 {offsets = [0, 128], sizes = [8, 64], strides = [1, 1]} : vector<8x512xf32> to vector<8x64xf32>
    %193 = arith.mulf %192, %87 : vector<8x64xf32>
    %194 = arith.addf %191, %193 : vector<8x64xf32>
    %195 = vector.extract_strided_slice %68 {offsets = [0, 128], sizes = [8, 64], strides = [1, 1]} : vector<8x512xf32> to vector<8x64xf32>
    %196 = arith.mulf %195, %88 : vector<8x64xf32>
    %197 = vector.extract_strided_slice %72 {offsets = [0, 128], sizes = [8, 64], strides = [1, 1]} : vector<8x512xf32> to vector<8x64xf32>
    %198 = arith.mulf %197, %89 : vector<8x64xf32>
    %199 = arith.addf %196, %198 : vector<8x64xf32>
    %200 = vector.extract_strided_slice %76 {offsets = [0, 128], sizes = [8, 64], strides = [1, 1]} : vector<8x512xf32> to vector<8x64xf32>
    %201 = vector.extract_strided_slice %83 {offsets = [0, 0, 128], sizes = [8, 8, 64], strides = [1, 1, 1]} : vector<8x8x512xf32> to vector<8x8x64xf32>
    %202 = arith.truncf %194 : vector<8x64xf32> to vector<8x64xbf16>
    %203 = arith.truncf %199 : vector<8x64xf32> to vector<8x64xbf16>
    %cst_64 = arith.constant dense<0.000000e+00> : vector<8x8xf32>
    %204 = tpu.matmul %202, %203, %cst_64 {dimension_numbers = #tpu.dot_dimension_numbers<[1], [1], [0], [0], [0, 0, 1, 0], [], []>} : vector<8x64xbf16>, vector<8x64xbf16>, vector<8x8xf32> -> vector<8x8xf32>
    %205 = vector.shape_cast %194 : vector<8x64xf32> to vector<8x1x64xf32>
    %206 = vector.broadcast %205 : vector<8x1x64xf32> to vector<8x8x64xf32>
    %207 = arith.mulf %206, %201 : vector<8x8x64xf32>
    %cst_65 = arith.constant dense<0.000000e+00> : vector<8x8xf32>
    %208 = vector.multi_reduction <add>, %207, %cst_65 [2] : vector<8x8x64xf32> to vector<8x8xf32>
    %209 = arith.addf %204, %208 : vector<8x8xf32>
    %cst_66 = arith.constant 1.250000e-01 : f32
    %210 = vector.broadcast %cst_66 : f32 to vector<8x8xf32>
    %211 = arith.mulf %209, %210 : vector<8x8xf32>
    %cst_67 = arith.constant -3.40282347E+38 : f32
    %212 = vector.broadcast %cst_67 : f32 to vector<8x8xf32>
    %213 = arith.select %98, %211, %212 : vector<8x8xi1>, vector<8x8xf32>
    %cst_68 = arith.constant dense<0xFF800000> : vector<8xf32>
    %214 = vector.multi_reduction <maximumf>, %213, %cst_68 [1] : vector<8x8xf32> to vector<8xf32>
    %215 = vector.shape_cast %214 : vector<8xf32> to vector<8x1xf32>
    %216 = vector.broadcast %215 : vector<8x1xf32> to vector<8x8xf32>
    %217 = arith.subf %213, %216 : vector<8x8xf32>
    %218 = math.exp %217 : vector<8x8xf32>
    %cst_69 = arith.constant dense<0.000000e+00> : vector<8xf32>
    %219 = vector.multi_reduction <add>, %218, %cst_69 [1] : vector<8x8xf32> to vector<8xf32>
    %220 = vector.shape_cast %219 : vector<8xf32> to vector<8x1xf32>
    %221 = vector.broadcast %220 : vector<8x1xf32> to vector<8x8xf32>
    %222 = arith.divf %218, %221 : vector<8x8xf32>
    %223 = arith.truncf %222 : vector<8x8xf32> to vector<8x8xbf16>
    %224 = arith.truncf %200 : vector<8x64xf32> to vector<8x64xbf16>
    %cst_70 = arith.constant dense<0.000000e+00> : vector<8x64xf32>
    %225 = tpu.matmul %223, %224, %cst_70 {dimension_numbers = #tpu.dot_dimension_numbers<[1], [0], [0], [1], [0, 0, 1, 1], [], []>} : vector<8x8xbf16>, vector<8x64xbf16>, vector<8x64xf32> -> vector<8x64xf32>
    %226 = vector.shape_cast %222 : vector<8x8xf32> to vector<8x8x1xf32>
    %227 = vector.broadcast %226 : vector<8x8x1xf32> to vector<8x8x64xf32>
    %228 = arith.mulf %227, %201 : vector<8x8x64xf32>
    %cst_71 = arith.constant dense<0.000000e+00> : vector<8x64xf32>
    %229 = vector.multi_reduction <add>, %228, %cst_71 [1] : vector<8x8x64xf32> to vector<8x64xf32>
    %230 = arith.addf %225, %229 : vector<8x64xf32>
    %231 = arith.truncf %230 : vector<8x64xf32> to vector<8x64xbf16>
    %c128 = arith.constant 128 : index
    %c0_72 = arith.constant 0 : index
    %232 = vector.load %arg10[%c128, %c0_72] : memref<512x32xbf16, #tpu.memory_space<vmem>>, vector<64x32xbf16>
    %cst_73 = arith.constant dense<0.000000e+00> : vector<8x32xf32>
    %233 = tpu.matmul %231, %232, %cst_73 {dimension_numbers = #tpu.dot_dimension_numbers<[1], [0], [0], [1], [0, 0, 1, 1], [], []>} : vector<8x64xbf16>, vector<64x32xbf16>, vector<8x32xf32> -> vector<8x32xf32>
    %234 = arith.addf %189, %233 : vector<8x32xf32>
    %235 = vector.extract_strided_slice %60 {offsets = [0, 192], sizes = [8, 64], strides = [1, 1]} : vector<8x512xf32> to vector<8x64xf32>
    %236 = arith.mulf %235, %85 : vector<8x64xf32>
    %237 = vector.extract_strided_slice %64 {offsets = [0, 192], sizes = [8, 64], strides = [1, 1]} : vector<8x512xf32> to vector<8x64xf32>
    %238 = arith.mulf %237, %87 : vector<8x64xf32>
    %239 = arith.addf %236, %238 : vector<8x64xf32>
    %240 = vector.extract_strided_slice %68 {offsets = [0, 192], sizes = [8, 64], strides = [1, 1]} : vector<8x512xf32> to vector<8x64xf32>
    %241 = arith.mulf %240, %88 : vector<8x64xf32>
    %242 = vector.extract_strided_slice %72 {offsets = [0, 192], sizes = [8, 64], strides = [1, 1]} : vector<8x512xf32> to vector<8x64xf32>
    %243 = arith.mulf %242, %89 : vector<8x64xf32>
    %244 = arith.addf %241, %243 : vector<8x64xf32>
    %245 = vector.extract_strided_slice %76 {offsets = [0, 192], sizes = [8, 64], strides = [1, 1]} : vector<8x512xf32> to vector<8x64xf32>
    %246 = vector.extract_strided_slice %83 {offsets = [0, 0, 192], sizes = [8, 8, 64], strides = [1, 1, 1]} : vector<8x8x512xf32> to vector<8x8x64xf32>
    %247 = arith.truncf %239 : vector<8x64xf32> to vector<8x64xbf16>
    %248 = arith.truncf %244 : vector<8x64xf32> to vector<8x64xbf16>
    %cst_74 = arith.constant dense<0.000000e+00> : vector<8x8xf32>
    %249 = tpu.matmul %247, %248, %cst_74 {dimension_numbers = #tpu.dot_dimension_numbers<[1], [1], [0], [0], [0, 0, 1, 0], [], []>} : vector<8x64xbf16>, vector<8x64xbf16>, vector<8x8xf32> -> vector<8x8xf32>
    %250 = vector.shape_cast %239 : vector<8x64xf32> to vector<8x1x64xf32>
    %251 = vector.broadcast %250 : vector<8x1x64xf32> to vector<8x8x64xf32>
    %252 = arith.mulf %251, %246 : vector<8x8x64xf32>
    %cst_75 = arith.constant dense<0.000000e+00> : vector<8x8xf32>
    %253 = vector.multi_reduction <add>, %252, %cst_75 [2] : vector<8x8x64xf32> to vector<8x8xf32>
    %254 = arith.addf %249, %253 : vector<8x8xf32>
    %cst_76 = arith.constant 1.250000e-01 : f32
    %255 = vector.broadcast %cst_76 : f32 to vector<8x8xf32>
    %256 = arith.mulf %254, %255 : vector<8x8xf32>
    %cst_77 = arith.constant -3.40282347E+38 : f32
    %257 = vector.broadcast %cst_77 : f32 to vector<8x8xf32>
    %258 = arith.select %98, %256, %257 : vector<8x8xi1>, vector<8x8xf32>
    %cst_78 = arith.constant dense<0xFF800000> : vector<8xf32>
    %259 = vector.multi_reduction <maximumf>, %258, %cst_78 [1] : vector<8x8xf32> to vector<8xf32>
    %260 = vector.shape_cast %259 : vector<8xf32> to vector<8x1xf32>
    %261 = vector.broadcast %260 : vector<8x1xf32> to vector<8x8xf32>
    %262 = arith.subf %258, %261 : vector<8x8xf32>
    %263 = math.exp %262 : vector<8x8xf32>
    %cst_79 = arith.constant dense<0.000000e+00> : vector<8xf32>
    %264 = vector.multi_reduction <add>, %263, %cst_79 [1] : vector<8x8xf32> to vector<8xf32>
    %265 = vector.shape_cast %264 : vector<8xf32> to vector<8x1xf32>
    %266 = vector.broadcast %265 : vector<8x1xf32> to vector<8x8xf32>
    %267 = arith.divf %263, %266 : vector<8x8xf32>
    %268 = arith.truncf %267 : vector<8x8xf32> to vector<8x8xbf16>
    %269 = arith.truncf %245 : vector<8x64xf32> to vector<8x64xbf16>
    %cst_80 = arith.constant dense<0.000000e+00> : vector<8x64xf32>
    %270 = tpu.matmul %268, %269, %cst_80 {dimension_numbers = #tpu.dot_dimension_numbers<[1], [0], [0], [1], [0, 0, 1, 1], [], []>} : vector<8x8xbf16>, vector<8x64xbf16>, vector<8x64xf32> -> vector<8x64xf32>
    %271 = vector.shape_cast %267 : vector<8x8xf32> to vector<8x8x1xf32>
    %272 = vector.broadcast %271 : vector<8x8x1xf32> to vector<8x8x64xf32>
    %273 = arith.mulf %272, %246 : vector<8x8x64xf32>
    %cst_81 = arith.constant dense<0.000000e+00> : vector<8x64xf32>
    %274 = vector.multi_reduction <add>, %273, %cst_81 [1] : vector<8x8x64xf32> to vector<8x64xf32>
    %275 = arith.addf %270, %274 : vector<8x64xf32>
    %276 = arith.truncf %275 : vector<8x64xf32> to vector<8x64xbf16>
    %c192 = arith.constant 192 : index
    %c0_82 = arith.constant 0 : index
    %277 = vector.load %arg10[%c192, %c0_82] : memref<512x32xbf16, #tpu.memory_space<vmem>>, vector<64x32xbf16>
    %cst_83 = arith.constant dense<0.000000e+00> : vector<8x32xf32>
    %278 = tpu.matmul %276, %277, %cst_83 {dimension_numbers = #tpu.dot_dimension_numbers<[1], [0], [0], [1], [0, 0, 1, 1], [], []>} : vector<8x64xbf16>, vector<64x32xbf16>, vector<8x32xf32> -> vector<8x32xf32>
    %279 = arith.addf %234, %278 : vector<8x32xf32>
    %280 = vector.extract_strided_slice %60 {offsets = [0, 256], sizes = [8, 64], strides = [1, 1]} : vector<8x512xf32> to vector<8x64xf32>
    %281 = arith.mulf %280, %85 : vector<8x64xf32>
    %282 = vector.extract_strided_slice %64 {offsets = [0, 256], sizes = [8, 64], strides = [1, 1]} : vector<8x512xf32> to vector<8x64xf32>
    %283 = arith.mulf %282, %87 : vector<8x64xf32>
    %284 = arith.addf %281, %283 : vector<8x64xf32>
    %285 = vector.extract_strided_slice %68 {offsets = [0, 256], sizes = [8, 64], strides = [1, 1]} : vector<8x512xf32> to vector<8x64xf32>
    %286 = arith.mulf %285, %88 : vector<8x64xf32>
    %287 = vector.extract_strided_slice %72 {offsets = [0, 256], sizes = [8, 64], strides = [1, 1]} : vector<8x512xf32> to vector<8x64xf32>
    %288 = arith.mulf %287, %89 : vector<8x64xf32>
    %289 = arith.addf %286, %288 : vector<8x64xf32>
    %290 = vector.extract_strided_slice %76 {offsets = [0, 256], sizes = [8, 64], strides = [1, 1]} : vector<8x512xf32> to vector<8x64xf32>
    %291 = vector.extract_strided_slice %83 {offsets = [0, 0, 256], sizes = [8, 8, 64], strides = [1, 1, 1]} : vector<8x8x512xf32> to vector<8x8x64xf32>
    %292 = arith.truncf %284 : vector<8x64xf32> to vector<8x64xbf16>
    %293 = arith.truncf %289 : vector<8x64xf32> to vector<8x64xbf16>
    %cst_84 = arith.constant dense<0.000000e+00> : vector<8x8xf32>
    %294 = tpu.matmul %292, %293, %cst_84 {dimension_numbers = #tpu.dot_dimension_numbers<[1], [1], [0], [0], [0, 0, 1, 0], [], []>} : vector<8x64xbf16>, vector<8x64xbf16>, vector<8x8xf32> -> vector<8x8xf32>
    %295 = vector.shape_cast %284 : vector<8x64xf32> to vector<8x1x64xf32>
    %296 = vector.broadcast %295 : vector<8x1x64xf32> to vector<8x8x64xf32>
    %297 = arith.mulf %296, %291 : vector<8x8x64xf32>
    %cst_85 = arith.constant dense<0.000000e+00> : vector<8x8xf32>
    %298 = vector.multi_reduction <add>, %297, %cst_85 [2] : vector<8x8x64xf32> to vector<8x8xf32>
    %299 = arith.addf %294, %298 : vector<8x8xf32>
    %cst_86 = arith.constant 1.250000e-01 : f32
    %300 = vector.broadcast %cst_86 : f32 to vector<8x8xf32>
    %301 = arith.mulf %299, %300 : vector<8x8xf32>
    %cst_87 = arith.constant -3.40282347E+38 : f32
    %302 = vector.broadcast %cst_87 : f32 to vector<8x8xf32>
    %303 = arith.select %98, %301, %302 : vector<8x8xi1>, vector<8x8xf32>
    %cst_88 = arith.constant dense<0xFF800000> : vector<8xf32>
    %304 = vector.multi_reduction <maximumf>, %303, %cst_88 [1] : vector<8x8xf32> to vector<8xf32>
    %305 = vector.shape_cast %304 : vector<8xf32> to vector<8x1xf32>
    %306 = vector.broadcast %305 : vector<8x1xf32> to vector<8x8xf32>
    %307 = arith.subf %303, %306 : vector<8x8xf32>
    %308 = math.exp %307 : vector<8x8xf32>
    %cst_89 = arith.constant dense<0.000000e+00> : vector<8xf32>
    %309 = vector.multi_reduction <add>, %308, %cst_89 [1] : vector<8x8xf32> to vector<8xf32>
    %310 = vector.shape_cast %309 : vector<8xf32> to vector<8x1xf32>
    %311 = vector.broadcast %310 : vector<8x1xf32> to vector<8x8xf32>
    %312 = arith.divf %308, %311 : vector<8x8xf32>
    %313 = arith.truncf %312 : vector<8x8xf32> to vector<8x8xbf16>
    %314 = arith.truncf %290 : vector<8x64xf32> to vector<8x64xbf16>
    %cst_90 = arith.constant dense<0.000000e+00> : vector<8x64xf32>
    %315 = tpu.matmul %313, %314, %cst_90 {dimension_numbers = #tpu.dot_dimension_numbers<[1], [0], [0], [1], [0, 0, 1, 1], [], []>} : vector<8x8xbf16>, vector<8x64xbf16>, vector<8x64xf32> -> vector<8x64xf32>
    %316 = vector.shape_cast %312 : vector<8x8xf32> to vector<8x8x1xf32>
    %317 = vector.broadcast %316 : vector<8x8x1xf32> to vector<8x8x64xf32>
    %318 = arith.mulf %317, %291 : vector<8x8x64xf32>
    %cst_91 = arith.constant dense<0.000000e+00> : vector<8x64xf32>
    %319 = vector.multi_reduction <add>, %318, %cst_91 [1] : vector<8x8x64xf32> to vector<8x64xf32>
    %320 = arith.addf %315, %319 : vector<8x64xf32>
    %321 = arith.truncf %320 : vector<8x64xf32> to vector<8x64xbf16>
    %c256 = arith.constant 256 : index
    %c0_92 = arith.constant 0 : index
    %322 = vector.load %arg10[%c256, %c0_92] : memref<512x32xbf16, #tpu.memory_space<vmem>>, vector<64x32xbf16>
    %cst_93 = arith.constant dense<0.000000e+00> : vector<8x32xf32>
    %323 = tpu.matmul %321, %322, %cst_93 {dimension_numbers = #tpu.dot_dimension_numbers<[1], [0], [0], [1], [0, 0, 1, 1], [], []>} : vector<8x64xbf16>, vector<64x32xbf16>, vector<8x32xf32> -> vector<8x32xf32>
    %324 = arith.addf %279, %323 : vector<8x32xf32>
    %325 = vector.extract_strided_slice %60 {offsets = [0, 320], sizes = [8, 64], strides = [1, 1]} : vector<8x512xf32> to vector<8x64xf32>
    %326 = arith.mulf %325, %85 : vector<8x64xf32>
    %327 = vector.extract_strided_slice %64 {offsets = [0, 320], sizes = [8, 64], strides = [1, 1]} : vector<8x512xf32> to vector<8x64xf32>
    %328 = arith.mulf %327, %87 : vector<8x64xf32>
    %329 = arith.addf %326, %328 : vector<8x64xf32>
    %330 = vector.extract_strided_slice %68 {offsets = [0, 320], sizes = [8, 64], strides = [1, 1]} : vector<8x512xf32> to vector<8x64xf32>
    %331 = arith.mulf %330, %88 : vector<8x64xf32>
    %332 = vector.extract_strided_slice %72 {offsets = [0, 320], sizes = [8, 64], strides = [1, 1]} : vector<8x512xf32> to vector<8x64xf32>
    %333 = arith.mulf %332, %89 : vector<8x64xf32>
    %334 = arith.addf %331, %333 : vector<8x64xf32>
    %335 = vector.extract_strided_slice %76 {offsets = [0, 320], sizes = [8, 64], strides = [1, 1]} : vector<8x512xf32> to vector<8x64xf32>
    %336 = vector.extract_strided_slice %83 {offsets = [0, 0, 320], sizes = [8, 8, 64], strides = [1, 1, 1]} : vector<8x8x512xf32> to vector<8x8x64xf32>
    %337 = arith.truncf %329 : vector<8x64xf32> to vector<8x64xbf16>
    %338 = arith.truncf %334 : vector<8x64xf32> to vector<8x64xbf16>
    %cst_94 = arith.constant dense<0.000000e+00> : vector<8x8xf32>
    %339 = tpu.matmul %337, %338, %cst_94 {dimension_numbers = #tpu.dot_dimension_numbers<[1], [1], [0], [0], [0, 0, 1, 0], [], []>} : vector<8x64xbf16>, vector<8x64xbf16>, vector<8x8xf32> -> vector<8x8xf32>
    %340 = vector.shape_cast %329 : vector<8x64xf32> to vector<8x1x64xf32>
    %341 = vector.broadcast %340 : vector<8x1x64xf32> to vector<8x8x64xf32>
    %342 = arith.mulf %341, %336 : vector<8x8x64xf32>
    %cst_95 = arith.constant dense<0.000000e+00> : vector<8x8xf32>
    %343 = vector.multi_reduction <add>, %342, %cst_95 [2] : vector<8x8x64xf32> to vector<8x8xf32>
    %344 = arith.addf %339, %343 : vector<8x8xf32>
    %cst_96 = arith.constant 1.250000e-01 : f32
    %345 = vector.broadcast %cst_96 : f32 to vector<8x8xf32>
    %346 = arith.mulf %344, %345 : vector<8x8xf32>
    %cst_97 = arith.constant -3.40282347E+38 : f32
    %347 = vector.broadcast %cst_97 : f32 to vector<8x8xf32>
    %348 = arith.select %98, %346, %347 : vector<8x8xi1>, vector<8x8xf32>
    %cst_98 = arith.constant dense<0xFF800000> : vector<8xf32>
    %349 = vector.multi_reduction <maximumf>, %348, %cst_98 [1] : vector<8x8xf32> to vector<8xf32>
    %350 = vector.shape_cast %349 : vector<8xf32> to vector<8x1xf32>
    %351 = vector.broadcast %350 : vector<8x1xf32> to vector<8x8xf32>
    %352 = arith.subf %348, %351 : vector<8x8xf32>
    %353 = math.exp %352 : vector<8x8xf32>
    %cst_99 = arith.constant dense<0.000000e+00> : vector<8xf32>
    %354 = vector.multi_reduction <add>, %353, %cst_99 [1] : vector<8x8xf32> to vector<8xf32>
    %355 = vector.shape_cast %354 : vector<8xf32> to vector<8x1xf32>
    %356 = vector.broadcast %355 : vector<8x1xf32> to vector<8x8xf32>
    %357 = arith.divf %353, %356 : vector<8x8xf32>
    %358 = arith.truncf %357 : vector<8x8xf32> to vector<8x8xbf16>
    %359 = arith.truncf %335 : vector<8x64xf32> to vector<8x64xbf16>
    %cst_100 = arith.constant dense<0.000000e+00> : vector<8x64xf32>
    %360 = tpu.matmul %358, %359, %cst_100 {dimension_numbers = #tpu.dot_dimension_numbers<[1], [0], [0], [1], [0, 0, 1, 1], [], []>} : vector<8x8xbf16>, vector<8x64xbf16>, vector<8x64xf32> -> vector<8x64xf32>
    %361 = vector.shape_cast %357 : vector<8x8xf32> to vector<8x8x1xf32>
    %362 = vector.broadcast %361 : vector<8x8x1xf32> to vector<8x8x64xf32>
    %363 = arith.mulf %362, %336 : vector<8x8x64xf32>
    %cst_101 = arith.constant dense<0.000000e+00> : vector<8x64xf32>
    %364 = vector.multi_reduction <add>, %363, %cst_101 [1] : vector<8x8x64xf32> to vector<8x64xf32>
    %365 = arith.addf %360, %364 : vector<8x64xf32>
    %366 = arith.truncf %365 : vector<8x64xf32> to vector<8x64xbf16>
    %c320 = arith.constant 320 : index
    %c0_102 = arith.constant 0 : index
    %367 = vector.load %arg10[%c320, %c0_102] : memref<512x32xbf16, #tpu.memory_space<vmem>>, vector<64x32xbf16>
    %cst_103 = arith.constant dense<0.000000e+00> : vector<8x32xf32>
    %368 = tpu.matmul %366, %367, %cst_103 {dimension_numbers = #tpu.dot_dimension_numbers<[1], [0], [0], [1], [0, 0, 1, 1], [], []>} : vector<8x64xbf16>, vector<64x32xbf16>, vector<8x32xf32> -> vector<8x32xf32>
    %369 = arith.addf %324, %368 : vector<8x32xf32>
    %370 = vector.extract_strided_slice %60 {offsets = [0, 384], sizes = [8, 64], strides = [1, 1]} : vector<8x512xf32> to vector<8x64xf32>
    %371 = arith.mulf %370, %85 : vector<8x64xf32>
    %372 = vector.extract_strided_slice %64 {offsets = [0, 384], sizes = [8, 64], strides = [1, 1]} : vector<8x512xf32> to vector<8x64xf32>
    %373 = arith.mulf %372, %87 : vector<8x64xf32>
    %374 = arith.addf %371, %373 : vector<8x64xf32>
    %375 = vector.extract_strided_slice %68 {offsets = [0, 384], sizes = [8, 64], strides = [1, 1]} : vector<8x512xf32> to vector<8x64xf32>
    %376 = arith.mulf %375, %88 : vector<8x64xf32>
    %377 = vector.extract_strided_slice %72 {offsets = [0, 384], sizes = [8, 64], strides = [1, 1]} : vector<8x512xf32> to vector<8x64xf32>
    %378 = arith.mulf %377, %89 : vector<8x64xf32>
    %379 = arith.addf %376, %378 : vector<8x64xf32>
    %380 = vector.extract_strided_slice %76 {offsets = [0, 384], sizes = [8, 64], strides = [1, 1]} : vector<8x512xf32> to vector<8x64xf32>
    %381 = vector.extract_strided_slice %83 {offsets = [0, 0, 384], sizes = [8, 8, 64], strides = [1, 1, 1]} : vector<8x8x512xf32> to vector<8x8x64xf32>
    %382 = arith.truncf %374 : vector<8x64xf32> to vector<8x64xbf16>
    %383 = arith.truncf %379 : vector<8x64xf32> to vector<8x64xbf16>
    %cst_104 = arith.constant dense<0.000000e+00> : vector<8x8xf32>
    %384 = tpu.matmul %382, %383, %cst_104 {dimension_numbers = #tpu.dot_dimension_numbers<[1], [1], [0], [0], [0, 0, 1, 0], [], []>} : vector<8x64xbf16>, vector<8x64xbf16>, vector<8x8xf32> -> vector<8x8xf32>
    %385 = vector.shape_cast %374 : vector<8x64xf32> to vector<8x1x64xf32>
    %386 = vector.broadcast %385 : vector<8x1x64xf32> to vector<8x8x64xf32>
    %387 = arith.mulf %386, %381 : vector<8x8x64xf32>
    %cst_105 = arith.constant dense<0.000000e+00> : vector<8x8xf32>
    %388 = vector.multi_reduction <add>, %387, %cst_105 [2] : vector<8x8x64xf32> to vector<8x8xf32>
    %389 = arith.addf %384, %388 : vector<8x8xf32>
    %cst_106 = arith.constant 1.250000e-01 : f32
    %390 = vector.broadcast %cst_106 : f32 to vector<8x8xf32>
    %391 = arith.mulf %389, %390 : vector<8x8xf32>
    %cst_107 = arith.constant -3.40282347E+38 : f32
    %392 = vector.broadcast %cst_107 : f32 to vector<8x8xf32>
    %393 = arith.select %98, %391, %392 : vector<8x8xi1>, vector<8x8xf32>
    %cst_108 = arith.constant dense<0xFF800000> : vector<8xf32>
    %394 = vector.multi_reduction <maximumf>, %393, %cst_108 [1] : vector<8x8xf32> to vector<8xf32>
    %395 = vector.shape_cast %394 : vector<8xf32> to vector<8x1xf32>
    %396 = vector.broadcast %395 : vector<8x1xf32> to vector<8x8xf32>
    %397 = arith.subf %393, %396 : vector<8x8xf32>
    %398 = math.exp %397 : vector<8x8xf32>
    %cst_109 = arith.constant dense<0.000000e+00> : vector<8xf32>
    %399 = vector.multi_reduction <add>, %398, %cst_109 [1] : vector<8x8xf32> to vector<8xf32>
    %400 = vector.shape_cast %399 : vector<8xf32> to vector<8x1xf32>
    %401 = vector.broadcast %400 : vector<8x1xf32> to vector<8x8xf32>
    %402 = arith.divf %398, %401 : vector<8x8xf32>
    %403 = arith.truncf %402 : vector<8x8xf32> to vector<8x8xbf16>
    %404 = arith.truncf %380 : vector<8x64xf32> to vector<8x64xbf16>
    %cst_110 = arith.constant dense<0.000000e+00> : vector<8x64xf32>
    %405 = tpu.matmul %403, %404, %cst_110 {dimension_numbers = #tpu.dot_dimension_numbers<[1], [0], [0], [1], [0, 0, 1, 1], [], []>} : vector<8x8xbf16>, vector<8x64xbf16>, vector<8x64xf32> -> vector<8x64xf32>
    %406 = vector.shape_cast %402 : vector<8x8xf32> to vector<8x8x1xf32>
    %407 = vector.broadcast %406 : vector<8x8x1xf32> to vector<8x8x64xf32>
    %408 = arith.mulf %407, %381 : vector<8x8x64xf32>
    %cst_111 = arith.constant dense<0.000000e+00> : vector<8x64xf32>
    %409 = vector.multi_reduction <add>, %408, %cst_111 [1] : vector<8x8x64xf32> to vector<8x64xf32>
    %410 = arith.addf %405, %409 : vector<8x64xf32>
    %411 = arith.truncf %410 : vector<8x64xf32> to vector<8x64xbf16>
    %c384 = arith.constant 384 : index
    %c0_112 = arith.constant 0 : index
    %412 = vector.load %arg10[%c384, %c0_112] : memref<512x32xbf16, #tpu.memory_space<vmem>>, vector<64x32xbf16>
    %cst_113 = arith.constant dense<0.000000e+00> : vector<8x32xf32>
    %413 = tpu.matmul %411, %412, %cst_113 {dimension_numbers = #tpu.dot_dimension_numbers<[1], [0], [0], [1], [0, 0, 1, 1], [], []>} : vector<8x64xbf16>, vector<64x32xbf16>, vector<8x32xf32> -> vector<8x32xf32>
    %414 = arith.addf %369, %413 : vector<8x32xf32>
    %415 = vector.extract_strided_slice %60 {offsets = [0, 448], sizes = [8, 64], strides = [1, 1]} : vector<8x512xf32> to vector<8x64xf32>
    %416 = arith.mulf %415, %85 : vector<8x64xf32>
    %417 = vector.extract_strided_slice %64 {offsets = [0, 448], sizes = [8, 64], strides = [1, 1]} : vector<8x512xf32> to vector<8x64xf32>
    %418 = arith.mulf %417, %87 : vector<8x64xf32>
    %419 = arith.addf %416, %418 : vector<8x64xf32>
    %420 = vector.extract_strided_slice %68 {offsets = [0, 448], sizes = [8, 64], strides = [1, 1]} : vector<8x512xf32> to vector<8x64xf32>
    %421 = arith.mulf %420, %88 : vector<8x64xf32>
    %422 = vector.extract_strided_slice %72 {offsets = [0, 448], sizes = [8, 64], strides = [1, 1]} : vector<8x512xf32> to vector<8x64xf32>
    %423 = arith.mulf %422, %89 : vector<8x64xf32>
    %424 = arith.addf %421, %423 : vector<8x64xf32>
    %425 = vector.extract_strided_slice %76 {offsets = [0, 448], sizes = [8, 64], strides = [1, 1]} : vector<8x512xf32> to vector<8x64xf32>
    %426 = vector.extract_strided_slice %83 {offsets = [0, 0, 448], sizes = [8, 8, 64], strides = [1, 1, 1]} : vector<8x8x512xf32> to vector<8x8x64xf32>
    %427 = arith.truncf %419 : vector<8x64xf32> to vector<8x64xbf16>
    %428 = arith.truncf %424 : vector<8x64xf32> to vector<8x64xbf16>
    %cst_114 = arith.constant dense<0.000000e+00> : vector<8x8xf32>
    %429 = tpu.matmul %427, %428, %cst_114 {dimension_numbers = #tpu.dot_dimension_numbers<[1], [1], [0], [0], [0, 0, 1, 0], [], []>} : vector<8x64xbf16>, vector<8x64xbf16>, vector<8x8xf32> -> vector<8x8xf32>
    %430 = vector.shape_cast %419 : vector<8x64xf32> to vector<8x1x64xf32>
    %431 = vector.broadcast %430 : vector<8x1x64xf32> to vector<8x8x64xf32>
    %432 = arith.mulf %431, %426 : vector<8x8x64xf32>
    %cst_115 = arith.constant dense<0.000000e+00> : vector<8x8xf32>
    %433 = vector.multi_reduction <add>, %432, %cst_115 [2] : vector<8x8x64xf32> to vector<8x8xf32>
    %434 = arith.addf %429, %433 : vector<8x8xf32>
    %cst_116 = arith.constant 1.250000e-01 : f32
    %435 = vector.broadcast %cst_116 : f32 to vector<8x8xf32>
    %436 = arith.mulf %434, %435 : vector<8x8xf32>
    %cst_117 = arith.constant -3.40282347E+38 : f32
    %437 = vector.broadcast %cst_117 : f32 to vector<8x8xf32>
    %438 = arith.select %98, %436, %437 : vector<8x8xi1>, vector<8x8xf32>
    %cst_118 = arith.constant dense<0xFF800000> : vector<8xf32>
    %439 = vector.multi_reduction <maximumf>, %438, %cst_118 [1] : vector<8x8xf32> to vector<8xf32>
    %440 = vector.shape_cast %439 : vector<8xf32> to vector<8x1xf32>
    %441 = vector.broadcast %440 : vector<8x1xf32> to vector<8x8xf32>
    %442 = arith.subf %438, %441 : vector<8x8xf32>
    %443 = math.exp %442 : vector<8x8xf32>
    %cst_119 = arith.constant dense<0.000000e+00> : vector<8xf32>
    %444 = vector.multi_reduction <add>, %443, %cst_119 [1] : vector<8x8xf32> to vector<8xf32>
    %445 = vector.shape_cast %444 : vector<8xf32> to vector<8x1xf32>
    %446 = vector.broadcast %445 : vector<8x1xf32> to vector<8x8xf32>
    %447 = arith.divf %443, %446 : vector<8x8xf32>
    %448 = arith.truncf %447 : vector<8x8xf32> to vector<8x8xbf16>
    %449 = arith.truncf %425 : vector<8x64xf32> to vector<8x64xbf16>
    %cst_120 = arith.constant dense<0.000000e+00> : vector<8x64xf32>
    %450 = tpu.matmul %448, %449, %cst_120 {dimension_numbers = #tpu.dot_dimension_numbers<[1], [0], [0], [1], [0, 0, 1, 1], [], []>} : vector<8x8xbf16>, vector<8x64xbf16>, vector<8x64xf32> -> vector<8x64xf32>
    %451 = vector.shape_cast %447 : vector<8x8xf32> to vector<8x8x1xf32>
    %452 = vector.broadcast %451 : vector<8x8x1xf32> to vector<8x8x64xf32>
    %453 = arith.mulf %452, %426 : vector<8x8x64xf32>
    %cst_121 = arith.constant dense<0.000000e+00> : vector<8x64xf32>
    %454 = vector.multi_reduction <add>, %453, %cst_121 [1] : vector<8x8x64xf32> to vector<8x64xf32>
    %455 = arith.addf %450, %454 : vector<8x64xf32>
    %456 = arith.truncf %455 : vector<8x64xf32> to vector<8x64xbf16>
    %c448 = arith.constant 448 : index
    %c0_122 = arith.constant 0 : index
    %457 = vector.load %arg10[%c448, %c0_122] : memref<512x32xbf16, #tpu.memory_space<vmem>>, vector<64x32xbf16>
    %cst_123 = arith.constant dense<0.000000e+00> : vector<8x32xf32>
    %458 = tpu.matmul %456, %457, %cst_123 {dimension_numbers = #tpu.dot_dimension_numbers<[1], [0], [0], [1], [0, 0, 1, 1], [], []>} : vector<8x64xbf16>, vector<64x32xbf16>, vector<8x32xf32> -> vector<8x32xf32>
    %459 = arith.addf %414, %458 : vector<8x32xf32>
    %c8 = arith.constant 8 : index
    %c0_124 = arith.constant 0 : index
    %460 = vector.load %arg7[%c8, %c0_124] : memref<17x512xf32, #tpu.memory_space<vmem>>, vector<1x32xf32>
    %461 = vector.broadcast %460 : vector<1x32xf32> to vector<8x32xf32>
    %462 = arith.addf %459, %461 : vector<8x32xf32>
    %c9 = arith.constant 9 : index
    %c0_125 = arith.constant 0 : index
    %463 = vector.load %arg7[%c9, %c0_125] : memref<17x512xf32, #tpu.memory_space<vmem>>, vector<1x32xf32>
    %464 = vector.broadcast %463 : vector<1x32xf32> to vector<8x32xf32>
    %465 = arith.mulf %462, %464 : vector<8x32xf32>
    %cst_126 = arith.constant dense<0.000000e+00> : vector<8xf32>
    %466 = vector.multi_reduction <add>, %465, %cst_126 [1] : vector<8x32xf32> to vector<8xf32>
    %467 = vector.shape_cast %466 : vector<8xf32> to vector<8x1xf32>
    %c10 = arith.constant 10 : index
    %c0_127 = arith.constant 0 : index
    %468 = vector.load %arg7[%c10, %c0_127] : memref<17x512xf32, #tpu.memory_space<vmem>>, vector<1x32xf32>
    %469 = vector.broadcast %468 : vector<1x32xf32> to vector<8x32xf32>
    %470 = arith.mulf %4, %469 : vector<8x32xf32>
    %cst_128 = arith.constant dense<0.000000e+00> : vector<8xf32>
    %471 = vector.multi_reduction <add>, %470, %cst_128 [1] : vector<8x32xf32> to vector<8xf32>
    %472 = vector.shape_cast %471 : vector<8xf32> to vector<8x1xf32>
    %473 = arith.addf %467, %472 : vector<8x1xf32>
    %474 = arith.negf %473 : vector<8x1xf32>
    %475 = math.exp %474 : vector<8x1xf32>
    %cst_129 = arith.constant 1.000000e+00 : f32
    %476 = vector.broadcast %cst_129 : f32 to vector<8x1xf32>
    %477 = arith.addf %476, %475 : vector<8x1xf32>
    %478 = arith.divf %476, %477 : vector<8x1xf32>
    %479 = vector.broadcast %478 : vector<8x1xf32> to vector<8x32xf32>
    %480 = arith.mulf %462, %479 : vector<8x32xf32>
    %cst_130 = arith.constant 1.000000e+00 : f32
    %481 = vector.broadcast %cst_130 : f32 to vector<8x1xf32>
    %482 = arith.subf %481, %478 : vector<8x1xf32>
    %483 = vector.broadcast %482 : vector<8x1xf32> to vector<8x32xf32>
    %484 = arith.mulf %4, %483 : vector<8x32xf32>
    %485 = arith.addf %480, %484 : vector<8x32xf32>
    %c11 = arith.constant 11 : index
    %c0_131 = arith.constant 0 : index
    %486 = vector.load %arg7[%c11, %c0_131] : memref<17x512xf32, #tpu.memory_space<vmem>>, vector<1x32xf32>
    %c12 = arith.constant 12 : index
    %c0_132 = arith.constant 0 : index
    %487 = vector.load %arg7[%c12, %c0_132] : memref<17x512xf32, #tpu.memory_space<vmem>>, vector<1x32xf32>
    %cst_133 = arith.constant dense<0.000000e+00> : vector<8xf32>
    %488 = vector.multi_reduction <add>, %485, %cst_133 [1] : vector<8x32xf32> to vector<8xf32>
    %489 = vector.shape_cast %488 : vector<8xf32> to vector<8x1xf32>
    %cst_134 = arith.constant 3.200000e+01 : f32
    %490 = vector.broadcast %cst_134 : f32 to vector<8x1xf32>
    %491 = arith.divf %489, %490 : vector<8x1xf32>
    %492 = vector.broadcast %491 : vector<8x1xf32> to vector<8x32xf32>
    %493 = arith.subf %485, %492 : vector<8x32xf32>
    %494 = arith.mulf %493, %493 : vector<8x32xf32>
    %cst_135 = arith.constant dense<0.000000e+00> : vector<8xf32>
    %495 = vector.multi_reduction <add>, %494, %cst_135 [1] : vector<8x32xf32> to vector<8xf32>
    %496 = vector.shape_cast %495 : vector<8xf32> to vector<8x1xf32>
    %cst_136 = arith.constant 3.200000e+01 : f32
    %497 = vector.broadcast %cst_136 : f32 to vector<8x1xf32>
    %498 = arith.divf %496, %497 : vector<8x1xf32>
    %499 = vector.broadcast %491 : vector<8x1xf32> to vector<8x32xf32>
    %500 = arith.subf %485, %499 : vector<8x32xf32>
    %cst_137 = arith.constant 9.99999974E-6 : f32
    %501 = vector.broadcast %cst_137 : f32 to vector<8x1xf32>
    %502 = arith.addf %498, %501 : vector<8x1xf32>
    %503 = math.rsqrt %502 : vector<8x1xf32>
    %504 = vector.broadcast %503 : vector<8x1xf32> to vector<8x32xf32>
    %505 = arith.mulf %500, %504 : vector<8x32xf32>
    %506 = vector.broadcast %486 : vector<1x32xf32> to vector<8x32xf32>
    %507 = arith.mulf %505, %506 : vector<8x32xf32>
    %508 = vector.broadcast %487 : vector<1x32xf32> to vector<8x32xf32>
    %509 = arith.addf %507, %508 : vector<8x32xf32>
    %510 = arith.truncf %509 : vector<8x32xf32> to vector<8x32xbf16>
    %c0_138 = arith.constant 0 : index
    %c0_139 = arith.constant 0 : index
    %511 = vector.load %arg11[%c0_138, %c0_139] : memref<32x128xbf16, #tpu.memory_space<vmem>>, vector<32x128xbf16>
    %cst_140 = arith.constant dense<0.000000e+00> : vector<8x128xf32>
    %512 = tpu.matmul %510, %511, %cst_140 {dimension_numbers = #tpu.dot_dimension_numbers<[1], [0], [0], [1], [0, 0, 1, 1], [], []>} : vector<8x32xbf16>, vector<32x128xbf16>, vector<8x128xf32> -> vector<8x128xf32>
    %c13 = arith.constant 13 : index
    %c0_141 = arith.constant 0 : index
    %513 = vector.load %arg7[%c13, %c0_141] : memref<17x512xf32, #tpu.memory_space<vmem>>, vector<1x128xf32>
    %514 = vector.broadcast %513 : vector<1x128xf32> to vector<8x128xf32>
    %515 = arith.addf %512, %514 : vector<8x128xf32>
    %cst_142 = arith.constant 5.000000e-01 : f32
    %516 = vector.broadcast %cst_142 : f32 to vector<8x128xf32>
    %517 = arith.mulf %516, %515 : vector<8x128xf32>
    %cst_143 = arith.constant 4.471500e-02 : f32
    %518 = vector.broadcast %cst_143 : f32 to vector<8x128xf32>
    %519 = arith.mulf %518, %515 : vector<8x128xf32>
    %520 = arith.mulf %519, %515 : vector<8x128xf32>
    %521 = arith.mulf %520, %515 : vector<8x128xf32>
    %522 = arith.addf %515, %521 : vector<8x128xf32>
    %cst_144 = arith.constant 0.797884583 : f32
    %523 = vector.broadcast %cst_144 : f32 to vector<8x128xf32>
    %524 = arith.mulf %523, %522 : vector<8x128xf32>
    %525 = math.tanh %524 : vector<8x128xf32>
    %cst_145 = arith.constant 1.000000e+00 : f32
    %526 = vector.broadcast %cst_145 : f32 to vector<8x128xf32>
    %527 = arith.addf %526, %525 : vector<8x128xf32>
    %528 = arith.mulf %517, %527 : vector<8x128xf32>
    %529 = arith.truncf %528 : vector<8x128xf32> to vector<8x128xbf16>
    %c0_146 = arith.constant 0 : index
    %c0_147 = arith.constant 0 : index
    %530 = vector.load %arg12[%c0_146, %c0_147] : memref<128x32xbf16, #tpu.memory_space<vmem>>, vector<128x32xbf16>
    %cst_148 = arith.constant dense<0.000000e+00> : vector<8x32xf32>
    %531 = tpu.matmul %529, %530, %cst_148 {dimension_numbers = #tpu.dot_dimension_numbers<[1], [0], [0], [1], [0, 0, 1, 1], [], []>} : vector<8x128xbf16>, vector<128x32xbf16>, vector<8x32xf32> -> vector<8x32xf32>
    %c14 = arith.constant 14 : index
    %c0_149 = arith.constant 0 : index
    %532 = vector.load %arg7[%c14, %c0_149] : memref<17x512xf32, #tpu.memory_space<vmem>>, vector<1x32xf32>
    %533 = vector.broadcast %532 : vector<1x32xf32> to vector<8x32xf32>
    %534 = arith.addf %531, %533 : vector<8x32xf32>
    %c15 = arith.constant 15 : index
    %c0_150 = arith.constant 0 : index
    %535 = vector.load %arg7[%c15, %c0_150] : memref<17x512xf32, #tpu.memory_space<vmem>>, vector<1x32xf32>
    %536 = vector.broadcast %535 : vector<1x32xf32> to vector<8x32xf32>
    %537 = arith.mulf %534, %536 : vector<8x32xf32>
    %cst_151 = arith.constant dense<0.000000e+00> : vector<8xf32>
    %538 = vector.multi_reduction <add>, %537, %cst_151 [1] : vector<8x32xf32> to vector<8xf32>
    %539 = vector.shape_cast %538 : vector<8xf32> to vector<8x1xf32>
    %c16 = arith.constant 16 : index
    %c0_152 = arith.constant 0 : index
    %540 = vector.load %arg7[%c16, %c0_152] : memref<17x512xf32, #tpu.memory_space<vmem>>, vector<1x32xf32>
    %541 = vector.broadcast %540 : vector<1x32xf32> to vector<8x32xf32>
    %542 = arith.mulf %485, %541 : vector<8x32xf32>
    %cst_153 = arith.constant dense<0.000000e+00> : vector<8xf32>
    %543 = vector.multi_reduction <add>, %542, %cst_153 [1] : vector<8x32xf32> to vector<8xf32>
    %544 = vector.shape_cast %543 : vector<8xf32> to vector<8x1xf32>
    %545 = arith.addf %539, %544 : vector<8x1xf32>
    %546 = arith.negf %545 : vector<8x1xf32>
    %547 = math.exp %546 : vector<8x1xf32>
    %cst_154 = arith.constant 1.000000e+00 : f32
    %548 = vector.broadcast %cst_154 : f32 to vector<8x1xf32>
    %549 = arith.addf %548, %547 : vector<8x1xf32>
    %550 = arith.divf %548, %549 : vector<8x1xf32>
    %551 = vector.broadcast %550 : vector<8x1xf32> to vector<8x32xf32>
    %552 = arith.mulf %534, %551 : vector<8x32xf32>
    %cst_155 = arith.constant 1.000000e+00 : f32
    %553 = vector.broadcast %cst_155 : f32 to vector<8x1xf32>
    %554 = arith.subf %553, %550 : vector<8x1xf32>
    %555 = vector.broadcast %554 : vector<8x1xf32> to vector<8x32xf32>
    %556 = arith.mulf %485, %555 : vector<8x32xf32>
    %557 = arith.addf %552, %556 : vector<8x32xf32>
    %c0_156 = arith.constant 0 : index
    %c0_157 = arith.constant 0 : index
    %558 = vector.load %arg13[%c0_156, %c0_157] : memref<8x32xf32, #tpu.memory_space<vmem>>, vector<8x32xf32>
    tpu.vector_store %arg13[%c0_156, %c0_157], %557 {strides = array<i32>} : memref<8x32xf32, #tpu.memory_space<vmem>>, vector<8x32xf32>,
    return
  }
  func.func @transform_0(%arg0: i32) -> (i32, i32) {
    %c0_i32 = arith.constant 0 : i32
    %c0_i32_0 = arith.constant 0 : i32
    %c0_i32_1 = arith.constant 0 : i32
    return %c0_i32, %c0_i32_0 : i32, i32
  }
  func.func @transform_1(%arg0: i32) -> (i32, i32) {
    %c0_i32 = arith.constant 0 : i32
    %c0_i32_0 = arith.constant 0 : i32
    return %arg0, %c0_i32 : i32, i32
  }
  func.func @transform_2(%arg0: i32) -> (i32, i32) {
    %c0_i32 = arith.constant 0 : i32
    %c0_i32_0 = arith.constant 0 : i32
    return %arg0, %c0_i32 : i32, i32
  }
  func.func @transform_3(%arg0: i32) -> (i32, i32) {
    %c0_i32 = arith.constant 0 : i32
    %c0_i32_0 = arith.constant 0 : i32
    %c0_i32_1 = arith.constant 0 : i32
    return %c0_i32, %c0_i32_0 : i32, i32
  }
  func.func @transform_4(%arg0: i32) -> (i32, i32) {
    %c0_i32 = arith.constant 0 : i32
    %c0_i32_0 = arith.constant 0 : i32
    %c0_i32_1 = arith.constant 0 : i32
    return %c0_i32, %c0_i32_0 : i32, i32
  }
  func.func @transform_5(%arg0: i32) -> (i32, i32) {
    %c0_i32 = arith.constant 0 : i32
    %c0_i32_0 = arith.constant 0 : i32
    %c0_i32_1 = arith.constant 0 : i32
    return %c0_i32, %c0_i32_0 : i32, i32
  }
  func.func @transform_6(%arg0: i32) -> (i32, i32) {
    %c0_i32 = arith.constant 0 : i32
    %c0_i32_0 = arith.constant 0 : i32
    %c0_i32_1 = arith.constant 0 : i32
    return %c0_i32, %c0_i32_0 : i32, i32
  }
  func.func @transform_7(%arg0: i32) -> (i32, i32) {
    %c0_i32 = arith.constant 0 : i32
    %c0_i32_0 = arith.constant 0 : i32
    %c0_i32_1 = arith.constant 0 : i32
    return %c0_i32, %c0_i32_0 : i32, i32
  }
  func.func @transform_8(%arg0: i32) -> (i32, i32) {
    %c0_i32 = arith.constant 0 : i32
    %c0_i32_0 = arith.constant 0 : i32
    %c0_i32_1 = arith.constant 0 : i32
    return %c0_i32, %c0_i32_0 : i32, i32
  }
  func.func @transform_9(%arg0: i32) -> (i32, i32) {
    %c0_i32 = arith.constant 0 : i32
    %c0_i32_0 = arith.constant 0 : i32
    %c0_i32_1 = arith.constant 0 : i32
    return %c0_i32, %c0_i32_0 : i32, i32
  }
  func.func @transform_10(%arg0: i32) -> (i32, i32) {
    %c0_i32 = arith.constant 0 : i32
    %c0_i32_0 = arith.constant 0 : i32
    %c0_i32_1 = arith.constant 0 : i32
    return %c0_i32, %c0_i32_0 : i32, i32
  }
  func.func @transform_11(%arg0: i32) -> (i32, i32) {
    %c0_i32 = arith.constant 0 : i32
    %c0_i32_0 = arith.constant 0 : i32
    %c0_i32_1 = arith.constant 0 : i32
    return %c0_i32, %c0_i32_0 : i32, i32
  }
  func.func @transform_12(%arg0: i32) -> (i32, i32) {
    %c0_i32 = arith.constant 0 : i32
    %c0_i32_0 = arith.constant 0 : i32
    return %arg0, %c0_i32 : i32, i32
  }
}

</mosaic_0001>

<llo_original>
// kernel: forward.7
$region0: #{forward.7}
  #allocation0 [shape = 'u32[]', space=smem, size = 0x4, offset = 0x4, fixed_abs, tag = 'smem constant byte address 0x4 - core index']
  #allocation1 [shape = 'u32[144,128]{1,0:T(1,128)}', space=vmem, size = 0x12000, scoped, tag = 'internal scratch']
  %s0 = inlined_call_operand.vmem [shape: f32[8,32], index: 0, kind: input, shape index: {}]
  %s1 = inlined_call_operand.vmem [shape: f32[32,4], index: 1, kind: input, shape index: {}]
  %s2 = inlined_call_operand.vmem [shape: f32[1,4], index: 2, kind: input, shape index: {}]
  %s3 = inlined_call_operand.vmem [shape: f32[8,4], index: 3, kind: output, shape index: {}]
  %s4 = sld [smem:[#allocation0]]
  $region22: #{forward.7} parent=0
    _
  %s6 = ssub.s32 1, %s4
  %s7 = scalar_select 0, %s6, %s4
  // Predicated region
  $region2: #{forward.7} parent=0 // pred_check
    _
  $region3: #{forward.7} parent=0 // pred_check_branch
    %9 = sbr.rel (0) target = $region5
  $region4: #{forward.7} parent=0 // pred_region
    _
  $region5: #{forward.7} parent=0 // pred_fallthru
    _
  // Predicated region
  $region6: #{forward.7} parent=0 // pred_check
    _
  $region7: #{forward.7} parent=0 // pred_check_branch
    %11 = sbr.rel (0) target = $region9
  $region8: #{forward.7} parent=0 // pred_region
    _
  $region9: #{forward.7} parent=0 // pred_fallthru
    _
  // Predicated region
  $region10: #{forward.7} parent=0 // pred_check
    _
  $region11: #{forward.7} parent=0 // pred_check_branch
    %13 = sbr.rel (0) target = $region13
  $region12: #{forward.7} parent=0 // pred_region
    _
  $region13: #{forward.7} parent=0 // pred_fallthru
    _
  %v15 = vld [vmem:[%s0] sm:$0xff]
  %v16 = vpack.c.bf16 %v15, %v15
  %v17 = vld [vmem:[%s1] sm:$0xff]
  %v18 = vld [vmem:[%s1 + $0x8] sm:$0xff]
  %v19 = vld [vmem:[%s1 + $0x10] sm:$0xff]
  %v20 = vld [vmem:[%s1 + $0x18] sm:$0xff]
  %v21 = vpack.c.bf16 %v18, %v17
  %v22 = vpack.c.bf16 %v20, %v19
  %v23 = vld [vmem:[%s2] sm:$0x1]
  %v25 = vlaneseq
  %v26 = vshrl.u32 %v25, 7
  %v27 = vsub.s32 0, %v26
  %v28 = vrot.slane %v23, %v27
  %vm30 = vcmask 261120
  %v32 = vsel %vm30, %v16, 0
  %34 = vmatprep.subr.bf16.mxu0 0
  %35 = vmatpush1.bf16.msra.mxu0 %v21
  %36 = vmatprep.subr.bf16.mxu0 0
  %37 = vmatpush1.bf16.msra.mxu0 %v22
  %38 = vmatprep.subr.bf16.mxu0 0
  %39 = vmatpush1.bf16.msra.mxu0 0
  %40 = vmatprep.subr.bf16.mxu0 0
  %41 = vmatpush1.bf16.msra.mxu0 0
  %42 = vmatprep.subr.bf16.mxu0 0
  %43 = vmatpush1.bf16.msra.mxu0 0
  %44 = vmatprep.subr.bf16.mxu0 0
  %45 = vmatpush1.bf16.msra.mxu0 0
  %46 = vmatprep.subr.bf16.mxu0 0
  %47 = vmatpush1.bf16.msra.mxu0 0
  %48 = vmatprep.subr.bf16.mxu0 0
  %49 = vmatpush1.bf16.msra.mxu0 0
  %50 = vmatprep.subr.bf16.mxu0 0
  %51 = vmatpush1.bf16.msra.mxu0 0
  %52 = vmatprep.subr.bf16.mxu0 0
  %53 = vmatpush1.bf16.msra.mxu0 0
  %54 = vmatprep.subr.bf16.mxu0 0
  %55 = vmatpush1.bf16.msra.mxu0 0
  %56 = vmatprep.subr.bf16.mxu0 0
  %57 = vmatpush1.bf16.msra.mxu0 0
  %58 = vmatprep.subr.bf16.mxu0 0
  %59 = vmatpush1.bf16.msra.mxu0 0
  %60 = vmatprep.subr.bf16.mxu0 0
  %61 = vmatpush1.bf16.msra.mxu0 0
  %62 = vmatprep.subr.bf16.mxu0 0
  %63 = vmatpush1.bf16.msra.mxu0 0
  %64 = vmatprep.subr.bf16.mxu0 0
  %65 = vmatpush1.bf16.msra.mxu0 0
  %66 = vmatprep.mubr.bf16.mxu0 0
  %67 = vmatmul.mubr.bf16.gmra.mrb[0].mxu0 %v32
  %v68 = vpop.f32.mrb[0].mxu0
  %v69 = vadd.f32 %v28, %v68
  %v70 = vpop.f32.mrb[0].mxu0
  %v71 = vpop.f32.mrb[0].mxu0
  %v72 = vpop.f32.mrb[0].mxu0
  %73 = vdwg.mxu0
  %vm74 = vcmask 31744
  %75 = vst.msk [vmem:[%s3] sm:$0xff] %vm74, %v69
  // Predicated region
  $region14: #{forward.7} parent=0 // pred_check
    _
  $region15: #{forward.7} parent=0 // pred_check_branch
    %77 = sbr.rel (0) target = $region17
  $region16: #{forward.7} parent=0 // pred_region
    _
  $region17: #{forward.7} parent=0 // pred_fallthru
    _
  // Predicated region
  $region18: #{forward.7} parent=0 // pred_check
    _
  $region19: #{forward.7} parent=0 // pred_check_branch
    %79 = sbr.rel (0) target = $region21
  $region20: #{forward.7} parent=0 // pred_region
    _
  $region21: #{forward.7} parent=0 // pred_fallthru
    _

// kernel: forward.4
$region0: #{forward.4}
  #allocation0 [shape = 'u32[]', space=smem, size = 0x4, offset = 0x4, fixed_abs, tag = 'smem constant byte address 0x4 - core index']
  #allocation1 [shape = 'u32[144,128]{1,0:T(1,128)}', space=vmem, size = 0x12000, scoped, tag = 'internal scratch']
  %s0 = inlined_call_operand.vmem [shape: f32[8,16], index: 0, kind: input, shape index: {}]
  %s1 = inlined_call_operand.vmem [shape: f32[16,32], index: 1, kind: input, shape index: {}]
  %s2 = inlined_call_operand.vmem [shape: f32[1,32], index: 2, kind: input, shape index: {}]
  %s3 = inlined_call_operand.vmem [shape: f32[8,32], index: 3, kind: output, shape index: {}]
  %s4 = sld [smem:[#allocation0]]
  $region22: #{forward.4} parent=0
    _
  %s6 = ssub.s32 1, %s4
  %s7 = scalar_select 0, %s6, %s4
  // Predicated region
  $region2: #{forward.4} parent=0 // pred_check
    _
  $region3: #{forward.4} parent=0 // pred_check_branch
    %9 = sbr.rel (0) target = $region5
  $region4: #{forward.4} parent=0 // pred_region
    _
  $region5: #{forward.4} parent=0 // pred_fallthru
    _
  // Predicated region
  $region6: #{forward.4} parent=0 // pred_check
    _
  $region7: #{forward.4} parent=0 // pred_check_branch
    %11 = sbr.rel (0) target = $region9
  $region8: #{forward.4} parent=0 // pred_region
    _
  $region9: #{forward.4} parent=0 // pred_fallthru
    _
  // Predicated region
  $region10: #{forward.4} parent=0 // pred_check
    _
  $region11: #{forward.4} parent=0 // pred_check_branch
    %13 = sbr.rel (0) target = $region13
  $region12: #{forward.4} parent=0 // pred_region
    _
  $region13: #{forward.4} parent=0 // pred_fallthru
    _
  %v15 = vld [vmem:[%s0] sm:$0xff]
  %v16 = vpack.c.bf16 %v15, %v15
  %v17 = vld [vmem:[%s1] sm:$0xff]
  %v18 = vld [vmem:[%s1 + $0x8] sm:$0xff]
  %v19 = vpack.c.bf16 %v18, %v17
  %v20 = vld [vmem:[%s2] sm:$0x1]
  %v22 = vlaneseq
  %v23 = vshrl.u32 %v22, 7
  %v24 = vsub.s32 0, %v23
  %v25 = vrot.slane %v20, %v24
  %vm27 = vcmask 130048
  %v29 = vsel %vm27, %v16, 0
  %31 = vmatprep.subr.bf16.mxu0 0
  %32 = vmatpush1.bf16.msra.mxu0 %v19
  %33 = vmatprep.subr.bf16.mxu0 0
  %34 = vmatpush1.bf16.msra.mxu0 0
  %35 = vmatprep.subr.bf16.mxu0 0
  %36 = vmatpush1.bf16.msra.mxu0 0
  %37 = vmatprep.subr.bf16.mxu0 0
  %38 = vmatpush1.bf16.msra.mxu0 0
  %39 = vmatprep.subr.bf16.mxu0 0
  %40 = vmatpush1.bf16.msra.mxu0 0
  %41 = vmatprep.subr.bf16.mxu0 0
  %42 = vmatpush1.bf16.msra.mxu0 0
  %43 = vmatprep.subr.bf16.mxu0 0
  %44 = vmatpush1.bf16.msra.mxu0 0
  %45 = vmatprep.subr.bf16.mxu0 0
  %46 = vmatpush1.bf16.msra.mxu0 0
  %47 = vmatprep.subr.bf16.mxu0 0
  %48 = vmatpush1.bf16.msra.mxu0 0
  %49 = vmatprep.subr.bf16.mxu0 0
  %50 = vmatpush1.bf16.msra.mxu0 0
  %51 = vmatprep.subr.bf16.mxu0 0
  %52 = vmatpush1.bf16.msra.mxu0 0
  %53 = vmatprep.subr.bf16.mxu0 0
  %54 = vmatpush1.bf16.msra.mxu0 0
  %55 = vmatprep.subr.bf16.mxu0 0
  %56 = vmatpush1.bf16.msra.mxu0 0
  %57 = vmatprep.subr.bf16.mxu0 0
  %58 = vmatpush1.bf16.msra.mxu0 0
  %59 = vmatprep.subr.bf16.mxu0 0
  %60 = vmatpush1.bf16.msra.mxu0 0
  %61 = vmatprep.subr.bf16.mxu0 0
  %62 = vmatpush1.bf16.msra.mxu0 0
  %63 = vmatprep.mubr.bf16.mxu0 0
  %64 = vmatmul.mubr.bf16.gmra.mrb[0].mxu0 %v29
  %v65 = vpop.f32.mrb[0].mxu0
  %v66 = vadd.f32 %v25, %v65
  %v67 = vpop.f32.mrb[0].mxu0
  %v68 = vpop.f32.mrb[0].mxu0
  %v69 = vpop.f32.mrb[0].mxu0
  %70 = vdwg.mxu0
  %vm71 = vcmask 261120
  %72 = vst.msk [vmem:[%s3] sm:$0xff] %vm71, %v66
  // Predicated region
  $region14: #{forward.4} parent=0 // pred_check
    _
  $region15: #{forward.4} parent=0 // pred_check_branch
    %74 = sbr.rel (0) target = $region17
  $region16: #{forward.4} parent=0 // pred_region
    _
  $region17: #{forward.4} parent=0 // pred_fallthru
    _
  // Predicated region
  $region18: #{forward.4} parent=0 // pred_check
    _
  $region19: #{forward.4} parent=0 // pred_check_branch
    %76 = sbr.rel (0) target = $region21
  $region20: #{forward.4} parent=0 // pred_region
    _
  $region21: #{forward.4} parent=0 // pred_fallthru
    _

// kernel: forward.5
$region0: #{forward.5}
  #allocation0 [shape = 'u32[]', space=smem, size = 0x4, offset = 0x4, fixed_abs, tag = 'smem constant byte address 0x4 - core index']
  #allocation1 [shape = 'u32[144,128]{1,0:T(1,128)}', space=vmem, size = 0x12000, scoped, tag = 'internal scratch']
  %s0 = inlined_call_operand.vmem [shape: f32[8,32], index: 0, kind: input, shape index: {}]
  %s1 = inlined_call_operand.vmem [shape: bf16[64,16], index: 1, kind: input, shape index: {}]
  %s2 = inlined_call_operand.vmem [shape: f32[8,1], index: 2, kind: input, shape index: {}]
  %s3 = inlined_call_operand.vmem [shape: f32[1,8], index: 3, kind: input, shape index: {}]
  %s4 = inlined_call_operand.vmem [shape: f32[8,64], index: 4, kind: input, shape index: {}]
  %s5 = inlined_call_operand.vmem [shape: f32[8,64], index: 5, kind: input, shape index: {}]
  %s6 = inlined_call_operand.vmem [shape: f32[17,512], index: 6, kind: input, shape index: {}]
  %s7 = inlined_call_operand.vmem [shape: bf16[32,2560], index: 7, kind: input, shape index: {}]
  %s8 = inlined_call_operand.vmem [shape: bf16[16,512], index: 8, kind: input, shape index: {}]
  %s9 = inlined_call_operand.vmem [shape: bf16[512,32], index: 9, kind: input, shape index: {}]
  %s10 = inlined_call_operand.vmem [shape: bf16[32,128], index: 10, kind: input, shape index: {}]
  %s11 = inlined_call_operand.vmem [shape: bf16[128,32], index: 11, kind: input, shape index: {}]
  %s12 = inlined_call_operand.vmem [shape: f32[8,32], index: 12, kind: output, shape index: {}]
  %s13 = sld [smem:[#allocation0]]
  $region58: #{forward.5} parent=0
    _
  %s15 = ssub.s32 1, %s13
  %s16 = scalar_select 0, %s15, %s13
  // Predicated region
  $region2: #{forward.5} parent=0 // pred_check
    _
  $region3: #{forward.5} parent=0 // pred_check_branch
    %18 = sbr.rel (0) target = $region5
  $region4: #{forward.5} parent=0 // pred_region
    _
  $region5: #{forward.5} parent=0 // pred_fallthru
    _
  // Predicated region
  $region6: #{forward.5} parent=0 // pred_check
    _
  $region7: #{forward.5} parent=0 // pred_check_branch
    %20 = sbr.rel (0) target = $region9
  $region8: #{forward.5} parent=0 // pred_region
    _
  $region9: #{forward.5} parent=0 // pred_fallthru
    _
  // Predicated region
  $region10: #{forward.5} parent=0 // pred_check
    _
  $region11: #{forward.5} parent=0 // pred_check_branch
    %22 = sbr.rel (0) target = $region13
  $region12: #{forward.5} parent=0 // pred_region
    _
  $region13: #{forward.5} parent=0 // pred_fallthru
    _
  // Predicated region
  $region14: #{forward.5} parent=0 // pred_check
    _
  $region15: #{forward.5} parent=0 // pred_check_branch
    %24 = sbr.rel (0) target = $region17
  $region16: #{forward.5} parent=0 // pred_region
    _
  $region17: #{forward.5} parent=0 // pred_fallthru
    _
  // Predicated region
  $region18: #{forward.5} parent=0 // pred_check
    _
  $region19: #{forward.5} parent=0 // pred_check_branch
    %26 = sbr.rel (0) target = $region21
  $region20: #{forward.5} parent=0 // pred_region
    _
  $region21: #{forward.5} parent=0 // pred_fallthru
    _
  // Predicated region
  $region22: #{forward.5} parent=0 // pred_check
    _
  $region23: #{forward.5} parent=0 // pred_check_branch
    %28 = sbr.rel (0) target = $region25
  $region24: #{forward.5} parent=0 // pred_region
    _
  $region25: #{forward.5} parent=0 // pred_fallthru
    _
  // Predicated region
  $region26: #{forward.5} parent=0 // pred_check
    _
  $region27: #{forward.5} parent=0 // pred_check_branch
    %30 = sbr.rel (0) target = $region29
  $region28: #{forward.5} parent=0 // pred_region
    _
  $region29: #{forward.5} parent=0 // pred_fallthru
    _
  // Predicated region
  $region30: #{forward.5} parent=0 // pred_check
    _
  $region31: #{forward.5} parent=0 // pred_check_branch
    %32 = sbr.rel (0) target = $region33
  $region32: #{forward.5} parent=0 // pred_region
    _
  $region33: #{forward.5} parent=0 // pred_fallthru
    _
  // Predicated region
  $region34: #{forward.5} parent=0 // pred_check
    _
  $region35: #{forward.5} parent=0 // pred_check_branch
    %34 = sbr.rel (0) target = $region37
  $region36: #{forward.5} parent=0 // pred_region
    _
  $region37: #{forward.5} parent=0 // pred_fallthru
    _
  // Predicated region
  $region38: #{forward.5} parent=0 // pred_check
    _
  $region39: #{forward.5} parent=0 // pred_check_branch
    %36 = sbr.rel (0) target = $region41
  $region40: #{forward.5} parent=0 // pred_region
    _
  $region41: #{forward.5} parent=0 // pred_fallthru
    _
  // Predicated region
  $region42: #{forward.5} parent=0 // pred_check
    _
  $region43: #{forward.5} parent=0 // pred_check_branch
    %38 = sbr.rel (0) target = $region45
  $region44: #{forward.5} parent=0 // pred_region
    _
  $region45: #{forward.5} parent=0 // pred_fallthru
    _
  // Predicated region
  $region46: #{forward.5} parent=0 // pred_check
    _
  $region47: #{forward.5} parent=0 // pred_check_branch
    %40 = sbr.rel (0) target = $region49
  $region48: #{forward.5} parent=0 // pred_region
    _
  $region49: #{forward.5} parent=0 // pred_fallthru
    _
  %s42 = smul.u32 0, 8
  %v43 = vld [vmem:[%s0] sm:$0xff]
  %s44 = scalar_lea.vmem %s0, %s42
  %v45 = vld [vmem:[%s44] sm:$0xff]
  %v46 = vld [vmem:[%s6] ss:$0 sm:$0xff]
  %v47 = vld [vmem:[%s6 + $0x1] ss:$0 sm:$0xff]
  %vm48 = vcmask 261120
  %v49 = vsel %vm48, %v43, 0.0
  %50 = vadd.xlane.f32.xlu0 %v49
  %v51 = vpop.xlane.xlu0 %50
  %v52 = vrcp.pop 32.0
  %v53 = vmul.f32 %v51, %v52
  %v54 = vsub.f32 %v43, %v53
  %v55 = vmul.f32 %v54, %v54
  %v56 = vsel %vm48, %v55, 0.0
  %57 = vadd.xlane.f32.xlu0 %v56
  %v58 = vpop.xlane.xlu0 %57
  %v59 = vmul.f32 %v58, %v52
  %v60 = vadd.f32 %v59, 1e-05
  %v61 = vrsqrt.pop %v60
  %v62 = vmul.f32 %v54, %v61
  %v63 = vmul.f32 %v62, %v46
  %v64 = vadd.f32 %v63, %v47
  %v65 = vsel %vm48, %v45, 0.0
  %66 = vadd.xlane.f32.xlu0 %v65
  %v67 = vpop.xlane.xlu0 %66
  %v68 = vmul.f32 %v67, %v52
  %v69 = vsub.f32 %v45, %v68
  %v70 = vmul.f32 %v69, %v69
  %v71 = vsel %vm48, %v70, 0.0
  %72 = vadd.xlane.f32.xlu0 %v71
  %v73 = vpop.xlane.xlu0 %72
  %v74 = vmul.f32 %v73, %v52
  %v75 = vadd.f32 %v74, 1e-05
  %v76 = vrsqrt.pop %v75
  %v77 = vmul.f32 %v69, %v76
  %v78 = vmul.f32 %v77, %v46
  %v79 = vadd.f32 %v78, %v47
  %v80 = vpack.c.bf16 %v79, %v79
  %v81 = vld [vmem:[%s7] sm:$0xff]
  %v82 = vld [vmem:[%s7 + $0x8] sm:$0xff]
  %v83 = vld [vmem:[%s7 + $0x10] sm:$0xff]
  %v84 = vld [vmem:[%s7 + $0x18] sm:$0xff]
  %v85 = vld [vmem:[%s7 + $0x50] sm:$0xff]
  %v86 = vld [vmem:[%s7 + $0x58] sm:$0xff]
  %v87 = vld [vmem:[%s7 + $0x60] sm:$0xff]
  %v88 = vld [vmem:[%s7 + $0x68] sm:$0xff]
  %v89 = vld [vmem:[%s7 + $0xa0] sm:$0xff]
  %v90 = vld [vmem:[%s7 + $0xa8] sm:$0xff]
  %v91 = vld [vmem:[%s7 + $0xb0] sm:$0xff]
  %v92 = vld [vmem:[%s7 + $0xb8] sm:$0xff]
  %v93 = vld [vmem:[%s7 + $0xf0] sm:$0xff]
  %v94 = vld [vmem:[%s7 + $0xf8] sm:$0xff]
  %v95 = vld [vmem:[%s7 + $0x100] sm:$0xff]
  %v96 = vld [vmem:[%s7 + $0x108] sm:$0xff]
  %v113 = vunpack.c.l.b16 %v81
  %v114 = vunpack.c.h.b16 %v81
  %v115 = vunpack.c.l.b16 %v82
  %v116 = vunpack.c.h.b16 %v82
  %v117 = vunpack.c.l.b16 %v83
  %v118 = vunpack.c.h.b16 %v83
  %v119 = vunpack.c.l.b16 %v84
  %v120 = vunpack.c.h.b16 %v84
  %v121 = vunpack.c.l.b16 %v85
  %v122 = vunpack.c.h.b16 %v85
  %v123 = vunpack.c.l.b16 %v86
  %v124 = vunpack.c.h.b16 %v86
  %v125 = vunpack.c.l.b16 %v87
  %v126 = vunpack.c.h.b16 %v87
  %v127 = vunpack.c.l.b16 %v88
  %v128 = vunpack.c.h.b16 %v88
  %v129 = vunpack.c.l.b16 %v89
  %v130 = vunpack.c.h.b16 %v89
  %v131 = vunpack.c.l.b16 %v90
  %v132 = vunpack.c.h.b16 %v90
  %v133 = vunpack.c.l.b16 %v91
  %v134 = vunpack.c.h.b16 %v91
  %v135 = vunpack.c.l.b16 %v92
  %v136 = vunpack.c.h.b16 %v92
  %v137 = vunpack.c.l.b16 %v93
  %v138 = vunpack.c.h.b16 %v93
  %v139 = vunpack.c.l.b16 %v94
  %v140 = vunpack.c.h.b16 %v94
  %v141 = vunpack.c.l.b16 %v95
  %v142 = vunpack.c.h.b16 %v95
  %v143 = vunpack.c.l.b16 %v96
  %v144 = vunpack.c.h.b16 %v96
  %v145 = vpack.c.b16 %v121, %v113
  %v146 = vpack.c.b16 %v122, %v114
  %v147 = vpack.c.b16 %v123, %v115
  %v148 = vpack.c.b16 %v124, %v116
  %v149 = vpack.c.b16 %v125, %v117
  %v150 = vpack.c.b16 %v126, %v118
  %v151 = vpack.c.b16 %v127, %v119
  %v152 = vpack.c.b16 %v128, %v120
  %v153 = vpack.c.b16 %v137, %v129
  %v154 = vpack.c.b16 %v138, %v130
  %v155 = vpack.c.b16 %v139, %v131
  %v156 = vpack.c.b16 %v140, %v132
  %v157 = vpack.c.b16 %v141, %v133
  %v158 = vpack.c.b16 %v142, %v134
  %v159 = vpack.c.b16 %v143, %v135
  %v160 = vpack.c.b16 %v144, %v136
  %v178 = vsel %vm48, %v80, 0
  %180 = vmatprep.subr.bf16.mxu0 %v146
  %181 = vmatpush1.bf16.msra.mxu0 %v145
  %182 = vmatprep.subr.bf16.mxu0 %v154
  %183 = vmatpush1.bf16.msra.mxu0 %v153
  %184 = vmatprep.subr.bf16.mxu0 0
  %185 = vmatpush1.bf16.msra.mxu0 0
  %186 = vmatprep.subr.bf16.mxu0 0
  %187 = vmatpush1.bf16.msra.mxu0 0
  %188 = vmatprep.subr.bf16.mxu0 0
  %189 = vmatpush1.bf16.msra.mxu0 0
  %190 = vmatprep.subr.bf16.mxu0 0
  %191 = vmatpush1.bf16.msra.mxu0 0
  %192 = vmatprep.subr.bf16.mxu0 0
  %193 = vmatpush1.bf16.msra.mxu0 0
  %194 = vmatprep.subr.bf16.mxu0 0
  %195 = vmatpush1.bf16.msra.mxu0 0
  %196 = vmatprep.subr.bf16.mxu0 0
  %197 = vmatpush1.bf16.msra.mxu0 0
  %198 = vmatprep.subr.bf16.mxu0 0
  %199 = vmatpush1.bf16.msra.mxu0 0
  %200 = vmatprep.subr.bf16.mxu0 0
  %201 = vmatpush1.bf16.msra.mxu0 0
  %202 = vmatprep.subr.bf16.mxu0 0
  %203 = vmatpush1.bf16.msra.mxu0 0
  %204 = vmatprep.subr.bf16.mxu0 0
  %205 = vmatpush1.bf16.msra.mxu0 0
  %206 = vmatprep.subr.bf16.mxu0 0
  %207 = vmatpush1.bf16.msra.mxu0 0
  %208 = vmatprep.subr.bf16.mxu0 0
  %209 = vmatpush1.bf16.msra.mxu0 0
  %210 = vmatprep.subr.bf16.mxu0 0
  %211 = vmatpush1.bf16.msra.mxu0 0
  %212 = vmatprep.mubr.bf16.mxu0 0
  %213 = vmatmul.mubr.bf16.gmra.mrb[0].mxu0 %v178
  %v214 = vpop.f32.mrb[0].mxu0
  %v215 = vadd.f32 0.0, %v214
  %v216 = vpop.f32.mrb[0].mxu0
  %v217 = vadd.f32 0.0, %v216
  %v218 = vpop.f32.mrb[0].mxu0
  %v219 = vpop.f32.mrb[0].mxu0
  %220 = vdwg.mxu0
  %221 = vmatprep.subr.bf16.mxu0 %v148
  %222 = vmatpush1.bf16.msra.mxu0 %v147
  %223 = vmatprep.subr.bf16.mxu0 %v156
  %224 = vmatpush1.bf16.msra.mxu0 %v155
  %225 = vmatprep.subr.bf16.mxu0 0
  %226 = vmatpush1.bf16.msra.mxu0 0
  %227 = vmatprep.subr.bf16.mxu0 0
  %228 = vmatpush1.bf16.msra.mxu0 0
  %229 = vmatprep.subr.bf16.mxu0 0
  %230 = vmatpush1.bf16.msra.mxu0 0
  %231 = vmatprep.subr.bf16.mxu0 0
  %232 = vmatpush1.bf16.msra.mxu0 0
  %233 = vmatprep.subr.bf16.mxu0 0
  %234 = vmatpush1.bf16.msra.mxu0 0
  %235 = vmatprep.subr.bf16.mxu0 0
  %236 = vmatpush1.bf16.msra.mxu0 0
  %237 = vmatprep.subr.bf16.mxu0 0
  %238 = vmatpush1.bf16.msra.mxu0 0
  %239 = vmatprep.subr.bf16.mxu0 0
  %240 = vmatpush1.bf16.msra.mxu0 0
  %241 = vmatprep.subr.bf16.mxu0 0
  %242 = vmatpush1.bf16.msra.mxu0 0
  %243 = vmatprep.subr.bf16.mxu0 0
  %244 = vmatpush1.bf16.msra.mxu0 0
  %245 = vmatprep.subr.bf16.mxu0 0
  %246 = vmatpush1.bf16.msra.mxu0 0
  %247 = vmatprep.subr.bf16.mxu0 0
  %248 = vmatpush1.bf16.msra.mxu0 0
  %249 = vmatprep.subr.bf16.mxu0 0
  %250 = vmatpush1.bf16.msra.mxu0 0
  %251 = vmatprep.subr.bf16.mxu0 0
  %252 = vmatpush1.bf16.msra.mxu0 0
  %253 = vmatprep.mubr.bf16.mxu0 0
  %254 = vmatmul.mubr.bf16.gmra.mrb[0].mxu0 %v178
  %v255 = vpop.f32.mrb[0].mxu0
  %v256 = vadd.f32 0.0, %v255
  %v257 = vpop.f32.mrb[0].mxu0
  %v258 = vadd.f32 0.0, %v257
  %v259 = vpop.f32.mrb[0].mxu0
  %v260 = vpop.f32.mrb[0].mxu0
  %261 = vdwg.mxu0
  %262 = vmatprep.subr.bf16.mxu0 %v150
  %263 = vmatpush1.bf16.msra.mxu0 %v149
  %264 = vmatprep.subr.bf16.mxu0 %v158
  %265 = vmatpush1.bf16.msra.mxu0 %v157
  %266 = vmatprep.subr.bf16.mxu0 0
  %267 = vmatpush1.bf16.msra.mxu0 0
  %268 = vmatprep.subr.bf16.mxu0 0
  %269 = vmatpush1.bf16.msra.mxu0 0
  %270 = vmatprep.subr.bf16.mxu0 0
  %271 = vmatpush1.bf16.msra.mxu0 0
  %272 = vmatprep.subr.bf16.mxu0 0
  %273 = vmatpush1.bf16.msra.mxu0 0
  %274 = vmatprep.subr.bf16.mxu0 0
  %275 = vmatpush1.bf16.msra.mxu0 0
  %276 = vmatprep.subr.bf16.mxu0 0
  %277 = vmatpush1.bf16.msra.mxu0 0
  %278 = vmatprep.subr.bf16.mxu0 0
  %279 = vmatpush1.bf16.msra.mxu0 0
  %280 = vmatprep.subr.bf16.mxu0 0
  %281 = vmatpush1.bf16.msra.mxu0 0
  %282 = vmatprep.subr.bf16.mxu0 0
  %283 = vmatpush1.bf16.msra.mxu0 0
  %284 = vmatprep.subr.bf16.mxu0 0
  %285 = vmatpush1.bf16.msra.mxu0 0
  %286 = vmatprep.subr.bf16.mxu0 0
  %287 = vmatpush1.bf16.msra.mxu0 0
  %288 = vmatprep.subr.bf16.mxu0 0
  %289 = vmatpush1.bf16.msra.mxu0 0
  %290 = vmatprep.subr.bf16.mxu0 0
  %291 = vmatpush1.bf16.msra.mxu0 0
  %292 = vmatprep.subr.bf16.mxu0 0
  %293 = vmatpush1.bf16.msra.mxu0 0
  %294 = vmatprep.mubr.bf16.mxu0 0
  %295 = vmatmul.mubr.bf16.gmra.mrb[0].mxu0 %v178
  %v296 = vpop.f32.mrb[0].mxu0
  %v297 = vadd.f32 0.0, %v296
  %v298 = vpop.f32.mrb[0].mxu0
  %v299 = vadd.f32 0.0, %v298
  %v300 = vpop.f32.mrb[0].mxu0
  %v301 = vpop.f32.mrb[0].mxu0
  %302 = vdwg.mxu0
  %303 = vmatprep.subr.bf16.mxu0 %v152
  %304 = vmatpush1.bf16.msra.mxu0 %v151
  %305 = vmatprep.subr.bf16.mxu0 %v160
  %306 = vmatpush1.bf16.msra.mxu0 %v159
  %307 = vmatprep.subr.bf16.mxu0 0
  %308 = vmatpush1.bf16.msra.mxu0 0
  %309 = vmatprep.subr.bf16.mxu0 0
  %310 = vmatpush1.bf16.msra.mxu0 0
  %311 = vmatprep.subr.bf16.mxu0 0
  %312 = vmatpush1.bf16.msra.mxu0 0
  %313 = vmatprep.subr.bf16.mxu0 0
  %314 = vmatpush1.bf16.msra.mxu0 0
  %315 = vmatprep.subr.bf16.mxu0 0
  %316 = vmatpush1.bf16.msra.mxu0 0
  %317 = vmatprep.subr.bf16.mxu0 0
  %318 = vmatpush1.bf16.msra.mxu0 0
  %319 = vmatprep.subr.bf16.mxu0 0
  %320 = vmatpush1.bf16.msra.mxu0 0
  %321 = vmatprep.subr.bf16.mxu0 0
  %322 = vmatpush1.bf16.msra.mxu0 0
  %323 = vmatprep.subr.bf16.mxu0 0
  %324 = vmatpush1.bf16.msra.mxu0 0
  %325 = vmatprep.subr.bf16.mxu0 0
  %326 = vmatpush1.bf16.msra.mxu0 0
  %327 = vmatprep.subr.bf16.mxu0 0
  %328 = vmatpush1.bf16.msra.mxu0 0
  %329 = vmatprep.subr.bf16.mxu0 0
  %330 = vmatpush1.bf16.msra.mxu0 0
  %331 = vmatprep.subr.bf16.mxu0 0
  %332 = vmatpush1.bf16.msra.mxu0 0
  %333 = vmatprep.subr.bf16.mxu0 0
  %334 = vmatpush1.bf16.msra.mxu0 0
  %335 = vmatprep.mubr.bf16.mxu0 0
  %336 = vmatmul.mubr.bf16.gmra.mrb[0].mxu0 %v178
  %v337 = vpop.f32.mrb[0].mxu0
  %v338 = vadd.f32 0.0, %v337
  %v339 = vpop.f32.mrb[0].mxu0
  %v340 = vadd.f32 0.0, %v339
  %v341 = vpop.f32.mrb[0].mxu0
  %v342 = vpop.f32.mrb[0].mxu0
  %343 = vdwg.mxu0
  %v344 = vpack.c.bf16 %v64, %v64
  %v345 = vld [vmem:[%s7 + $0x20] sm:$0xff]
  %v346 = vld [vmem:[%s7 + $0x28] sm:$0xff]
  %v347 = vld [vmem:[%s7 + $0x30] sm:$0xff]
  %v348 = vld [vmem:[%s7 + $0x38] sm:$0xff]
  %v349 = vld [vmem:[%s7 + $0x40] sm:$0xff]
  %v350 = vld [vmem:[%s7 + $0x48] sm:$0xff]
  %v351 = vld [vmem:[%s7 + $0x70] sm:$0xff]
  %v352 = vld [vmem:[%s7 + $0x78] sm:$0xff]
  %v353 = vld [vmem:[%s7 + $0x80] sm:$0xff]
  %v354 = vld [vmem:[%s7 + $0x88] sm:$0xff]
  %v355 = vld [vmem:[%s7 + $0x90] sm:$0xff]
  %v356 = vld [vmem:[%s7 + $0x98] sm:$0xff]
  %v357 = vld [vmem:[%s7 + $0xc0] sm:$0xff]
  %v358 = vld [vmem:[%s7 + $0xc8] sm:$0xff]
  %v359 = vld [vmem:[%s7 + $0xd0] sm:$0xff]
  %v360 = vld [vmem:[%s7 + $0xd8] sm:$0xff]
  %v361 = vld [vmem:[%s7 + $0xe0] sm:$0xff]
  %v362 = vld [vmem:[%s7 + $0xe8] sm:$0xff]
  %v363 = vld [vmem:[%s7 + $0x110] sm:$0xff]
  %v364 = vld [vmem:[%s7 + $0x118] sm:$0xff]
  %v365 = vld [vmem:[%s7 + $0x120] sm:$0xff]
  %v366 = vld [vmem:[%s7 + $0x128] sm:$0xff]
  %v367 = vld [vmem:[%s7 + $0x130] sm:$0xff]
  %v368 = vld [vmem:[%s7 + $0x138] sm:$0xff]
  %v393 = vunpack.c.l.b16 %v345
  %v394 = vunpack.c.h.b16 %v345
  %v395 = vunpack.c.l.b16 %v346
  %v396 = vunpack.c.h.b16 %v346
  %v397 = vunpack.c.l.b16 %v347
  %v398 = vunpack.c.h.b16 %v347
  %v399 = vunpack.c.l.b16 %v348
  %v400 = vunpack.c.h.b16 %v348
  %v401 = vunpack.c.l.b16 %v349
  %v402 = vunpack.c.h.b16 %v349
  %v403 = vunpack.c.l.b16 %v350
  %v404 = vunpack.c.h.b16 %v350
  %v405 = vunpack.c.l.b16 %v351
  %v406 = vunpack.c.h.b16 %v351
  %v407 = vunpack.c.l.b16 %v352
  %v408 = vunpack.c.h.b16 %v352
  %v409 = vunpack.c.l.b16 %v353
  %v410 = vunpack.c.h.b16 %v353
  %v411 = vunpack.c.l.b16 %v354
  %v412 = vunpack.c.h.b16 %v354
  %v413 = vunpack.c.l.b16 %v355
  %v414 = vunpack.c.h.b16 %v355
  %v415 = vunpack.c.l.b16 %v356
  %v416 = vunpack.c.h.b16 %v356
  %v417 = vunpack.c.l.b16 %v357
  %v418 = vunpack.c.h.b16 %v357
  %v419 = vunpack.c.l.b16 %v358
  %v420 = vunpack.c.h.b16 %v358
  %v421 = vunpack.c.l.b16 %v359
  %v422 = vunpack.c.h.b16 %v359
  %v423 = vunpack.c.l.b16 %v360
  %v424 = vunpack.c.h.b16 %v360
  %v425 = vunpack.c.l.b16 %v361
  %v426 = vunpack.c.h.b16 %v361
  %v427 = vunpack.c.l.b16 %v362
  %v428 = vunpack.c.h.b16 %v362
  %v429 = vunpack.c.l.b16 %v363
  %v430 = vunpack.c.h.b16 %v363
  %v431 = vunpack.c.l.b16 %v364
  %v432 = vunpack.c.h.b16 %v364
  %v433 = vunpack.c.l.b16 %v365
  %v434 = vunpack.c.h.b16 %v365
  %v435 = vunpack.c.l.b16 %v366
  %v436 = vunpack.c.h.b16 %v366
  %v437 = vunpack.c.l.b16 %v367
  %v438 = vunpack.c.h.b16 %v367
  %v439 = vunpack.c.l.b16 %v368
  %v440 = vunpack.c.h.b16 %v368
  %v441 = vpack.c.b16 %v405, %v393
  %v442 = vpack.c.b16 %v406, %v394
  %v443 = vpack.c.b16 %v407, %v395
  %v444 = vpack.c.b16 %v408, %v396
  %v445 = vpack.c.b16 %v409, %v397
  %v446 = vpack.c.b16 %v410, %v398
  %v447 = vpack.c.b16 %v411, %v399
  %v448 = vpack.c.b16 %v412, %v400
  %v449 = vpack.c.b16 %v413, %v401
  %v450 = vpack.c.b16 %v414, %v402
  %v451 = vpack.c.b16 %v415, %v403
  %v452 = vpack.c.b16 %v416, %v404
  %v453 = vpack.c.b16 %v429, %v417
  %v454 = vpack.c.b16 %v430, %v418
  %v455 = vpack.c.b16 %v431, %v419
  %v456 = vpack.c.b16 %v432, %v420
  %v457 = vpack.c.b16 %v433, %v421
  %v458 = vpack.c.b16 %v434, %v422
  %v459 = vpack.c.b16 %v435, %v423
  %v460 = vpack.c.b16 %v436, %v424
  %v461 = vpack.c.b16 %v437, %v425
  %v462 = vpack.c.b16 %v438, %v426
  %v463 = vpack.c.b16 %v439, %v427
  %v464 = vpack.c.b16 %v440, %v428
  %v490 = vsel %vm48, %v344, 0
  %492 = vmatprep.subr.bf16.mxu0 %v442
  %493 = vmatpush1.bf16.msra.mxu0 %v441
  %494 = vmatprep.subr.bf16.mxu0 %v454
  %495 = vmatpush1.bf16.msra.mxu0 %v453
  %496 = vmatprep.subr.bf16.mxu0 0
  %497 = vmatpush1.bf16.msra.mxu0 0
  %498 = vmatprep.subr.bf16.mxu0 0
  %499 = vmatpush1.bf16.msra.mxu0 0
  %500 = vmatprep.subr.bf16.mxu0 0
  %501 = vmatpush1.bf16.msra.mxu0 0
  %502 = vmatprep.subr.bf16.mxu0 0
  %503 = vmatpush1.bf16.msra.mxu0 0
  %504 = vmatprep.subr.bf16.mxu0 0
  %505 = vmatpush1.bf16.msra.mxu0 0
  %506 = vmatprep.subr.bf16.mxu0 0
  %507 = vmatpush1.bf16.msra.mxu0 0
  %508 = vmatprep.subr.bf16.mxu0 0
  %509 = vmatpush1.bf16.msra.mxu0 0
  %510 = vmatprep.subr.bf16.mxu0 0
  %511 = vmatpush1.bf16.msra.mxu0 0
  %512 = vmatprep.subr.bf16.mxu0 0
  %513 = vmatpush1.bf16.msra.mxu0 0
  %514 = vmatprep.subr.bf16.mxu0 0
  %515 = vmatpush1.bf16.msra.mxu0 0
  %516 = vmatprep.subr.bf16.mxu0 0
  %517 = vmatpush1.bf16.msra.mxu0 0
  %518 = vmatprep.subr.bf16.mxu0 0
  %519 = vmatpush1.bf16.msra.mxu0 0
  %520 = vmatprep.subr.bf16.mxu0 0
  %521 = vmatpush1.bf16.msra.mxu0 0
  %522 = vmatprep.subr.bf16.mxu0 0
  %523 = vmatpush1.bf16.msra.mxu0 0
  %524 = vmatprep.mubr.bf16.mxu0 0
  %525 = vmatmul.mubr.bf16.gmra.mrb[0].mxu0 %v490
  %v526 = vpop.f32.mrb[0].mxu0
  %v527 = vadd.f32 0.0, %v526
  %v528 = vpop.f32.mrb[0].mxu0
  %v529 = vadd.f32 0.0, %v528
  %v530 = vpop.f32.mrb[0].mxu0
  %v531 = vpop.f32.mrb[0].mxu0
  %532 = vdwg.mxu0
  %533 = vmatprep.subr.bf16.mxu0 %v444
  %534 = vmatpush1.bf16.msra.mxu0 %v443
  %535 = vmatprep.subr.bf16.mxu0 %v456
  %536 = vmatpush1.bf16.msra.mxu0 %v455
  %537 = vmatprep.subr.bf16.mxu0 0
  %538 = vmatpush1.bf16.msra.mxu0 0
  %539 = vmatprep.subr.bf16.mxu0 0
  %540 = vmatpush1.bf16.msra.mxu0 0
  %541 = vmatprep.subr.bf16.mxu0 0
  %542 = vmatpush1.bf16.msra.mxu0 0
  %543 = vmatprep.subr.bf16.mxu0 0
  %544 = vmatpush1.bf16.msra.mxu0 0
  %545 = vmatprep.subr.bf16.mxu0 0
  %546 = vmatpush1.bf16.msra.mxu0 0
  %547 = vmatprep.subr.bf16.mxu0 0
  %548 = vmatpush1.bf16.msra.mxu0 0
  %549 = vmatprep.subr.bf16.mxu0 0
  %550 = vmatpush1.bf16.msra.mxu0 0
  %551 = vmatprep.subr.bf16.mxu0 0
  %552 = vmatpush1.bf16.msra.mxu0 0
  %553 = vmatprep.subr.bf16.mxu0 0
  %554 = vmatpush1.bf16.msra.mxu0 0
  %555 = vmatprep.subr.bf16.mxu0 0
  %556 = vmatpush1.bf16.msra.mxu0 0
  %557 = vmatprep.subr.bf16.mxu0 0
  %558 = vmatpush1.bf16.msra.mxu0 0
  %559 = vmatprep.subr.bf16.mxu0 0
  %560 = vmatpush1.bf16.msra.mxu0 0
  %561 = vmatprep.subr.bf16.mxu0 0
  %562 = vmatpush1.bf16.msra.mxu0 0
  %563 = vmatprep.subr.bf16.mxu0 0
  %564 = vmatpush1.bf16.msra.mxu0 0
  %565 = vmatprep.mubr.bf16.mxu0 0
  %566 = vmatmul.mubr.bf16.gmra.mrb[0].mxu0 %v490
  %v567 = vpop.f32.mrb[0].mxu0
  %v568 = vadd.f32 0.0, %v567
  %v569 = vpop.f32.mrb[0].mxu0
  %v570 = vadd.f32 0.0, %v569
  %v571 = vpop.f32.mrb[0].mxu0
  %v572 = vpop.f32.mrb[0].mxu0
  %573 = vdwg.mxu0
  %574 = vmatprep.subr.bf16.mxu0 %v446
  %575 = vmatpush1.bf16.msra.mxu0 %v445
  %576 = vmatprep.subr.bf16.mxu0 %v458
  %577 = vmatpush1.bf16.msra.mxu0 %v457
  %578 = vmatprep.subr.bf16.mxu0 0
  %579 = vmatpush1.bf16.msra.mxu0 0
  %580 = vmatprep.subr.bf16.mxu0 0
  %581 = vmatpush1.bf16.msra.mxu0 0
  %582 = vmatprep.subr.bf16.mxu0 0
  %583 = vmatpush1.bf16.msra.mxu0 0
  %584 = vmatprep.subr.bf16.mxu0 0
  %585 = vmatpush1.bf16.msra.mxu0 0
  %586 = vmatprep.subr.bf16.mxu0 0
  %587 = vmatpush1.bf16.msra.mxu0 0
  %588 = vmatprep.subr.bf16.mxu0 0
  %589 = vmatpush1.bf16.msra.mxu0 0
  %590 = vmatprep.subr.bf16.mxu0 0
  %591 = vmatpush1.bf16.msra.mxu0 0
  %592 = vmatprep.subr.bf16.mxu0 0
  %593 = vmatpush1.bf16.msra.mxu0 0
  %594 = vmatprep.subr.bf16.mxu0 0
  %595 = vmatpush1.bf16.msra.mxu0 0
  %596 = vmatprep.subr.bf16.mxu0 0
  %597 = vmatpush1.bf16.msra.mxu0 0
  %598 = vmatprep.subr.bf16.mxu0 0
  %599 = vmatpush1.bf16.msra.mxu0 0
  %600 = vmatprep.subr.bf16.mxu0 0
  %601 = vmatpush1.bf16.msra.mxu0 0
  %602 = vmatprep.subr.bf16.mxu0 0
  %603 = vmatpush1.bf16.msra.mxu0 0
  %604 = vmatprep.subr.bf16.mxu0 0
  %605 = vmatpush1.bf16.msra.mxu0 0
  %606 = vmatprep.mubr.bf16.mxu0 0
  %607 = vmatmul.mubr.bf16.gmra.mrb[0].mxu0 %v490
  %v608 = vpop.f32.mrb[0].mxu0
  %v609 = vadd.f32 0.0, %v608
  %v610 = vpop.f32.mrb[0].mxu0
  %v611 = vadd.f32 0.0, %v610
  %v612 = vpop.f32.mrb[0].mxu0
  %v613 = vpop.f32.mrb[0].mxu0
  %614 = vdwg.mxu0
  %615 = vmatprep.subr.bf16.mxu0 %v448
  %616 = vmatpush1.bf16.msra.mxu0 %v447
  %617 = vmatprep.subr.bf16.mxu0 %v460
  %618 = vmatpush1.bf16.msra.mxu0 %v459
  %619 = vmatprep.subr.bf16.mxu0 0
  %620 = vmatpush1.bf16.msra.mxu0 0
  %621 = vmatprep.subr.bf16.mxu0 0
  %622 = vmatpush1.bf16.msra.mxu0 0
  %623 = vmatprep.subr.bf16.mxu0 0
  %624 = vmatpush1.bf16.msra.mxu0 0
  %625 = vmatprep.subr.bf16.mxu0 0
  %626 = vmatpush1.bf16.msra.mxu0 0
  %627 = vmatprep.subr.bf16.mxu0 0
  %628 = vmatpush1.bf16.msra.mxu0 0
  %629 = vmatprep.subr.bf16.mxu0 0
  %630 = vmatpush1.bf16.msra.mxu0 0
  %631 = vmatprep.subr.bf16.mxu0 0
  %632 = vmatpush1.bf16.msra.mxu0 0
  %633 = vmatprep.subr.bf16.mxu0 0
  %634 = vmatpush1.bf16.msra.mxu0 0
  %635 = vmatprep.subr.bf16.mxu0 0
  %636 = vmatpush1.bf16.msra.mxu0 0
  %637 = vmatprep.subr.bf16.mxu0 0
  %638 = vmatpush1.bf16.msra.mxu0 0
  %639 = vmatprep.subr.bf16.mxu0 0
  %640 = vmatpush1.bf16.msra.mxu0 0
  %641 = vmatprep.subr.bf16.mxu0 0
  %642 = vmatpush1.bf16.msra.mxu0 0
  %643 = vmatprep.subr.bf16.mxu0 0
  %644 = vmatpush1.bf16.msra.mxu0 0
  %645 = vmatprep.subr.bf16.mxu0 0
  %646 = vmatpush1.bf16.msra.mxu0 0
  %647 = vmatprep.mubr.bf16.mxu0 0
  %648 = vmatmul.mubr.bf16.gmra.mrb[0].mxu0 %v490
  %v649 = vpop.f32.mrb[0].mxu0
  %v650 = vadd.f32 0.0, %v649
  %v651 = vpop.f32.mrb[0].mxu0
  %v652 = vadd.f32 0.0, %v651
  %v653 = vpop.f32.mrb[0].mxu0
  %v654 = vpop.f32.mrb[0].mxu0
  %655 = vdwg.mxu0
  %656 = vmatprep.subr.bf16.mxu0 %v450
  %657 = vmatpush1.bf16.msra.mxu0 %v449
  %658 = vmatprep.subr.bf16.mxu0 %v462
  %659 = vmatpush1.bf16.msra.mxu0 %v461
  %660 = vmatprep.subr.bf16.mxu0 0
  %661 = vmatpush1.bf16.msra.mxu0 0
  %662 = vmatprep.subr.bf16.mxu0 0
  %663 = vmatpush1.bf16.msra.mxu0 0
  %664 = vmatprep.subr.bf16.mxu0 0
  %665 = vmatpush1.bf16.msra.mxu0 0
  %666 = vmatprep.subr.bf16.mxu0 0
  %667 = vmatpush1.bf16.msra.mxu0 0
  %668 = vmatprep.subr.bf16.mxu0 0
  %669 = vmatpush1.bf16.msra.mxu0 0
  %670 = vmatprep.subr.bf16.mxu0 0
  %671 = vmatpush1.bf16.msra.mxu0 0
  %672 = vmatprep.subr.bf16.mxu0 0
  %673 = vmatpush1.bf16.msra.mxu0 0
  %674 = vmatprep.subr.bf16.mxu0 0
  %675 = vmatpush1.bf16.msra.mxu0 0
  %676 = vmatprep.subr.bf16.mxu0 0
  %677 = vmatpush1.bf16.msra.mxu0 0
  %678 = vmatprep.subr.bf16.mxu0 0
  %679 = vmatpush1.bf16.msra.mxu0 0
  %680 = vmatprep.subr.bf16.mxu0 0
  %681 = vmatpush1.bf16.msra.mxu0 0
  %682 = vmatprep.subr.bf16.mxu0 0
  %683 = vmatpush1.bf16.msra.mxu0 0
  %684 = vmatprep.subr.bf16.mxu0 0
  %685 = vmatpush1.bf16.msra.mxu0 0
  %686 = vmatprep.subr.bf16.mxu0 0
  %687 = vmatpush1.bf16.msra.mxu0 0
  %688 = vmatprep.mubr.bf16.mxu0 0
  %689 = vmatmul.mubr.bf16.gmra.mrb[0].mxu0 %v490
  %v690 = vpop.f32.mrb[0].mxu0
  %v691 = vadd.f32 0.0, %v690
  %v692 = vpop.f32.mrb[0].mxu0
  %v693 = vadd.f32 0.0, %v692
  %v694 = vpop.f32.mrb[0].mxu0
  %v695 = vpop.f32.mrb[0].mxu0
  %696 = vdwg.mxu0
  %697 = vmatprep.subr.bf16.mxu0 %v452
  %698 = vmatpush1.bf16.msra.mxu0 %v451
  %699 = vmatprep.subr.bf16.mxu0 %v464
  %700 = vmatpush1.bf16.msra.mxu0 %v463
  %701 = vmatprep.subr.bf16.mxu0 0
  %702 = vmatpush1.bf16.msra.mxu0 0
  %703 = vmatprep.subr.bf16.mxu0 0
  %704 = vmatpush1.bf16.msra.mxu0 0
  %705 = vmatprep.subr.bf16.mxu0 0
  %706 = vmatpush1.bf16.msra.mxu0 0
  %707 = vmatprep.subr.bf16.mxu0 0
  %708 = vmatpush1.bf16.msra.mxu0 0
  %709 = vmatprep.subr.bf16.mxu0 0
  %710 = vmatpush1.bf16.msra.mxu0 0
  %711 = vmatprep.subr.bf16.mxu0 0
  %712 = vmatpush1.bf16.msra.mxu0 0
  %713 = vmatprep.subr.bf16.mxu0 0
  %714 = vmatpush1.bf16.msra.mxu0 0
  %715 = vmatprep.subr.bf16.mxu0 0
  %716 = vmatpush1.bf16.msra.mxu0 0
  %717 = vmatprep.subr.bf16.mxu0 0
  %718 = vmatpush1.bf16.msra.mxu0 0
  %719 = vmatprep.subr.bf16.mxu0 0
  %720 = vmatpush1.bf16.msra.mxu0 0
  %721 = vmatprep.subr.bf16.mxu0 0
  %722 = vmatpush1.bf16.msra.mxu0 0
  %723 = vmatprep.subr.bf16.mxu0 0
  %724 = vmatpush1.bf16.msra.mxu0 0
  %725 = vmatprep.subr.bf16.mxu0 0
  %726 = vmatpush1.bf16.msra.mxu0 0
  %727 = vmatprep.subr.bf16.mxu0 0
  %728 = vmatpush1.bf16.msra.mxu0 0
  %729 = vmatprep.mubr.bf16.mxu0 0
  %730 = vmatmul.mubr.bf16.gmra.mrb[0].mxu0 %v490
  %v731 = vpop.f32.mrb[0].mxu0
  %v732 = vadd.f32 0.0, %v731
  %v733 = vpop.f32.mrb[0].mxu0
  %v734 = vadd.f32 0.0, %v733
  %v735 = vpop.f32.mrb[0].mxu0
  %v736 = vpop.f32.mrb[0].mxu0
  %737 = vdwg.mxu0
  %s738 = scalar_lea.vmem %s6, 2
  %v739 = vld [vmem:[%s738] ss:$8 sm:$0xf]
  %v741 = vlaneseq
  %v742 = vshrl.u32 %v741, 7
  %v743 = vsub.s32 0, %v742
  %v744 = vrot.slane %v739, %v743
  %v745 = vlaneseq
  %v746 = vshrl.u32 %v745, 7
  %v747 = vsub.s32 1, %v746
  %v748 = vrot.slane %v739, %v747
  %v749 = vlaneseq
  %v750 = vshrl.u32 %v749, 7
  %v751 = vsub.s32 2, %v750
  %v752 = vrot.slane %v739, %v751
  %v753 = vlaneseq
  %v754 = vshrl.u32 %v753, 7
  %v755 = vsub.s32 3, %v754
  %v756 = vrot.slane %v739, %v755
  %v761 = vadd.f32 %v215, %v744
  %v762 = vadd.f32 %v217, %v748
  %v763 = vadd.f32 %v256, %v752
  %v764 = vadd.f32 %v258, %v756
  %s765 = scalar_lea.vmem %s6, 3
  %v766 = vld [vmem:[%s765] ss:$8 sm:$0xf]
  %v768 = vlaneseq
  %v769 = vshrl.u32 %v768, 7
  %v770 = vsub.s32 0, %v769
  %v771 = vrot.slane %v766, %v770
  %v772 = vlaneseq
  %v773 = vshrl.u32 %v772, 7
  %v774 = vsub.s32 1, %v773
  %v775 = vrot.slane %v766, %v774
  %v776 = vlaneseq
  %v777 = vshrl.u32 %v776, 7
  %v778 = vsub.s32 2, %v777
  %v779 = vrot.slane %v766, %v778
  %v780 = vlaneseq
  %v781 = vshrl.u32 %v780, 7
  %v782 = vsub.s32 3, %v781
  %v783 = vrot.slane %v766, %v782
  %v788 = vadd.f32 %v297, %v771
  %v789 = vadd.f32 %v299, %v775
  %v790 = vadd.f32 %v338, %v779
  %v791 = vadd.f32 %v340, %v783
  %s792 = scalar_lea.vmem %s6, 4
  %v793 = vld [vmem:[%s792] ss:$8 sm:$0xf]
  %v795 = vlaneseq
  %v796 = vshrl.u32 %v795, 7
  %v797 = vsub.s32 0, %v796
  %v798 = vrot.slane %v793, %v797
  %v799 = vlaneseq
  %v800 = vshrl.u32 %v799, 7
  %v801 = vsub.s32 1, %v800
  %v802 = vrot.slane %v793, %v801
  %v803 = vlaneseq
  %v804 = vshrl.u32 %v803, 7
  %v805 = vsub.s32 2, %v804
  %v806 = vrot.slane %v793, %v805
  %v807 = vlaneseq
  %v808 = vshrl.u32 %v807, 7
  %v809 = vsub.s32 3, %v808
  %v810 = vrot.slane %v793, %v809
  %v815 = vadd.f32 %v527, %v798
  %v816 = vadd.f32 %v529, %v802
  %v817 = vadd.f32 %v568, %v806
  %v818 = vadd.f32 %v570, %v810
  %s819 = scalar_lea.vmem %s6, 5
  %v820 = vld [vmem:[%s819] ss:$8 sm:$0xf]
  %v822 = vlaneseq
  %v823 = vshrl.u32 %v822, 7
  %v824 = vsub.s32 0, %v823
  %v825 = vrot.slane %v820, %v824
  %v826 = vlaneseq
  %v827 = vshrl.u32 %v826, 7
  %v828 = vsub.s32 1, %v827
  %v829 = vrot.slane %v820, %v828
  %v830 = vlaneseq
  %v831 = vshrl.u32 %v830, 7
  %v832 = vsub.s32 2, %v831
  %v833 = vrot.slane %v820, %v832
  %v834 = vlaneseq
  %v835 = vshrl.u32 %v834, 7
  %v836 = vsub.s32 3, %v835
  %v837 = vrot.slane %v820, %v836
  %v842 = vadd.f32 %v609, %v825
  %v843 = vadd.f32 %v611, %v829
  %v844 = vadd.f32 %v650, %v833
  %v845 = vadd.f32 %v652, %v837
  %s846 = scalar_lea.vmem %s6, 6
  %v847 = vld [vmem:[%s846] ss:$8 sm:$0xf]
  %v849 = vlaneseq
  %v850 = vshrl.u32 %v849, 7
  %v851 = vsub.s32 0, %v850
  %v852 = vrot.slane %v847, %v851
  %v853 = vlaneseq
  %v854 = vshrl.u32 %v853, 7
  %v855 = vsub.s32 1, %v854
  %v856 = vrot.slane %v847, %v855
  %v857 = vlaneseq
  %v858 = vshrl.u32 %v857, 7
  %v859 = vsub.s32 2, %v858
  %v860 = vrot.slane %v847, %v859
  %v861 = vlaneseq
  %v862 = vshrl.u32 %v861, 7
  %v863 = vsub.s32 3, %v862
  %v864 = vrot.slane %v847, %v863
  %v869 = vadd.f32 %v691, %v852
  %v870 = vadd.f32 %v693, %v856
  %v871 = vadd.f32 %v732, %v860
  %v872 = vadd.f32 %v734, %v864
  %v873 = vld [vmem:[%s1] sm:$0xf]
  %v874 = vld [vmem:[%s1 + $0x4] sm:$0xf]
  %v875 = vld [vmem:[%s1 + $0x8] sm:$0xf]
  %v876 = vld [vmem:[%s1 + $0xc] sm:$0xf]
  %v877 = vld [vmem:[%s1 + $0x10] sm:$0xf]
  %v878 = vld [vmem:[%s1 + $0x14] sm:$0xf]
  %v879 = vld [vmem:[%s1 + $0x18] sm:$0xf]
  %v880 = vld [vmem:[%s1 + $0x1c] sm:$0xf]
  %v881 = vld [vmem:[%s8] sm:$0xff]
  %v882 = vld [vmem:[%s8 + $0x8] sm:$0xff]
  %v883 = vld [vmem:[%s8 + $0x10] sm:$0xff]
  %v884 = vld [vmem:[%s8 + $0x18] sm:$0xff]
  %s885 = scalar_lea.vmem %s6, 7
  %v886 = vld [vmem:[%s885] ss:$8 sm:$0xf]
  %v888 = vlaneseq
  %v889 = vshrl.u32 %v888, 7
  %v890 = vsub.s32 0, %v889
  %v891 = vrot.slane %v886, %v890
  %v892 = vlaneseq
  %v893 = vshrl.u32 %v892, 7
  %v894 = vsub.s32 1, %v893
  %v895 = vrot.slane %v886, %v894
  %v896 = vlaneseq
  %v897 = vshrl.u32 %v896, 7
  %v898 = vsub.s32 2, %v897
  %v899 = vrot.slane %v886, %v898
  %v900 = vlaneseq
  %v901 = vshrl.u32 %v900, 7
  %v902 = vsub.s32 3, %v901
  %v903 = vrot.slane %v886, %v902
  %v916 = vunpack.c.l.b16 %v873
  %v917 = vunpack.c.l.b16 %v874
  %v918 = vunpack.c.l.b16 %v875
  %v919 = vunpack.c.l.b16 %v876
  %v920 = vunpack.c.l.b16 %v877
  %v921 = vunpack.c.l.b16 %v878
  %v922 = vunpack.c.l.b16 %v879
  %v923 = vunpack.c.l.b16 %v880
  %v924 = vpack.c.b16 %v917, %v916
  %v925 = vpack.c.b16 %v919, %v918
  %v926 = vpack.c.b16 %v921, %v920
  %v927 = vpack.c.b16 %v923, %v922
  %v932 = vunpack.c.l.b16 %v881
  %v933 = vunpack.c.h.b16 %v881
  %v934 = vunpack.c.l.b16 %v882
  %v935 = vunpack.c.h.b16 %v882
  %v936 = vunpack.c.l.b16 %v883
  %v937 = vunpack.c.h.b16 %v883
  %v938 = vunpack.c.l.b16 %v884
  %v939 = vunpack.c.h.b16 %v884
  %v940 = vpack.c.b16 %v936, %v932
  %v941 = vpack.c.b16 %v937, %v933
  %v942 = vpack.c.b16 %v938, %v934
  %v943 = vpack.c.b16 %v939, %v935
  %vm948 = vcmask 130048
  %v950 = vsel %vm948, %v924, 0
  %v953 = vsel %vm948, %v925, 0
  %v956 = vsel %vm948, %v926, 0
  %v959 = vsel %vm948, %v927, 0
  %961 = vmatprep.subr.bf16.mxu0 %v941
  %962 = vmatpush1.bf16.msra.mxu0 %v940
  %963 = vmatprep.subr.bf16.mxu0 0
  %964 = vmatpush1.bf16.msra.mxu0 0
  %965 = vmatprep.subr.bf16.mxu0 0
  %966 = vmatpush1.bf16.msra.mxu0 0
  %967 = vmatprep.subr.bf16.mxu0 0
  %968 = vmatpush1.bf16.msra.mxu0 0
  %969 = vmatprep.subr.bf16.mxu0 0
  %970 = vmatpush1.bf16.msra.mxu0 0
  %971 = vmatprep.subr.bf16.mxu0 0
  %972 = vmatpush1.bf16.msra.mxu0 0
  %973 = vmatprep.subr.bf16.mxu0 0
  %974 = vmatpush1.bf16.msra.mxu0 0
  %975 = vmatprep.subr.bf16.mxu0 0
  %976 = vmatpush1.bf16.msra.mxu0 0
  %977 = vmatprep.subr.bf16.mxu0 0
  %978 = vmatpush1.bf16.msra.mxu0 0
  %979 = vmatprep.subr.bf16.mxu0 0
  %980 = vmatpush1.bf16.msra.mxu0 0
  %981 = vmatprep.subr.bf16.mxu0 0
  %982 = vmatpush1.bf16.msra.mxu0 0
  %983 = vmatprep.subr.bf16.mxu0 0
  %984 = vmatpush1.bf16.msra.mxu0 0
  %985 = vmatprep.subr.bf16.mxu0 0
  %986 = vmatpush1.bf16.msra.mxu0 0
  %987 = vmatprep.subr.bf16.mxu0 0
  %988 = vmatpush1.bf16.msra.mxu0 0
  %989 = vmatprep.subr.bf16.mxu0 0
  %990 = vmatpush1.bf16.msra.mxu0 0
  %991 = vmatprep.subr.bf16.mxu0 0
  %992 = vmatpush1.bf16.msra.mxu0 0
  %993 = vmatprep.mubr.bf16.mxu0 0
  %994 = vmatmul.mubr.bf16.gmra.mrb[0].mxu0 %v950
  %v995 = vpop.f32.mrb[0].mxu0
  %v996 = vadd.f32 %v891, %v995
  %v997 = vpop.f32.mrb[0].mxu0
  %v998 = vadd.f32 %v895, %v997
  %v999 = vpop.f32.mrb[0].mxu0
  %v1000 = vadd.f32 %v891, %v999
  %v1001 = vpop.f32.mrb[0].mxu0
  %v1002 = vadd.f32 %v895, %v1001
  %1003 = vmatprep.mubr.bf16.mxu0 0
  %1004 = vmatmul.mubr.bf16.gmra.mrb[0].mxu0 %v953
  %v1005 = vpop.f32.mrb[0].mxu0
  %v1006 = vadd.f32 %v891, %v1005
  %v1007 = vpop.f32.mrb[0].mxu0
  %v1008 = vadd.f32 %v895, %v1007
  %v1009 = vpop.f32.mrb[0].mxu0
  %v1010 = vadd.f32 %v891, %v1009
  %v1011 = vpop.f32.mrb[0].mxu0
  %v1012 = vadd.f32 %v895, %v1011
  %1013 = vmatprep.mubr.bf16.mxu0 0
  %1014 = vmatmul.mubr.bf16.gmra.mrb[0].mxu0 %v956
  %v1015 = vpop.f32.mrb[0].mxu0
  %v1016 = vadd.f32 %v891, %v1015
  %v1017 = vpop.f32.mrb[0].mxu0
  %v1018 = vadd.f32 %v895, %v1017
  %v1019 = vpop.f32.mrb[0].mxu0
  %v1020 = vadd.f32 %v891, %v1019
  %v1021 = vpop.f32.mrb[0].mxu0
  %v1022 = vadd.f32 %v895, %v1021
  %1023 = vmatprep.mubr.bf16.mxu0 0
  %1024 = vmatmul.mubr.bf16.gmra.mrb[0].mxu0 %v959
  %v1025 = vpop.f32.mrb[0].mxu0
  %v1026 = vadd.f32 %v891, %v1025
  %v1027 = vpop.f32.mrb[0].mxu0
  %v1028 = vadd.f32 %v895, %v1027
  %v1029 = vpop.f32.mrb[0].mxu0
  %v1030 = vadd.f32 %v891, %v1029
  %v1031 = vpop.f32.mrb[0].mxu0
  %v1032 = vadd.f32 %v895, %v1031
  %1033 = vdwg.mxu0
  %1034 = vmatprep.subr.bf16.mxu0 %v943
  %1035 = vmatpush1.bf16.msra.mxu0 %v942
  %1036 = vmatprep.subr.bf16.mxu0 0
  %1037 = vmatpush1.bf16.msra.mxu0 0
  %1038 = vmatprep.subr.bf16.mxu0 0
  %1039 = vmatpush1.bf16.msra.mxu0 0
  %1040 = vmatprep.subr.bf16.mxu0 0
  %1041 = vmatpush1.bf16.msra.mxu0 0
  %1042 = vmatprep.subr.bf16.mxu0 0
  %1043 = vmatpush1.bf16.msra.mxu0 0
  %1044 = vmatprep.subr.bf16.mxu0 0
  %1045 = vmatpush1.bf16.msra.mxu0 0
  %1046 = vmatprep.subr.bf16.mxu0 0
  %1047 = vmatpush1.bf16.msra.mxu0 0
  %1048 = vmatprep.subr.bf16.mxu0 0
  %1049 = vmatpush1.bf16.msra.mxu0 0
  %1050 = vmatprep.subr.bf16.mxu0 0
  %1051 = vmatpush1.bf16.msra.mxu0 0
  %1052 = vmatprep.subr.bf16.mxu0 0
  %1053 = vmatpush1.bf16.msra.mxu0 0
  %1054 = vmatprep.subr.bf16.mxu0 0
  %1055 = vmatpush1.bf16.msra.mxu0 0
  %1056 = vmatprep.subr.bf16.mxu0 0
  %1057 = vmatpush1.bf16.msra.mxu0 0
  %1058 = vmatprep.subr.bf16.mxu0 0
  %1059 = vmatpush1.bf16.msra.mxu0 0
  %1060 = vmatprep.subr.bf16.mxu0 0
  %1061 = vmatpush1.bf16.msra.mxu0 0
  %1062 = vmatprep.subr.bf16.mxu0 0
  %1063 = vmatpush1.bf16.msra.mxu0 0
  %1064 = vmatprep.subr.bf16.mxu0 0
  %1065 = vmatpush1.bf16.msra.mxu0 0
  %1066 = vmatprep.mubr.bf16.mxu0 0
  %1067 = vmatmul.mubr.bf16.gmra.mrb[0].mxu0 %v950
  %v1068 = vpop.f32.mrb[0].mxu0
  %v1069 = vadd.f32 %v899, %v1068
  %v1070 = vpop.f32.mrb[0].mxu0
  %v1071 = vadd.f32 %v903, %v1070
  %v1072 = vpop.f32.mrb[0].mxu0
  %v1073 = vadd.f32 %v899, %v1072
  %v1074 = vpop.f32.mrb[0].mxu0
  %v1075 = vadd.f32 %v903, %v1074
  %1076 = vmatprep.mubr.bf16.mxu0 0
  %1077 = vmatmul.mubr.bf16.gmra.mrb[0].mxu0 %v953
  %v1078 = vpop.f32.mrb[0].mxu0
  %v1079 = vadd.f32 %v899, %v1078
  %v1080 = vpop.f32.mrb[0].mxu0
  %v1081 = vadd.f32 %v903, %v1080
  %v1082 = vpop.f32.mrb[0].mxu0
  %v1083 = vadd.f32 %v899, %v1082
  %v1084 = vpop.f32.mrb[0].mxu0
  %v1085 = vadd.f32 %v903, %v1084
  %1086 = vmatprep.mubr.bf16.mxu0 0
  %1087 = vmatmul.mubr.bf16.gmra.mrb[0].mxu0 %v956
  %v1088 = vpop.f32.mrb[0].mxu0
  %v1089 = vadd.f32 %v899, %v1088
  %v1090 = vpop.f32.mrb[0].mxu0
  %v1091 = vadd.f32 %v903, %v1090
  %v1092 = vpop.f32.mrb[0].mxu0
  %v1093 = vadd.f32 %v899, %v1092
  %v1094 = vpop.f32.mrb[0].mxu0
  %v1095 = vadd.f32 %v903, %v1094
  %1096 = vmatprep.mubr.bf16.mxu0 0
  %1097 = vmatmul.mubr.bf16.gmra.mrb[0].mxu0 %v959
  %v1098 = vpop.f32.mrb[0].mxu0
  %v1099 = vadd.f32 %v899, %v1098
  %v1100 = vpop.f32.mrb[0].mxu0
  %v1101 = vadd.f32 %v903, %v1100
  %v1102 = vpop.f32.mrb[0].mxu0
  %v1103 = vadd.f32 %v899, %v1102
  %v1104 = vpop.f32.mrb[0].mxu0
  %v1105 = vadd.f32 %v903, %v1104
  %1106 = vdwg.mxu0
  %s1107 = scalar_lea.vmem %s4, %s42
  %v1108 = vld [vmem:[%s1107] sm:$0xff]
  %s1109 = scalar_lea.vmem %s5, %s42
  %v1110 = vld [vmem:[%s1109] sm:$0xff]
  %v1111 = vld [vmem:[%s4] sm:$0xff]
  %v1112 = vld [vmem:[%s5] sm:$0xff]
  %v1113 = vld [vmem:[%s2] sm:$0xff]
  %vm1114 = vcmp.gt.f32.partialorder %v1113, 0.0
  %v1115 = vld [vmem:[%s3] sm:$0x1]
  %vm1116 = vcmp.gt.f32.partialorder %v1115, 0.0
  %v1117 = vsel %vm1114, 1, 0
  %1118 = vset.pattern.permute.xlu0 0
  %1119 = vperm.xlu0 %1118, %v1117
  %v1120 = vpop.permute.xlu0 %1119
  %vm1121 = vcmp.eq.s32.totalorder %v1120, 1
  %v1122 = vsel %vm1116, 1, 0
  %v1123 = vlaneseq
  %v1124 = vshrl.u32 %v1123, 7
  %v1125 = vsub.s32 0, %v1124
  %v1126 = vrot.slane %v1122, %v1125
  %vm1127 = vcmp.eq.s32.totalorder %v1126, 1
  %vm1128 = vmand %vm1121, %vm1127
  %v1129 = vmul.f32 %v761, %v1108
  %v1130 = vmul.f32 %v788, %v1110
  %v1131 = vadd.f32 %v1129, %v1130
  %v1132 = vmul.f32 %v815, %v1111
  %v1133 = vmul.f32 %v842, %v1112
  %v1134 = vadd.f32 %v1132, %v1133
  %v1135 = vpack.c.bf16 %v1131, %v1131
  %v1136 = vpack.c.bf16 %v1134, %v1134
  %v1138 = vcombine.high %v1131, %v1131
  %v1140 = vunpack.c.l.s4 1966171168
  %v1141 = vunpack.c.0.s8 %v1140
  %v1142 = vlaneseq
  %v1143 = vshrl.u32 %v1142, 7
  %v1144 = vsub.s32 %v1141, %v1143
  %v1145 = vrot.slane %v1131, %v1144
  %v1147 = vunpack.c.l.s4 1966171168
  %v1148 = vunpack.c.0.s8 %v1147
  %v1149 = vlaneseq
  %v1150 = vshrl.u32 %v1149, 7
  %v1151 = vsub.s32 %v1148, %v1150
  %v1152 = vrot.slane %v1138, %v1151
  %v1153 = vcombine.high %v1145, %v1145
  %v1154 = vcombine.high %v1152, %v1152
  %v1156 = vunpack.c.l.s4 1966171168
  %v1157 = vunpack.c.0.s8 %v1156
  %v1158 = vlaneseq
  %v1159 = vshrl.u32 %v1158, 7
  %v1160 = vsub.s32 %v1157, %v1159
  %v1161 = vrot.slane %v1145, %v1160
  %v1163 = vunpack.c.l.s4 1966171168
  %v1164 = vunpack.c.0.s8 %v1163
  %v1165 = vlaneseq
  %v1166 = vshrl.u32 %v1165, 7
  %v1167 = vsub.s32 %v1164, %v1166
  %v1168 = vrot.slane %v1152, %v1167
  %v1170 = vunpack.c.l.s4 1966171168
  %v1171 = vunpack.c.0.s8 %v1170
  %v1172 = vlaneseq
  %v1173 = vshrl.u32 %v1172, 7
  %v1174 = vsub.s32 %v1171, %v1173
  %v1175 = vrot.slane %v1153, %v1174
  %v1177 = vunpack.c.l.s4 1966171168
  %v1178 = vunpack.c.0.s8 %v1177
  %v1179 = vlaneseq
  %v1180 = vshrl.u32 %v1179, 7
  %v1181 = vsub.s32 %v1178, %v1180
  %v1182 = vrot.slane %v1154, %v1181
  %v1183 = vcombine.high %v1161, %v1161
  %v1184 = vcombine.high %v1168, %v1168
  %v1185 = vcombine.high %v1175, %v1175
  %v1186 = vcombine.high %v1182, %v1182
  %v1187 = vlaneseq
  %v1188 = vshrl.u32 %v1187, 7
  %v1189 = vsub.s32 0, %v1188
  %v1190 = vrot.slane %v1161, %v1189
  %v1191 = vlaneseq
  %v1192 = vshrl.u32 %v1191, 7
  %v1193 = vsub.s32 0, %v1192
  %v1194 = vrot.slane %v1175, %v1193
  %v1195 = vlaneseq
  %v1196 = vshrl.u32 %v1195, 7
  %v1197 = vsub.s32 0, %v1196
  %v1198 = vrot.slane %v1183, %v1197
  %v1199 = vlaneseq
  %v1200 = vshrl.u32 %v1199, 7
  %v1201 = vsub.s32 0, %v1200
  %v1202 = vrot.slane %v1185, %v1201
  %v1203 = vlaneseq
  %v1204 = vshrl.u32 %v1203, 7
  %v1205 = vsub.s32 0, %v1204
  %v1206 = vrot.slane %v1168, %v1205
  %v1207 = vlaneseq
  %v1208 = vshrl.u32 %v1207, 7
  %v1209 = vsub.s32 0, %v1208
  %v1210 = vrot.slane %v1182, %v1209
  %v1211 = vlaneseq
  %v1212 = vshrl.u32 %v1211, 7
  %v1213 = vsub.s32 0, %v1212
  %v1214 = vrot.slane %v1184, %v1213
  %v1215 = vlaneseq
  %v1216 = vshrl.u32 %v1215, 7
  %v1217 = vsub.s32 0, %v1216
  %v1218 = vrot.slane %v1186, %v1217
  %v1227 = vmul.f32 %v1190, %v996
  %v1228 = vmul.f32 %v1194, %v1000
  %v1229 = vmul.f32 %v1198, %v1006
  %v1230 = vmul.f32 %v1202, %v1010
  %v1231 = vmul.f32 %v1206, %v1016
  %v1232 = vmul.f32 %v1210, %v1020
  %v1233 = vmul.f32 %v1214, %v1026
  %v1234 = vmul.f32 %v1218, %v1030
  %vm1235 = vcmask 523264
  %v1236 = vsel %vm1235, %v1227, 0.0
  %1237 = vadd.xlane.f32.xlu0 %v1236
  %v1238 = vpop.xlane.xlu0 %1237
  %v1239 = vsel %vm1235, %v1228, 0.0
  %1240 = vadd.xlane.f32.xlu0 %v1239
  %v1241 = vpop.xlane.xlu0 %1240
  %v1242 = vsel %vm1235, %v1229, 0.0
  %1243 = vadd.xlane.f32.xlu0 %v1242
  %v1244 = vpop.xlane.xlu0 %1243
  %v1245 = vsel %vm1235, %v1230, 0.0
  %1246 = vadd.xlane.f32.xlu0 %v1245
  %v1247 = vpop.xlane.xlu0 %1246
  %v1248 = vsel %vm1235, %v1231, 0.0
  %1249 = vadd.xlane.f32.xlu0 %v1248
  %v1250 = vpop.xlane.xlu0 %1249
  %v1251 = vsel %vm1235, %v1232, 0.0
  %1252 = vadd.xlane.f32.xlu0 %v1251
  %v1253 = vpop.xlane.xlu0 %1252
  %v1254 = vsel %vm1235, %v1233, 0.0
  %1255 = vadd.xlane.f32.xlu0 %v1254
  %v1256 = vpop.xlane.xlu0 %1255
  %v1257 = vsel %vm1235, %v1234, 0.0
  %1258 = vadd.xlane.f32.xlu0 %v1257
  %v1259 = vpop.xlane.xlu0 %1258
  %v1268 = vlaneseq
  %v1269 = vand.u32 %v1268, 127
  %v1270 = vlaneseq
  %v1271 = vshrl.u32 %v1270, 7
  %v1272 = vsub.s32 %v1269, %v1271
  %v1273 = vrot.slane %v1238, %v1272
  %v1274 = vlaneseq
  %v1275 = vshrl.u32 %v1274, 7
  %v1276 = vsub.s32 %v1269, %v1275
  %v1277 = vrot.slane %v1241, %v1276
  %v1278 = vlaneseq
  %v1279 = vshrl.u32 %v1278, 7
  %v1280 = vsub.s32 %v1269, %v1279
  %v1281 = vrot.slane %v1244, %v1280
  %v1282 = vlaneseq
  %v1283 = vshrl.u32 %v1282, 7
  %v1284 = vsub.s32 %v1269, %v1283
  %v1285 = vrot.slane %v1247, %v1284
  %v1286 = vlaneseq
  %v1287 = vshrl.u32 %v1286, 7
  %v1288 = vsub.s32 %v1269, %v1287
  %v1289 = vrot.slane %v1250, %v1288
  %v1290 = vlaneseq
  %v1291 = vshrl.u32 %v1290, 7
  %v1292 = vsub.s32 %v1269, %v1291
  %v1293 = vrot.slane %v1253, %v1292
  %v1294 = vlaneseq
  %v1295 = vshrl.u32 %v1294, 7
  %v1296 = vsub.s32 %v1269, %v1295
  %v1297 = vrot.slane %v1256, %v1296
  %v1298 = vlaneseq
  %v1299 = vshrl.u32 %v1298, 7
  %v1300 = vsub.s32 %v1269, %v1299
  %v1301 = vrot.slane %v1259, %v1300
  %vm1302 = vcmask 1041409
  %v1303 = vsel %vm1302, %v1277, %v1273
  %vm1304 = vcmask 1042434
  %v1305 = vsel %vm1304, %v1281, %v1303
  %vm1306 = vcmask 1043459
  %v1307 = vsel %vm1306, %v1285, %v1305
  %vm1308 = vcmask 1044484
  %v1309 = vsel %vm1308, %v1289, %v1307
  %vm1310 = vcmask 1045509
  %v1311 = vsel %vm1310, %v1293, %v1309
  %vm1312 = vcmask 1046534
  %v1313 = vsel %vm1312, %v1297, %v1311
  %vm1314 = vcmask 1047559
  %v1315 = vsel %vm1314, %v1301, %v1313
  %v1318 = vsel %vm1235, %v1135, 0
  %v1321 = vsel %vm1235, %v1136, 0
  %1323 = vmatprep.subr.bf16.mxu0 0
  %1324 = vmatpush1.bf16.xpose.msra.mxu0 %v1321
  %1325 = vmatprep.subr.bf16.mxu0 0
  %1326 = vmatpush1.bf16.xpose.msra.mxu0 0
  %1327 = vmatprep.subr.bf16.mxu0 0
  %1328 = vmatpush1.bf16.xpose.msra.mxu0 0
  %1329 = vmatprep.subr.bf16.mxu0 0
  %1330 = vmatpush1.bf16.xpose.msra.mxu0 0
  %1331 = vmatprep.subr.bf16.mxu0 0
  %1332 = vmatpush1.bf16.xpose.msra.mxu0 0
  %1333 = vmatprep.subr.bf16.mxu0 0
  %1334 = vmatpush1.bf16.xpose.msra.mxu0 0
  %1335 = vmatprep.subr.bf16.mxu0 0
  %1336 = vmatpush1.bf16.xpose.msra.mxu0 0
  %1337 = vmatprep.subr.bf16.mxu0 0
  %1338 = vmatpush1.bf16.xpose.msra.mxu0 0
  %1339 = vmatprep.subr.bf16.mxu0 0
  %1340 = vmatpush1.bf16.xpose.msra.mxu0 0
  %1341 = vmatprep.subr.bf16.mxu0 0
  %1342 = vmatpush1.bf16.xpose.msra.mxu0 0
  %1343 = vmatprep.subr.bf16.mxu0 0
  %1344 = vmatpush1.bf16.xpose.msra.mxu0 0
  %1345 = vmatprep.subr.bf16.mxu0 0
  %1346 = vmatpush1.bf16.xpose.msra.mxu0 0
  %1347 = vmatprep.subr.bf16.mxu0 0
  %1348 = vmatpush1.bf16.xpose.msra.mxu0 0
  %1349 = vmatprep.subr.bf16.mxu0 0
  %1350 = vmatpush1.bf16.xpose.msra.mxu0 0
  %1351 = vmatprep.subr.bf16.mxu0 0
  %1352 = vmatpush1.bf16.xpose.msra.mxu0 0
  %1353 = vmatprep.subr.bf16.mxu0 0
  %1354 = vmatpush1.bf16.xpose.msra.mxu0 0
  %1355 = vmatprep.mubr.bf16.mxu0 0
  %1356 = vmatmul.mubr.bf16.gmra.mrb[0].mxu0 %v1318
  %v1357 = vpop.f32.mrb[0].mxu0
  %v1358 = vadd.f32 %v1315, %v1357
  %v1359 = vpop.f32.mrb[0].mxu0
  %v1360 = vpop.f32.mrb[0].mxu0
  %v1361 = vpop.f32.mrb[0].mxu0
  %1362 = vdwg.mxu0
  %v1363 = vmul.f32 %v1358, 0.125
  %v1364 = vsel %vm1128, %v1363, -3.4028235e+38
  %vm1365 = vcmask 64512
  %v1366 = vsel %vm1365, %v1364, -inf
  %1367 = vmax.xlane.f32.xlu0 %v1366
  %v1368 = vpop.xlane.xlu0 %1367
  %v1369 = vsub.f32 %v1364, %v1368
  %v1370 = vmul.f32 %v1369, 1.442695
  %v1371 = vpow.pop %v1370
  %v1372 = vsel %vm1365, %v1371, 0.0
  %1373 = vadd.xlane.f32.xlu0 %v1372
  %v1374 = vpop.xlane.xlu0 %1373
  %v1375 = vrcp.pop %v1374
  %v1376 = vmul.f32 %v1371, %v1375
  %v1377 = vpack.c.bf16 %v1376, %v1376
  %v1378 = vpack.c.bf16 %v869, %v869
  %v1379 = vlaneseq
  %v1380 = vshrl.u32 %v1379, 7
  %v1381 = vsub.s32 0, %v1380
  %v1382 = vrot.slane %v1376, %v1381
  %1384 = vbcast.lane.b32.xlu0 %v1382, 256
  %v1385 = vpop.permute.xlu0 %1384
  %v1386 = vlaneseq
  %v1387 = vshrl.u32 %v1386, 7
  %v1388 = vsub.s32 1, %v1387
  %v1389 = vrot.slane %v1376, %v1388
  %1391 = vbcast.lane.b32.xlu0 %v1389, 256
  %v1392 = vpop.permute.xlu0 %1391
  %v1393 = vlaneseq
  %v1394 = vshrl.u32 %v1393, 7
  %v1395 = vsub.s32 2, %v1394
  %v1396 = vrot.slane %v1376, %v1395
  %1398 = vbcast.lane.b32.xlu0 %v1396, 256
  %v1399 = vpop.permute.xlu0 %1398
  %v1400 = vlaneseq
  %v1401 = vshrl.u32 %v1400, 7
  %v1402 = vsub.s32 3, %v1401
  %v1403 = vrot.slane %v1376, %v1402
  %1405 = vbcast.lane.b32.xlu0 %v1403, 256
  %v1406 = vpop.permute.xlu0 %1405
  %v1407 = vlaneseq
  %v1408 = vshrl.u32 %v1407, 7
  %v1409 = vsub.s32 4, %v1408
  %v1410 = vrot.slane %v1376, %v1409
  %1412 = vbcast.lane.b32.xlu0 %v1410, 256
  %v1413 = vpop.permute.xlu0 %1412
  %v1414 = vlaneseq
  %v1415 = vshrl.u32 %v1414, 7
  %v1416 = vsub.s32 5, %v1415
  %v1417 = vrot.slane %v1376, %v1416
  %1419 = vbcast.lane.b32.xlu0 %v1417, 256
  %v1420 = vpop.permute.xlu0 %1419
  %v1421 = vlaneseq
  %v1422 = vshrl.u32 %v1421, 7
  %v1423 = vsub.s32 6, %v1422
  %v1424 = vrot.slane %v1376, %v1423
  %1426 = vbcast.lane.b32.xlu0 %v1424, 256
  %v1427 = vpop.permute.xlu0 %1426
  %v1428 = vlaneseq
  %v1429 = vshrl.u32 %v1428, 7
  %v1430 = vsub.s32 7, %v1429
  %v1431 = vrot.slane %v1376, %v1430
  %1433 = vbcast.lane.b32.xlu0 %v1431, 256
  %v1434 = vpop.permute.xlu0 %1433
  %v1435 = vmul.f32 %v1385, %v996
  %v1436 = vmul.f32 %v1392, %v1000
  %v1437 = vmul.f32 %v1399, %v1006
  %v1438 = vmul.f32 %v1406, %v1010
  %v1439 = vmul.f32 %v1413, %v1016
  %v1440 = vmul.f32 %v1420, %v1020
  %v1441 = vmul.f32 %v1427, %v1026
  %v1442 = vmul.f32 %v1434, %v1030
  %v1443 = vsel %vm1235, %v1435, 0.0
  %v1444 = vrot.slane %v1443, 4
  %v1445 = vadd.f32 %v1443, %v1444
  %v1446 = vrot.slane %v1445, 2
  %v1447 = vadd.f32 %v1445, %v1446
  %v1448 = vrot.slane %v1447, 1
  %v1449 = vadd.f32 %v1447, %v1448
  %v1450 = vsel %vm1235, %v1436, 0.0
  %v1451 = vrot.slane %v1450, 4
  %v1452 = vadd.f32 %v1450, %v1451
  %v1453 = vrot.slane %v1452, 2
  %v1454 = vadd.f32 %v1452, %v1453
  %v1455 = vrot.slane %v1454, 1
  %v1456 = vadd.f32 %v1454, %v1455
  %v1457 = vsel %vm1235, %v1437, 0.0
  %v1458 = vrot.slane %v1457, 4
  %v1459 = vadd.f32 %v1457, %v1458
  %v1460 = vrot.slane %v1459, 2
  %v1461 = vadd.f32 %v1459, %v1460
  %v1462 = vrot.slane %v1461, 1
  %v1463 = vadd.f32 %v1461, %v1462
  %v1464 = vsel %vm1235, %v1438, 0.0
  %v1465 = vrot.slane %v1464, 4
  %v1466 = vadd.f32 %v1464, %v1465
  %v1467 = vrot.slane %v1466, 2
  %v1468 = vadd.f32 %v1466, %v1467
  %v1469 = vrot.slane %v1468, 1
  %v1470 = vadd.f32 %v1468, %v1469
  %v1471 = vsel %vm1235, %v1439, 0.0
  %v1472 = vrot.slane %v1471, 4
  %v1473 = vadd.f32 %v1471, %v1472
  %v1474 = vrot.slane %v1473, 2
  %v1475 = vadd.f32 %v1473, %v1474
  %v1476 = vrot.slane %v1475, 1
  %v1477 = vadd.f32 %v1475, %v1476
  %v1478 = vsel %vm1235, %v1440, 0.0
  %v1479 = vrot.slane %v1478, 4
  %v1480 = vadd.f32 %v1478, %v1479
  %v1481 = vrot.slane %v1480, 2
  %v1482 = vadd.f32 %v1480, %v1481
  %v1483 = vrot.slane %v1482, 1
  %v1484 = vadd.f32 %v1482, %v1483
  %v1485 = vsel %vm1235, %v1441, 0.0
  %v1486 = vrot.slane %v1485, 4
  %v1487 = vadd.f32 %v1485, %v1486
  %v1488 = vrot.slane %v1487, 2
  %v1489 = vadd.f32 %v1487, %v1488
  %v1490 = vrot.slane %v1489, 1
  %v1491 = vadd.f32 %v1489, %v1490
  %v1492 = vsel %vm1235, %v1442, 0.0
  %v1493 = vrot.slane %v1492, 4
  %v1494 = vadd.f32 %v1492, %v1493
  %v1495 = vrot.slane %v1494, 2
  %v1496 = vadd.f32 %v1494, %v1495
  %v1497 = vrot.slane %v1496, 1
  %v1498 = vadd.f32 %v1496, %v1497
  %v1507 = vsel %vm1302, %v1456, %v1449
  %v1508 = vsel %vm1304, %v1463, %v1507
  %v1509 = vsel %vm1306, %v1470, %v1508
  %v1510 = vsel %vm1308, %v1477, %v1509
  %v1511 = vsel %vm1310, %v1484, %v1510
  %v1512 = vsel %vm1312, %v1491, %v1511
  %v1513 = vsel %vm1314, %v1498, %v1512
  %v1516 = vsel %vm1365, %v1377, 0
  %vm1518 = vcmask 1043456
  %v1520 = vsel %vm1518, %v1378, 0
  %1522 = vmatprep.subr.bf16.mxu0 0
  %1523 = vmatpush1.bf16.msra.mxu0 %v1520
  %1524 = vmatprep.subr.bf16.mxu0 0
  %1525 = vmatpush1.bf16.msra.mxu0 0
  %1526 = vmatprep.subr.bf16.mxu0 0
  %1527 = vmatpush1.bf16.msra.mxu0 0
  %1528 = vmatprep.subr.bf16.mxu0 0
  %1529 = vmatpush1.bf16.msra.mxu0 0
  %1530 = vmatprep.subr.bf16.mxu0 0
  %1531 = vmatpush1.bf16.msra.mxu0 0
  %1532 = vmatprep.subr.bf16.mxu0 0
  %1533 = vmatpush1.bf16.msra.mxu0 0
  %1534 = vmatprep.subr.bf16.mxu0 0
  %1535 = vmatpush1.bf16.msra.mxu0 0
  %1536 = vmatprep.subr.bf16.mxu0 0
  %1537 = vmatpush1.bf16.msra.mxu0 0
  %1538 = vmatprep.subr.bf16.mxu0 0
  %1539 = vmatpush1.bf16.msra.mxu0 0
  %1540 = vmatprep.subr.bf16.mxu0 0
  %1541 = vmatpush1.bf16.msra.mxu0 0
  %1542 = vmatprep.subr.bf16.mxu0 0
  %1543 = vmatpush1.bf16.msra.mxu0 0
  %1544 = vmatprep.subr.bf16.mxu0 0
  %1545 = vmatpush1.bf16.msra.mxu0 0
  %1546 = vmatprep.subr.bf16.mxu0 0
  %1547 = vmatpush1.bf16.msra.mxu0 0
  %1548 = vmatprep.subr.bf16.mxu0 0
  %1549 = vmatpush1.bf16.msra.mxu0 0
  %1550 = vmatprep.subr.bf16.mxu0 0
  %1551 = vmatpush1.bf16.msra.mxu0 0
  %1552 = vmatprep.subr.bf16.mxu0 0
  %1553 = vmatpush1.bf16.msra.mxu0 0
  %1554 = vmatprep.mubr.bf16.mxu0 0
  %1555 = vmatmul.mubr.bf16.gmra.mrb[0].mxu0 %v1516
  %v1556 = vpop.f32.mrb[0].mxu0
  %v1557 = vadd.f32 %v1513, %v1556
  %v1558 = vpop.f32.mrb[0].mxu0
  %v1559 = vpop.f32.mrb[0].mxu0
  %v1560 = vpop.f32.mrb[0].mxu0
  %1561 = vdwg.mxu0
  %v1562 = vpack.c.bf16 %v1557, %v1557
  %v1563 = vld [vmem:[%s9] sm:$0xf]
  %v1564 = vld [vmem:[%s9 + $0x4] sm:$0xf]
  %v1565 = vld [vmem:[%s9 + $0x8] sm:$0xf]
  %v1566 = vld [vmem:[%s9 + $0xc] sm:$0xf]
  %v1567 = vld [vmem:[%s9 + $0x10] sm:$0xf]
  %v1568 = vld [vmem:[%s9 + $0x14] sm:$0xf]
  %v1569 = vld [vmem:[%s9 + $0x18] sm:$0xf]
  %v1570 = vld [vmem:[%s9 + $0x1c] sm:$0xf]
  %1572 = vrot.lane.b32.xlu0 %v1108, 64
  %v1573 = vpop.permute.xlu0 %1572
  %v1575 = vmul.f32 %v761, %v1573
  %1577 = vrot.lane.b32.xlu0 %v1110, 64
  %v1578 = vpop.permute.xlu0 %1577
  %v1580 = vmul.f32 %v788, %v1578
  %v1581 = vadd.f32 %v1575, %v1580
  %1583 = vrot.lane.b32.xlu0 %v1111, 64
  %v1584 = vpop.permute.xlu0 %1583
  %v1586 = vmul.f32 %v815, %v1584
  %1588 = vrot.lane.b32.xlu0 %v1112, 64
  %v1589 = vpop.permute.xlu0 %1588
  %v1591 = vmul.f32 %v842, %v1589
  %v1592 = vadd.f32 %v1586, %v1591
  %v1593 = vpack.c.bf16 %v1581, %v1581
  %v1594 = vpack.c.bf16 %v1592, %v1592
  %v1596 = vcombine.high %v1581, %v1581
  %v1598 = vunpack.c.l.s4 1966171168
  %v1599 = vunpack.c.0.s8 %v1598
  %v1600 = vlaneseq
  %v1601 = vshrl.u32 %v1600, 7
  %v1602 = vsub.s32 %v1599, %v1601
  %v1603 = vrot.slane %v1581, %v1602
  %v1605 = vunpack.c.l.s4 1966171168
  %v1606 = vunpack.c.0.s8 %v1605
  %v1607 = vlaneseq
  %v1608 = vshrl.u32 %v1607, 7
  %v1609 = vsub.s32 %v1606, %v1608
  %v1610 = vrot.slane %v1596, %v1609
  %v1611 = vcombine.high %v1603, %v1603
  %v1612 = vcombine.high %v1610, %v1610
  %v1614 = vunpack.c.l.s4 1966171168
  %v1615 = vunpack.c.0.s8 %v1614
  %v1616 = vlaneseq
  %v1617 = vshrl.u32 %v1616, 7
  %v1618 = vsub.s32 %v1615, %v1617
  %v1619 = vrot.slane %v1603, %v1618
  %v1621 = vunpack.c.l.s4 1966171168
  %v1622 = vunpack.c.0.s8 %v1621
  %v1623 = vlaneseq
  %v1624 = vshrl.u32 %v1623, 7
  %v1625 = vsub.s32 %v1622, %v1624
  %v1626 = vrot.slane %v1610, %v1625
  %v1628 = vunpack.c.l.s4 1966171168
  %v1629 = vunpack.c.0.s8 %v1628
  %v1630 = vlaneseq
  %v1631 = vshrl.u32 %v1630, 7
  %v1632 = vsub.s32 %v1629, %v1631
  %v1633 = vrot.slane %v1611, %v1632
  %v1635 = vunpack.c.l.s4 1966171168
  %v1636 = vunpack.c.0.s8 %v1635
  %v1637 = vlaneseq
  %v1638 = vshrl.u32 %v1637, 7
  %v1639 = vsub.s32 %v1636, %v1638
  %v1640 = vrot.slane %v1612, %v1639
  %v1641 = vcombine.high %v1619, %v1619
  %v1642 = vcombine.high %v1626, %v1626
  %v1643 = vcombine.high %v1633, %v1633
  %v1644 = vcombine.high %v1640, %v1640
  %v1645 = vlaneseq
  %v1646 = vshrl.u32 %v1645, 7
  %v1647 = vsub.s32 0, %v1646
  %v1648 = vrot.slane %v1619, %v1647
  %v1649 = vlaneseq
  %v1650 = vshrl.u32 %v1649, 7
  %v1651 = vsub.s32 0, %v1650
  %v1652 = vrot.slane %v1633, %v1651
  %v1653 = vlaneseq
  %v1654 = vshrl.u32 %v1653, 7
  %v1655 = vsub.s32 0, %v1654
  %v1656 = vrot.slane %v1641, %v1655
  %v1657 = vlaneseq
  %v1658 = vshrl.u32 %v1657, 7
  %v1659 = vsub.s32 0, %v1658
  %v1660 = vrot.slane %v1643, %v1659
  %v1661 = vlaneseq
  %v1662 = vshrl.u32 %v1661, 7
  %v1663 = vsub.s32 0, %v1662
  %v1664 = vrot.slane %v1626, %v1663
  %v1665 = vlaneseq
  %v1666 = vshrl.u32 %v1665, 7
  %v1667 = vsub.s32 0, %v1666
  %v1668 = vrot.slane %v1640, %v1667
  %v1669 = vlaneseq
  %v1670 = vshrl.u32 %v1669, 7
  %v1671 = vsub.s32 0, %v1670
  %v1672 = vrot.slane %v1642, %v1671
  %v1673 = vlaneseq
  %v1674 = vshrl.u32 %v1673, 7
  %v1675 = vsub.s32 0, %v1674
  %v1676 = vrot.slane %v1644, %v1675
  %v1685 = vmul.f32 %v1648, %v996
  %v1686 = vmul.f32 %v1652, %v1000
  %v1687 = vmul.f32 %v1656, %v1006
  %v1688 = vmul.f32 %v1660, %v1010
  %v1689 = vmul.f32 %v1664, %v1016
  %v1690 = vmul.f32 %v1668, %v1020
  %v1691 = vmul.f32 %v1672, %v1026
  %v1692 = vmul.f32 %v1676, %v1030
  %1701 = vrot.lane.b32.xlu0 %v1685, 64
  %v1702 = vpop.permute.xlu0 %1701
  %1703 = vrot.lane.b32.xlu0 %v1686, 64
  %v1704 = vpop.permute.xlu0 %1703
  %1705 = vrot.lane.b32.xlu0 %v1687, 64
  %v1706 = vpop.permute.xlu0 %1705
  %1707 = vrot.lane.b32.xlu0 %v1688, 64
  %v1708 = vpop.permute.xlu0 %1707
  %1709 = vrot.lane.b32.xlu0 %v1689, 64
  %v1710 = vpop.permute.xlu0 %1709
  %1711 = vrot.lane.b32.xlu0 %v1690, 64
  %v1712 = vpop.permute.xlu0 %1711
  %1713 = vrot.lane.b32.xlu0 %v1691, 64
  %v1714 = vpop.permute.xlu0 %1713
  %1715 = vrot.lane.b32.xlu0 %v1692, 64
  %v1716 = vpop.permute.xlu0 %1715
  %v1725 = vsel %vm1235, %v1702, 0.0
  %1726 = vadd.xlane.f32.xlu0 %v1725
  %v1727 = vpop.xlane.xlu0 %1726
  %v1728 = vsel %vm1235, %v1704, 0.0
  %1729 = vadd.xlane.f32.xlu0 %v1728
  %v1730 = vpop.xlane.xlu0 %1729
  %v1731 = vsel %vm1235, %v1706, 0.0
  %1732 = vadd.xlane.f32.xlu0 %v1731
  %v1733 = vpop.xlane.xlu0 %1732
  %v1734 = vsel %vm1235, %v1708, 0.0
  %1735 = vadd.xlane.f32.xlu0 %v1734
  %v1736 = vpop.xlane.xlu0 %1735
  %v1737 = vsel %vm1235, %v1710, 0.0
  %1738 = vadd.xlane.f32.xlu0 %v1737
  %v1739 = vpop.xlane.xlu0 %1738
  %v1740 = vsel %vm1235, %v1712, 0.0
  %1741 = vadd.xlane.f32.xlu0 %v1740
  %v1742 = vpop.xlane.xlu0 %1741
  %v1743 = vsel %vm1235, %v1714, 0.0
  %1744 = vadd.xlane.f32.xlu0 %v1743
  %v1745 = vpop.xlane.xlu0 %1744
  %v1746 = vsel %vm1235, %v1716, 0.0
  %1747 = vadd.xlane.f32.xlu0 %v1746
  %v1748 = vpop.xlane.xlu0 %1747
  %1750 = vrot.lane.b32.xlu0 %v1593, 64
  %v1751 = vpop.permute.xlu0 %1750
  %1753 = vrot.lane.b32.xlu0 %v1594, 64
  %v1754 = vpop.permute.xlu0 %1753
  %v1763 = vlaneseq
  %v1764 = vshrl.u32 %v1763, 7
  %v1765 = vsub.s32 %v1269, %v1764
  %v1766 = vrot.slane %v1727, %v1765
  %v1767 = vlaneseq
  %v1768 = vshrl.u32 %v1767, 7
  %v1769 = vsub.s32 %v1269, %v1768
  %v1770 = vrot.slane %v1730, %v1769
  %v1771 = vlaneseq
  %v1772 = vshrl.u32 %v1771, 7
  %v1773 = vsub.s32 %v1269, %v1772
  %v1774 = vrot.slane %v1733, %v1773
  %v1775 = vlaneseq
  %v1776 = vshrl.u32 %v1775, 7
  %v1777 = vsub.s32 %v1269, %v1776
  %v1778 = vrot.slane %v1736, %v1777
  %v1779 = vlaneseq
  %v1780 = vshrl.u32 %v1779, 7
  %v1781 = vsub.s32 %v1269, %v1780
  %v1782 = vrot.slane %v1739, %v1781
  %v1783 = vlaneseq
  %v1784 = vshrl.u32 %v1783, 7
  %v1785 = vsub.s32 %v1269, %v1784
  %v1786 = vrot.slane %v1742, %v1785
  %v1787 = vlaneseq
  %v1788 = vshrl.u32 %v1787, 7
  %v1789 = vsub.s32 %v1269, %v1788
  %v1790 = vrot.slane %v1745, %v1789
  %v1791 = vlaneseq
  %v1792 = vshrl.u32 %v1791, 7
  %v1793 = vsub.s32 %v1269, %v1792
  %v1794 = vrot.slane %v1748, %v1793
  %v1795 = vsel %vm1302, %v1770, %v1766
  %v1796 = vsel %vm1304, %v1774, %v1795
  %v1797 = vsel %vm1306, %v1778, %v1796
  %v1798 = vsel %vm1308, %v1782, %v1797
  %v1799 = vsel %vm1310, %v1786, %v1798
  %v1800 = vsel %vm1312, %v1790, %v1799
  %v1801 = vsel %vm1314, %v1794, %v1800
  %v1804 = vsel %vm1235, %v1751, 0
  %v1807 = vsel %vm1235, %v1754, 0
  %1809 = vmatprep.subr.bf16.mxu0 0
  %1810 = vmatpush1.bf16.xpose.msra.mxu0 %v1807
  %1811 = vmatprep.subr.bf16.mxu0 0
  %1812 = vmatpush1.bf16.xpose.msra.mxu0 0
  %1813 = vmatprep.subr.bf16.mxu0 0
  %1814 = vmatpush1.bf16.xpose.msra.mxu0 0
  %1815 = vmatprep.subr.bf16.mxu0 0
  %1816 = vmatpush1.bf16.xpose.msra.mxu0 0
  %1817 = vmatprep.subr.bf16.mxu0 0
  %1818 = vmatpush1.bf16.xpose.msra.mxu0 0
  %1819 = vmatprep.subr.bf16.mxu0 0
  %1820 = vmatpush1.bf16.xpose.msra.mxu0 0
  %1821 = vmatprep.subr.bf16.mxu0 0
  %1822 = vmatpush1.bf16.xpose.msra.mxu0 0
  %1823 = vmatprep.subr.bf16.mxu0 0
  %1824 = vmatpush1.bf16.xpose.msra.mxu0 0
  %1825 = vmatprep.subr.bf16.mxu0 0
  %1826 = vmatpush1.bf16.xpose.msra.mxu0 0
  %1827 = vmatprep.subr.bf16.mxu0 0
  %1828 = vmatpush1.bf16.xpose.msra.mxu0 0
  %1829 = vmatprep.subr.bf16.mxu0 0
  %1830 = vmatpush1.bf16.xpose.msra.mxu0 0
  %1831 = vmatprep.subr.bf16.mxu0 0
  %1832 = vmatpush1.bf16.xpose.msra.mxu0 0
  %1833 = vmatprep.subr.bf16.mxu0 0
  %1834 = vmatpush1.bf16.xpose.msra.mxu0 0
  %1835 = vmatprep.subr.bf16.mxu0 0
  %1836 = vmatpush1.bf16.xpose.msra.mxu0 0
  %1837 = vmatprep.subr.bf16.mxu0 0
  %1838 = vmatpush1.bf16.xpose.msra.mxu0 0
  %1839 = vmatprep.subr.bf16.mxu0 0
  %1840 = vmatpush1.bf16.xpose.msra.mxu0 0
  %1841 = vmatprep.mubr.bf16.mxu0 0
  %1842 = vmatmul.mubr.bf16.gmra.mrb[0].mxu0 %v1804
  %v1843 = vpop.f32.mrb[0].mxu0
  %v1844 = vadd.f32 %v1801, %v1843
  %v1845 = vpop.f32.mrb[0].mxu0
  %v1846 = vpop.f32.mrb[0].mxu0
  %v1847 = vpop.f32.mrb[0].mxu0
  %1848 = vdwg.mxu0
  %v1849 = vmul.f32 %v1844, 0.125
  %v1850 = vsel %vm1128, %v1849, -3.4028235e+38
  %v1851 = vsel %vm1365, %v1850, -inf
  %1852 = vmax.xlane.f32.xlu0 %v1851
  %v1853 = vpop.xlane.xlu0 %1852
  %v1854 = vsub.f32 %v1850, %v1853
  %v1855 = vmul.f32 %v1854, 1.442695
  %v1856 = vpow.pop %v1855
  %v1857 = vsel %vm1365, %v1856, 0.0
  %1858 = vadd.xlane.f32.xlu0 %v1857
  %v1859 = vpop.xlane.xlu0 %1858
  %v1860 = vrcp.pop %v1859
  %v1861 = vmul.f32 %v1856, %v1860
  %v1862 = vpack.c.bf16 %v1861, %v1861
  %v1863 = vlaneseq
  %v1864 = vshrl.u32 %v1863, 7
  %v1865 = vsub.s32 0, %v1864
  %v1866 = vrot.slane %v1861, %v1865
  %1868 = vbcast.lane.b32.xlu0 %v1866, 256
  %v1869 = vpop.permute.xlu0 %1868
  %v1870 = vlaneseq
  %v1871 = vshrl.u32 %v1870, 7
  %v1872 = vsub.s32 1, %v1871
  %v1873 = vrot.slane %v1861, %v1872
  %1875 = vbcast.lane.b32.xlu0 %v1873, 256
  %v1876 = vpop.permute.xlu0 %1875
  %v1877 = vlaneseq
  %v1878 = vshrl.u32 %v1877, 7
  %v1879 = vsub.s32 2, %v1878
  %v1880 = vrot.slane %v1861, %v1879
  %1882 = vbcast.lane.b32.xlu0 %v1880, 256
  %v1883 = vpop.permute.xlu0 %1882
  %v1884 = vlaneseq
  %v1885 = vshrl.u32 %v1884, 7
  %v1886 = vsub.s32 3, %v1885
  %v1887 = vrot.slane %v1861, %v1886
  %1889 = vbcast.lane.b32.xlu0 %v1887, 256
  %v1890 = vpop.permute.xlu0 %1889
  %v1891 = vlaneseq
  %v1892 = vshrl.u32 %v1891, 7
  %v1893 = vsub.s32 4, %v1892
  %v1894 = vrot.slane %v1861, %v1893
  %1896 = vbcast.lane.b32.xlu0 %v1894, 256
  %v1897 = vpop.permute.xlu0 %1896
  %v1898 = vlaneseq
  %v1899 = vshrl.u32 %v1898, 7
  %v1900 = vsub.s32 5, %v1899
  %v1901 = vrot.slane %v1861, %v1900
  %1903 = vbcast.lane.b32.xlu0 %v1901, 256
  %v1904 = vpop.permute.xlu0 %1903
  %v1905 = vlaneseq
  %v1906 = vshrl.u32 %v1905, 7
  %v1907 = vsub.s32 6, %v1906
  %v1908 = vrot.slane %v1861, %v1907
  %1910 = vbcast.lane.b32.xlu0 %v1908, 256
  %v1911 = vpop.permute.xlu0 %1910
  %v1912 = vlaneseq
  %v1913 = vshrl.u32 %v1912, 7
  %v1914 = vsub.s32 7, %v1913
  %v1915 = vrot.slane %v1861, %v1914
  %1917 = vbcast.lane.b32.xlu0 %v1915, 256
  %v1918 = vpop.permute.xlu0 %1917
  %v1919 = vmul.f32 %v1869, %v996
  %v1920 = vmul.f32 %v1876, %v1000
  %v1921 = vmul.f32 %v1883, %v1006
  %v1922 = vmul.f32 %v1890, %v1010
  %v1923 = vmul.f32 %v1897, %v1016
  %v1924 = vmul.f32 %v1904, %v1020
  %v1925 = vmul.f32 %v1911, %v1026
  %v1926 = vmul.f32 %v1918, %v1030
  %vm1927 = vcmask 1048064
  %v1928 = vsel %vm1927, %v1919, 0.0
  %v1929 = vrot.slane %v1928, 4
  %v1930 = vadd.f32 %v1928, %v1929
  %v1931 = vrot.slane %v1930, 2
  %v1932 = vadd.f32 %v1930, %v1931
  %v1933 = vrot.slane %v1932, 1
  %v1934 = vadd.f32 %v1932, %v1933
  %v1935 = vsel %vm1927, %v1920, 0.0
  %v1936 = vrot.slane %v1935, 4
  %v1937 = vadd.f32 %v1935, %v1936
  %v1938 = vrot.slane %v1937, 2
  %v1939 = vadd.f32 %v1937, %v1938
  %v1940 = vrot.slane %v1939, 1
  %v1941 = vadd.f32 %v1939, %v1940
  %v1942 = vsel %vm1927, %v1921, 0.0
  %v1943 = vrot.slane %v1942, 4
  %v1944 = vadd.f32 %v1942, %v1943
  %v1945 = vrot.slane %v1944, 2
  %v1946 = vadd.f32 %v1944, %v1945
  %v1947 = vrot.slane %v1946, 1
  %v1948 = vadd.f32 %v1946, %v1947
  %v1949 = vsel %vm1927, %v1922, 0.0
  %v1950 = vrot.slane %v1949, 4
  %v1951 = vadd.f32 %v1949, %v1950
  %v1952 = vrot.slane %v1951, 2
  %v1953 = vadd.f32 %v1951, %v1952
  %v1954 = vrot.slane %v1953, 1
  %v1955 = vadd.f32 %v1953, %v1954
  %v1956 = vsel %vm1927, %v1923, 0.0
  %v1957 = vrot.slane %v1956, 4
  %v1958 = vadd.f32 %v1956, %v1957
  %v1959 = vrot.slane %v1958, 2
  %v1960 = vadd.f32 %v1958, %v1959
  %v1961 = vrot.slane %v1960, 1
  %v1962 = vadd.f32 %v1960, %v1961
  %v1963 = vsel %vm1927, %v1924, 0.0
  %v1964 = vrot.slane %v1963, 4
  %v1965 = vadd.f32 %v1963, %v1964
  %v1966 = vrot.slane %v1965, 2
  %v1967 = vadd.f32 %v1965, %v1966
  %v1968 = vrot.slane %v1967, 1
  %v1969 = vadd.f32 %v1967, %v1968
  %v1970 = vsel %vm1927, %v1925, 0.0
  %v1971 = vrot.slane %v1970, 4
  %v1972 = vadd.f32 %v1970, %v1971
  %v1973 = vrot.slane %v1972, 2
  %v1974 = vadd.f32 %v1972, %v1973
  %v1975 = vrot.slane %v1974, 1
  %v1976 = vadd.f32 %v1974, %v1975
  %v1977 = vsel %vm1927, %v1926, 0.0
  %v1978 = vrot.slane %v1977, 4
  %v1979 = vadd.f32 %v1977, %v1978
  %v1980 = vrot.slane %v1979, 2
  %v1981 = vadd.f32 %v1979, %v1980
  %v1982 = vrot.slane %v1981, 1
  %v1983 = vadd.f32 %v1981, %v1982
  %1985 = vrot.lane.b32.xlu0 %v1378, 64
  %v1986 = vpop.permute.xlu0 %1985
  %v1995 = vsel %vm1302, %v1941, %v1934
  %v1996 = vsel %vm1304, %v1948, %v1995
  %v1997 = vsel %vm1306, %v1955, %v1996
  %v1998 = vsel %vm1308, %v1962, %v1997
  %v1999 = vsel %vm1310, %v1969, %v1998
  %v2000 = vsel %vm1312, %v1976, %v1999
  %v2001 = vsel %vm1314, %v1983, %v2000
  %2002 = vrot.lane.b32.xlu0 %v2001, 64
  %v2003 = vpop.permute.xlu0 %2002
  %v2006 = vsel %vm1365, %v1862, 0
  %v2009 = vsel %vm1518, %v1986, 0
  %2011 = vmatprep.subr.bf16.mxu0 0
  %2012 = vmatpush1.bf16.msra.mxu0 %v2009
  %2013 = vmatprep.subr.bf16.mxu0 0
  %2014 = vmatpush1.bf16.msra.mxu0 0
  %2015 = vmatprep.subr.bf16.mxu0 0
  %2016 = vmatpush1.bf16.msra.mxu0 0
  %2017 = vmatprep.subr.bf16.mxu0 0
  %2018 = vmatpush1.bf16.msra.mxu0 0
  %2019 = vmatprep.subr.bf16.mxu0 0
  %2020 = vmatpush1.bf16.msra.mxu0 0
  %2021 = vmatprep.subr.bf16.mxu0 0
  %2022 = vmatpush1.bf16.msra.mxu0 0
  %2023 = vmatprep.subr.bf16.mxu0 0
  %2024 = vmatpush1.bf16.msra.mxu0 0
  %2025 = vmatprep.subr.bf16.mxu0 0
  %2026 = vmatpush1.bf16.msra.mxu0 0
  %2027 = vmatprep.subr.bf16.mxu0 0
  %2028 = vmatpush1.bf16.msra.mxu0 0
  %2029 = vmatprep.subr.bf16.mxu0 0
  %2030 = vmatpush1.bf16.msra.mxu0 0
  %2031 = vmatprep.subr.bf16.mxu0 0
  %2032 = vmatpush1.bf16.msra.mxu0 0
  %2033 = vmatprep.subr.bf16.mxu0 0
  %2034 = vmatpush1.bf16.msra.mxu0 0
  %2035 = vmatprep.subr.bf16.mxu0 0
  %2036 = vmatpush1.bf16.msra.mxu0 0
  %2037 = vmatprep.subr.bf16.mxu0 0
  %2038 = vmatpush1.bf16.msra.mxu0 0
  %2039 = vmatprep.subr.bf16.mxu0 0
  %2040 = vmatpush1.bf16.msra.mxu0 0
  %2041 = vmatprep.subr.bf16.mxu0 0
  %2042 = vmatpush1.bf16.msra.mxu0 0
  %2043 = vmatprep.mubr.bf16.mxu0 0
  %2044 = vmatmul.mubr.bf16.gmra.mrb[0].mxu0 %v2006
  %v2045 = vpop.f32.mrb[0].mxu0
  %v2046 = vadd.f32 %v2003, %v2045
  %v2047 = vpop.f32.mrb[0].mxu0
  %v2048 = vpop.f32.mrb[0].mxu0
  %v2049 = vpop.f32.mrb[0].mxu0
  %2050 = vdwg.mxu0
  %v2051 = vpack.c.bf16 %v2046, %v2046
  %v2052 = vld [vmem:[%s9 + $0x20] sm:$0xf]
  %v2053 = vld [vmem:[%s9 + $0x24] sm:$0xf]
  %v2054 = vld [vmem:[%s9 + $0x28] sm:$0xf]
  %v2055 = vld [vmem:[%s9 + $0x2c] sm:$0xf]
  %v2056 = vld [vmem:[%s9 + $0x30] sm:$0xf]
  %v2057 = vld [vmem:[%s9 + $0x34] sm:$0xf]
  %v2058 = vld [vmem:[%s9 + $0x38] sm:$0xf]
  %v2059 = vld [vmem:[%s9 + $0x3c] sm:$0xf]
  %v2068 = vunpack.c.l.b16 %v2052
  %v2069 = vunpack.c.l.b16 %v2053
  %v2070 = vunpack.c.l.b16 %v2054
  %v2071 = vunpack.c.l.b16 %v2055
  %v2072 = vunpack.c.l.b16 %v2056
  %v2073 = vunpack.c.l.b16 %v2057
  %v2074 = vunpack.c.l.b16 %v2058
  %v2075 = vunpack.c.l.b16 %v2059
  %v2076 = vpack.c.b16 %v2069, %v2068
  %v2077 = vpack.c.b16 %v2071, %v2070
  %v2078 = vpack.c.b16 %v2073, %v2072
  %v2079 = vpack.c.b16 %v2075, %v2074
  %v2085 = vsel %vm1235, %v2051, 0
  %2087 = vmatprep.subr.bf16.mxu0 0
  %2088 = vmatpush1.bf16.msra.mxu0 %v2076
  %2089 = vmatprep.subr.bf16.mxu0 0
  %2090 = vmatpush1.bf16.msra.mxu0 %v2077
  %2091 = vmatprep.subr.bf16.mxu0 0
  %2092 = vmatpush1.bf16.msra.mxu0 %v2078
  %2093 = vmatprep.subr.bf16.mxu0 0
  %2094 = vmatpush1.bf16.msra.mxu0 %v2079
  %2095 = vmatprep.subr.bf16.mxu0 0
  %2096 = vmatpush1.bf16.msra.mxu0 0
  %2097 = vmatprep.subr.bf16.mxu0 0
  %2098 = vmatpush1.bf16.msra.mxu0 0
  %2099 = vmatprep.subr.bf16.mxu0 0
  %2100 = vmatpush1.bf16.msra.mxu0 0
  %2101 = vmatprep.subr.bf16.mxu0 0
  %2102 = vmatpush1.bf16.msra.mxu0 0
  %2103 = vmatprep.subr.bf16.mxu0 0
  %2104 = vmatpush1.bf16.msra.mxu0 0
  %2105 = vmatprep.subr.bf16.mxu0 0
  %2106 = vmatpush1.bf16.msra.mxu0 0
  %2107 = vmatprep.subr.bf16.mxu0 0
  %2108 = vmatpush1.bf16.msra.mxu0 0
  %2109 = vmatprep.subr.bf16.mxu0 0
  %2110 = vmatpush1.bf16.msra.mxu0 0
  %2111 = vmatprep.subr.bf16.mxu0 0
  %2112 = vmatpush1.bf16.msra.mxu0 0
  %2113 = vmatprep.subr.bf16.mxu0 0
  %2114 = vmatpush1.bf16.msra.mxu0 0
  %2115 = vmatprep.subr.bf16.mxu0 0
  %2116 = vmatpush1.bf16.msra.mxu0 0
  %2117 = vmatprep.subr.bf16.mxu0 0
  %2118 = vmatpush1.bf16.msra.mxu0 0
  %2119 = vmatprep.mubr.bf16.mxu0 0
  %2120 = vmatmul.mubr.bf16.gmra.mrb[0].mxu0 %v2085
  %v2121 = vpop.f32.mrb[0].mxu0
  %v2122 = vadd.f32 0.0, %v2121
  %v2123 = vpop.f32.mrb[0].mxu0
  %v2124 = vpop.f32.mrb[0].mxu0
  %v2125 = vpop.f32.mrb[0].mxu0
  %2126 = vdwg.mxu0
  %v2135 = vunpack.c.l.b16 %v1563
  %v2136 = vunpack.c.l.b16 %v1564
  %v2137 = vunpack.c.l.b16 %v1565
  %v2138 = vunpack.c.l.b16 %v1566
  %v2139 = vunpack.c.l.b16 %v1567
  %v2140 = vunpack.c.l.b16 %v1568
  %v2141 = vunpack.c.l.b16 %v1569
  %v2142 = vunpack.c.l.b16 %v1570
  %v2143 = vpack.c.b16 %v2136, %v2135
  %v2144 = vpack.c.b16 %v2138, %v2137
  %v2145 = vpack.c.b16 %v2140, %v2139
  %v2146 = vpack.c.b16 %v2142, %v2141
  %v2152 = vsel %vm1235, %v1562, 0
  %2154 = vmatprep.subr.bf16.mxu0 0
  %2155 = vmatpush1.bf16.msra.mxu0 %v2143
  %2156 = vmatprep.subr.bf16.mxu0 0
  %2157 = vmatpush1.bf16.msra.mxu0 %v2144
  %2158 = vmatprep.subr.bf16.mxu0 0
  %2159 = vmatpush1.bf16.msra.mxu0 %v2145
  %2160 = vmatprep.subr.bf16.mxu0 0
  %2161 = vmatpush1.bf16.msra.mxu0 %v2146
  %2162 = vmatprep.subr.bf16.mxu0 0
  %2163 = vmatpush1.bf16.msra.mxu0 0
  %2164 = vmatprep.subr.bf16.mxu0 0
  %2165 = vmatpush1.bf16.msra.mxu0 0
  %2166 = vmatprep.subr.bf16.mxu0 0
  %2167 = vmatpush1.bf16.msra.mxu0 0
  %2168 = vmatprep.subr.bf16.mxu0 0
  %2169 = vmatpush1.bf16.msra.mxu0 0
  %2170 = vmatprep.subr.bf16.mxu0 0
  %2171 = vmatpush1.bf16.msra.mxu0 0
  %2172 = vmatprep.subr.bf16.mxu0 0
  %2173 = vmatpush1.bf16.msra.mxu0 0
  %2174 = vmatprep.subr.bf16.mxu0 0
  %2175 = vmatpush1.bf16.msra.mxu0 0
  %2176 = vmatprep.subr.bf16.mxu0 0
  %2177 = vmatpush1.bf16.msra.mxu0 0
  %2178 = vmatprep.subr.bf16.mxu0 0
  %2179 = vmatpush1.bf16.msra.mxu0 0
  %2180 = vmatprep.subr.bf16.mxu0 0
  %2181 = vmatpush1.bf16.msra.mxu0 0
  %2182 = vmatprep.subr.bf16.mxu0 0
  %2183 = vmatpush1.bf16.msra.mxu0 0
  %2184 = vmatprep.subr.bf16.mxu0 0
  %2185 = vmatpush1.bf16.msra.mxu0 0
  %2186 = vmatprep.mubr.bf16.mxu0 0
  %2187 = vmatmul.mubr.bf16.gmra.mrb[0].mxu0 %v2152
  %v2188 = vpop.f32.mrb[0].mxu0
  %v2189 = vadd.f32 %v2122, %v2188
  %v2190 = vpop.f32.mrb[0].mxu0
  %v2191 = vpop.f32.mrb[0].mxu0
  %v2192 = vpop.f32.mrb[0].mxu0
  %2193 = vdwg.mxu0
  %v2194 = vmul.f32 %v762, %v1108
  %v2195 = vmul.f32 %v789, %v1110
  %v2196 = vadd.f32 %v2194, %v2195
  %v2197 = vmul.f32 %v816, %v1111
  %v2198 = vmul.f32 %v843, %v1112
  %v2199 = vadd.f32 %v2197, %v2198
  %v2200 = vpack.c.bf16 %v2196, %v2196
  %v2201 = vpack.c.bf16 %v2199, %v2199
  %v2203 = vcombine.high %v2196, %v2196
  %v2205 = vunpack.c.l.s4 1966171168
  %v2206 = vunpack.c.0.s8 %v2205
  %v2207 = vlaneseq
  %v2208 = vshrl.u32 %v2207, 7
  %v2209 = vsub.s32 %v2206, %v2208
  %v2210 = vrot.slane %v2196, %v2209
  %v2212 = vunpack.c.l.s4 1966171168
  %v2213 = vunpack.c.0.s8 %v2212
  %v2214 = vlaneseq
  %v2215 = vshrl.u32 %v2214, 7
  %v2216 = vsub.s32 %v2213, %v2215
  %v2217 = vrot.slane %v2203, %v2216
  %v2218 = vcombine.high %v2210, %v2210
  %v2219 = vcombine.high %v2217, %v2217
  %v2221 = vunpack.c.l.s4 1966171168
  %v2222 = vunpack.c.0.s8 %v2221
  %v2223 = vlaneseq
  %v2224 = vshrl.u32 %v2223, 7
  %v2225 = vsub.s32 %v2222, %v2224
  %v2226 = vrot.slane %v2210, %v2225
  %v2228 = vunpack.c.l.s4 1966171168
  %v2229 = vunpack.c.0.s8 %v2228
  %v2230 = vlaneseq
  %v2231 = vshrl.u32 %v2230, 7
  %v2232 = vsub.s32 %v2229, %v2231
  %v2233 = vrot.slane %v2217, %v2232
  %v2235 = vunpack.c.l.s4 1966171168
  %v2236 = vunpack.c.0.s8 %v2235
  %v2237 = vlaneseq
  %v2238 = vshrl.u32 %v2237, 7
  %v2239 = vsub.s32 %v2236, %v2238
  %v2240 = vrot.slane %v2218, %v2239
  %v2242 = vunpack.c.l.s4 1966171168
  %v2243 = vunpack.c.0.s8 %v2242
  %v2244 = vlaneseq
  %v2245 = vshrl.u32 %v2244, 7
  %v2246 = vsub.s32 %v2243, %v2245
  %v2247 = vrot.slane %v2219, %v2246
  %v2248 = vcombine.high %v2226, %v2226
  %v2249 = vcombine.high %v2233, %v2233
  %v2250 = vcombine.high %v2240, %v2240
  %v2251 = vcombine.high %v2247, %v2247
  %v2252 = vlaneseq
  %v2253 = vshrl.u32 %v2252, 7
  %v2254 = vsub.s32 0, %v2253
  %v2255 = vrot.slane %v2226, %v2254
  %v2256 = vlaneseq
  %v2257 = vshrl.u32 %v2256, 7
  %v2258 = vsub.s32 0, %v2257
  %v2259 = vrot.slane %v2240, %v2258
  %v2260 = vlaneseq
  %v2261 = vshrl.u32 %v2260, 7
  %v2262 = vsub.s32 0, %v2261
  %v2263 = vrot.slane %v2248, %v2262
  %v2264 = vlaneseq
  %v2265 = vshrl.u32 %v2264, 7
  %v2266 = vsub.s32 0, %v2265
  %v2267 = vrot.slane %v2250, %v2266
  %v2268 = vlaneseq
  %v2269 = vshrl.u32 %v2268, 7
  %v2270 = vsub.s32 0, %v2269
  %v2271 = vrot.slane %v2233, %v2270
  %v2272 = vlaneseq
  %v2273 = vshrl.u32 %v2272, 7
  %v2274 = vsub.s32 0, %v2273
  %v2275 = vrot.slane %v2247, %v2274
  %v2276 = vlaneseq
  %v2277 = vshrl.u32 %v2276, 7
  %v2278 = vsub.s32 0, %v2277
  %v2279 = vrot.slane %v2249, %v2278
  %v2280 = vlaneseq
  %v2281 = vshrl.u32 %v2280, 7
  %v2282 = vsub.s32 0, %v2281
  %v2283 = vrot.slane %v2251, %v2282
  %v2292 = vmul.f32 %v2255, %v998
  %v2293 = vmul.f32 %v2259, %v1002
  %v2294 = vmul.f32 %v2263, %v1008
  %v2295 = vmul.f32 %v2267, %v1012
  %v2296 = vmul.f32 %v2271, %v1018
  %v2297 = vmul.f32 %v2275, %v1022
  %v2298 = vmul.f32 %v2279, %v1028
  %v2299 = vmul.f32 %v2283, %v1032
  %v2300 = vsel %vm1235, %v2292, 0.0
  %2301 = vadd.xlane.f32.xlu0 %v2300
  %v2302 = vpop.xlane.xlu0 %2301
  %v2303 = vsel %vm1235, %v2293, 0.0
  %2304 = vadd.xlane.f32.xlu0 %v2303
  %v2305 = vpop.xlane.xlu0 %2304
  %v2306 = vsel %vm1235, %v2294, 0.0
  %2307 = vadd.xlane.f32.xlu0 %v2306
  %v2308 = vpop.xlane.xlu0 %2307
  %v2309 = vsel %vm1235, %v2295, 0.0
  %2310 = vadd.xlane.f32.xlu0 %v2309
  %v2311 = vpop.xlane.xlu0 %2310
  %v2312 = vsel %vm1235, %v2296, 0.0
  %2313 = vadd.xlane.f32.xlu0 %v2312
  %v2314 = vpop.xlane.xlu0 %2313
  %v2315 = vsel %vm1235, %v2297, 0.0
  %2316 = vadd.xlane.f32.xlu0 %v2315
  %v2317 = vpop.xlane.xlu0 %2316
  %v2318 = vsel %vm1235, %v2298, 0.0
  %2319 = vadd.xlane.f32.xlu0 %v2318
  %v2320 = vpop.xlane.xlu0 %2319
  %v2321 = vsel %vm1235, %v2299, 0.0
  %2322 = vadd.xlane.f32.xlu0 %v2321
  %v2323 = vpop.xlane.xlu0 %2322
  %v2332 = vlaneseq
  %v2333 = vshrl.u32 %v2332, 7
  %v2334 = vsub.s32 %v1269, %v2333
  %v2335 = vrot.slane %v2302, %v2334
  %v2336 = vlaneseq
  %v2337 = vshrl.u32 %v2336, 7
  %v2338 = vsub.s32 %v1269, %v2337
  %v2339 = vrot.slane %v2305, %v2338
  %v2340 = vlaneseq
  %v2341 = vshrl.u32 %v2340, 7
  %v2342 = vsub.s32 %v1269, %v2341
  %v2343 = vrot.slane %v2308, %v2342
  %v2344 = vlaneseq
  %v2345 = vshrl.u32 %v2344, 7
  %v2346 = vsub.s32 %v1269, %v2345
  %v2347 = vrot.slane %v2311, %v2346
  %v2348 = vlaneseq
  %v2349 = vshrl.u32 %v2348, 7
  %v2350 = vsub.s32 %v1269, %v2349
  %v2351 = vrot.slane %v2314, %v2350
  %v2352 = vlaneseq
  %v2353 = vshrl.u32 %v2352, 7
  %v2354 = vsub.s32 %v1269, %v2353
  %v2355 = vrot.slane %v2317, %v2354
  %v2356 = vlaneseq
  %v2357 = vshrl.u32 %v2356, 7
  %v2358 = vsub.s32 %v1269, %v2357
  %v2359 = vrot.slane %v2320, %v2358
  %v2360 = vlaneseq
  %v2361 = vshrl.u32 %v2360, 7
  %v2362 = vsub.s32 %v1269, %v2361
  %v2363 = vrot.slane %v2323, %v2362
  %v2364 = vsel %vm1302, %v2339, %v2335
  %v2365 = vsel %vm1304, %v2343, %v2364
  %v2366 = vsel %vm1306, %v2347, %v2365
  %v2367 = vsel %vm1308, %v2351, %v2366
  %v2368 = vsel %vm1310, %v2355, %v2367
  %v2369 = vsel %vm1312, %v2359, %v2368
  %v2370 = vsel %vm1314, %v2363, %v2369
  %v2373 = vsel %vm1235, %v2200, 0
  %v2376 = vsel %vm1235, %v2201, 0
  %2378 = vmatprep.subr.bf16.mxu0 0
  %2379 = vmatpush1.bf16.xpose.msra.mxu0 %v2376
  %2380 = vmatprep.subr.bf16.mxu0 0
  %2381 = vmatpush1.bf16.xpose.msra.mxu0 0
  %2382 = vmatprep.subr.bf16.mxu0 0
  %2383 = vmatpush1.bf16.xpose.msra.mxu0 0
  %2384 = vmatprep.subr.bf16.mxu0 0
  %2385 = vmatpush1.bf16.xpose.msra.mxu0 0
  %2386 = vmatprep.subr.bf16.mxu0 0
  %2387 = vmatpush1.bf16.xpose.msra.mxu0 0
  %2388 = vmatprep.subr.bf16.mxu0 0
  %2389 = vmatpush1.bf16.xpose.msra.mxu0 0
  %2390 = vmatprep.subr.bf16.mxu0 0
  %2391 = vmatpush1.bf16.xpose.msra.mxu0 0
  %2392 = vmatprep.subr.bf16.mxu0 0
  %2393 = vmatpush1.bf16.xpose.msra.mxu0 0
  %2394 = vmatprep.subr.bf16.mxu0 0
  %2395 = vmatpush1.bf16.xpose.msra.mxu0 0
  %2396 = vmatprep.subr.bf16.mxu0 0
  %2397 = vmatpush1.bf16.xpose.msra.mxu0 0
  %2398 = vmatprep.subr.bf16.mxu0 0
  %2399 = vmatpush1.bf16.xpose.msra.mxu0 0
  %2400 = vmatprep.subr.bf16.mxu0 0
  %2401 = vmatpush1.bf16.xpose.msra.mxu0 0
  %2402 = vmatprep.subr.bf16.mxu0 0
  %2403 = vmatpush1.bf16.xpose.msra.mxu0 0
  %2404 = vmatprep.subr.bf16.mxu0 0
  %2405 = vmatpush1.bf16.xpose.msra.mxu0 0
  %2406 = vmatprep.subr.bf16.mxu0 0
  %2407 = vmatpush1.bf16.xpose.msra.mxu0 0
  %2408 = vmatprep.subr.bf16.mxu0 0
  %2409 = vmatpush1.bf16.xpose.msra.mxu0 0
  %2410 = vmatprep.mubr.bf16.mxu0 0
  %2411 = vmatmul.mubr.bf16.gmra.mrb[0].mxu0 %v2373
  %v2412 = vpop.f32.mrb[0].mxu0
  %v2413 = vadd.f32 %v2370, %v2412
  %v2414 = vpop.f32.mrb[0].mxu0
  %v2415 = vpop.f32.mrb[0].mxu0
  %v2416 = vpop.f32.mrb[0].mxu0
  %2417 = vdwg.mxu0
  %v2418 = vmul.f32 %v2413, 0.125
  %v2419 = vsel %vm1128, %v2418, -3.4028235e+38
  %v2420 = vsel %vm1365, %v2419, -inf
  %2421 = vmax.xlane.f32.xlu0 %v2420
  %v2422 = vpop.xlane.xlu0 %2421
  %v2423 = vsub.f32 %v2419, %v2422
  %v2424 = vmul.f32 %v2423, 1.442695
  %v2425 = vpow.pop %v2424
  %v2426 = vsel %vm1365, %v2425, 0.0
  %2427 = vadd.xlane.f32.xlu0 %v2426
  %v2428 = vpop.xlane.xlu0 %2427
  %v2429 = vrcp.pop %v2428
  %v2430 = vmul.f32 %v2425, %v2429
  %v2431 = vpack.c.bf16 %v2430, %v2430
  %v2432 = vpack.c.bf16 %v870, %v870
  %v2433 = vlaneseq
  %v2434 = vshrl.u32 %v2433, 7
  %v2435 = vsub.s32 0, %v2434
  %v2436 = vrot.slane %v2430, %v2435
  %2438 = vbcast.lane.b32.xlu0 %v2436, 256
  %v2439 = vpop.permute.xlu0 %2438
  %v2440 = vlaneseq
  %v2441 = vshrl.u32 %v2440, 7
  %v2442 = vsub.s32 1, %v2441
  %v2443 = vrot.slane %v2430, %v2442
  %2445 = vbcast.lane.b32.xlu0 %v2443, 256
  %v2446 = vpop.permute.xlu0 %2445
  %v2447 = vlaneseq
  %v2448 = vshrl.u32 %v2447, 7
  %v2449 = vsub.s32 2, %v2448
  %v2450 = vrot.slane %v2430, %v2449
  %2452 = vbcast.lane.b32.xlu0 %v2450, 256
  %v2453 = vpop.permute.xlu0 %2452
  %v2454 = vlaneseq
  %v2455 = vshrl.u32 %v2454, 7
  %v2456 = vsub.s32 3, %v2455
  %v2457 = vrot.slane %v2430, %v2456
  %2459 = vbcast.lane.b32.xlu0 %v2457, 256
  %v2460 = vpop.permute.xlu0 %2459
  %v2461 = vlaneseq
  %v2462 = vshrl.u32 %v2461, 7
  %v2463 = vsub.s32 4, %v2462
  %v2464 = vrot.slane %v2430, %v2463
  %2466 = vbcast.lane.b32.xlu0 %v2464, 256
  %v2467 = vpop.permute.xlu0 %2466
  %v2468 = vlaneseq
  %v2469 = vshrl.u32 %v2468, 7
  %v2470 = vsub.s32 5, %v2469
  %v2471 = vrot.slane %v2430, %v2470
  %2473 = vbcast.lane.b32.xlu0 %v2471, 256
  %v2474 = vpop.permute.xlu0 %2473
  %v2475 = vlaneseq
  %v2476 = vshrl.u32 %v2475, 7
  %v2477 = vsub.s32 6, %v2476
  %v2478 = vrot.slane %v2430, %v2477
  %2480 = vbcast.lane.b32.xlu0 %v2478, 256
  %v2481 = vpop.permute.xlu0 %2480
  %v2482 = vlaneseq
  %v2483 = vshrl.u32 %v2482, 7
  %v2484 = vsub.s32 7, %v2483
  %v2485 = vrot.slane %v2430, %v2484
  %2487 = vbcast.lane.b32.xlu0 %v2485, 256
  %v2488 = vpop.permute.xlu0 %2487
  %v2489 = vmul.f32 %v2439, %v998
  %v2490 = vmul.f32 %v2446, %v1002
  %v2491 = vmul.f32 %v2453, %v1008
  %v2492 = vmul.f32 %v2460, %v1012
  %v2493 = vmul.f32 %v2467, %v1018
  %v2494 = vmul.f32 %v2474, %v1022
  %v2495 = vmul.f32 %v2481, %v1028
  %v2496 = vmul.f32 %v2488, %v1032
  %v2497 = vsel %vm1235, %v2489, 0.0
  %v2498 = vrot.slane %v2497, 4
  %v2499 = vadd.f32 %v2497, %v2498
  %v2500 = vrot.slane %v2499, 2
  %v2501 = vadd.f32 %v2499, %v2500
  %v2502 = vrot.slane %v2501, 1
  %v2503 = vadd.f32 %v2501, %v2502
  %v2504 = vsel %vm1235, %v2490, 0.0
  %v2505 = vrot.slane %v2504, 4
  %v2506 = vadd.f32 %v2504, %v2505
  %v2507 = vrot.slane %v2506, 2
  %v2508 = vadd.f32 %v2506, %v2507
  %v2509 = vrot.slane %v2508, 1
  %v2510 = vadd.f32 %v2508, %v2509
  %v2511 = vsel %vm1235, %v2491, 0.0
  %v2512 = vrot.slane %v2511, 4
  %v2513 = vadd.f32 %v2511, %v2512
  %v2514 = vrot.slane %v2513, 2
  %v2515 = vadd.f32 %v2513, %v2514
  %v2516 = vrot.slane %v2515, 1
  %v2517 = vadd.f32 %v2515, %v2516
  %v2518 = vsel %vm1235, %v2492, 0.0
  %v2519 = vrot.slane %v2518, 4
  %v2520 = vadd.f32 %v2518, %v2519
  %v2521 = vrot.slane %v2520, 2
  %v2522 = vadd.f32 %v2520, %v2521
  %v2523 = vrot.slane %v2522, 1
  %v2524 = vadd.f32 %v2522, %v2523
  %v2525 = vsel %vm1235, %v2493, 0.0
  %v2526 = vrot.slane %v2525, 4
  %v2527 = vadd.f32 %v2525, %v2526
  %v2528 = vrot.slane %v2527, 2
  %v2529 = vadd.f32 %v2527, %v2528
  %v2530 = vrot.slane %v2529, 1
  %v2531 = vadd.f32 %v2529, %v2530
  %v2532 = vsel %vm1235, %v2494, 0.0
  %v2533 = vrot.slane %v2532, 4
  %v2534 = vadd.f32 %v2532, %v2533
  %v2535 = vrot.slane %v2534, 2
  %v2536 = vadd.f32 %v2534, %v2535
  %v2537 = vrot.slane %v2536, 1
  %v2538 = vadd.f32 %v2536, %v2537
  %v2539 = vsel %vm1235, %v2495, 0.0
  %v2540 = vrot.slane %v2539, 4
  %v2541 = vadd.f32 %v2539, %v2540
  %v2542 = vrot.slane %v2541, 2
  %v2543 = vadd.f32 %v2541, %v2542
  %v2544 = vrot.slane %v2543, 1
  %v2545 = vadd.f32 %v2543, %v2544
  %v2546 = vsel %vm1235, %v2496, 0.0
  %v2547 = vrot.slane %v2546, 4
  %v2548 = vadd.f32 %v2546, %v2547
  %v2549 = vrot.slane %v2548, 2
  %v2550 = vadd.f32 %v2548, %v2549
  %v2551 = vrot.slane %v2550, 1
  %v2552 = vadd.f32 %v2550, %v2551
  %v2561 = vsel %vm1302, %v2510, %v2503
  %v2562 = vsel %vm1304, %v2517, %v2561
  %v2563 = vsel %vm1306, %v2524, %v2562
  %v2564 = vsel %vm1308, %v2531, %v2563
  %v2565 = vsel %vm1310, %v2538, %v2564
  %v2566 = vsel %vm1312, %v2545, %v2565
  %v2567 = vsel %vm1314, %v2552, %v2566
  %v2570 = vsel %vm1365, %v2431, 0
  %v2573 = vsel %vm1518, %v2432, 0
  %2575 = vmatprep.subr.bf16.mxu0 0
  %2576 = vmatpush1.bf16.msra.mxu0 %v2573
  %2577 = vmatprep.subr.bf16.mxu0 0
  %2578 = vmatpush1.bf16.msra.mxu0 0
  %2579 = vmatprep.subr.bf16.mxu0 0
  %2580 = vmatpush1.bf16.msra.mxu0 0
  %2581 = vmatprep.subr.bf16.mxu0 0
  %2582 = vmatpush1.bf16.msra.mxu0 0
  %2583 = vmatprep.subr.bf16.mxu0 0
  %2584 = vmatpush1.bf16.msra.mxu0 0
  %2585 = vmatprep.subr.bf16.mxu0 0
  %2586 = vmatpush1.bf16.msra.mxu0 0
  %2587 = vmatprep.subr.bf16.mxu0 0
  %2588 = vmatpush1.bf16.msra.mxu0 0
  %2589 = vmatprep.subr.bf16.mxu0 0
  %2590 = vmatpush1.bf16.msra.mxu0 0
  %2591 = vmatprep.subr.bf16.mxu0 0
  %2592 = vmatpush1.bf16.msra.mxu0 0
  %2593 = vmatprep.subr.bf16.mxu0 0
  %2594 = vmatpush1.bf16.msra.mxu0 0
  %2595 = vmatprep.subr.bf16.mxu0 0
  %2596 = vmatpush1.bf16.msra.mxu0 0
  %2597 = vmatprep.subr.bf16.mxu0 0
  %2598 = vmatpush1.bf16.msra.mxu0 0
  %2599 = vmatprep.subr.bf16.mxu0 0
  %2600 = vmatpush1.bf16.msra.mxu0 0
  %2601 = vmatprep.subr.bf16.mxu0 0
  %2602 = vmatpush1.bf16.msra.mxu0 0
  %2603 = vmatprep.subr.bf16.mxu0 0
  %2604 = vmatpush1.bf16.msra.mxu0 0
  %2605 = vmatprep.subr.bf16.mxu0 0
  %2606 = vmatpush1.bf16.msra.mxu0 0
  %2607 = vmatprep.mubr.bf16.mxu0 0
  %2608 = vmatmul.mubr.bf16.gmra.mrb[0].mxu0 %v2570
  %v2609 = vpop.f32.mrb[0].mxu0
  %v2610 = vadd.f32 %v2567, %v2609
  %v2611 = vpop.f32.mrb[0].mxu0
  %v2612 = vpop.f32.mrb[0].mxu0
  %v2613 = vpop.f32.mrb[0].mxu0
  %2614 = vdwg.mxu0
  %v2615 = vpack.c.bf16 %v2610, %v2610
  %v2616 = vld [vmem:[%s9 + $0x40] sm:$0xf]
  %v2617 = vld [vmem:[%s9 + $0x44] sm:$0xf]
  %v2618 = vld [vmem:[%s9 + $0x48] sm:$0xf]
  %v2619 = vld [vmem:[%s9 + $0x4c] sm:$0xf]
  %v2620 = vld [vmem:[%s9 + $0x50] sm:$0xf]
  %v2621 = vld [vmem:[%s9 + $0x54] sm:$0xf]
  %v2622 = vld [vmem:[%s9 + $0x58] sm:$0xf]
  %v2623 = vld [vmem:[%s9 + $0x5c] sm:$0xf]
  %v2632 = vunpack.c.l.b16 %v2616
  %v2633 = vunpack.c.l.b16 %v2617
  %v2634 = vunpack.c.l.b16 %v2618
  %v2635 = vunpack.c.l.b16 %v2619
  %v2636 = vunpack.c.l.b16 %v2620
  %v2637 = vunpack.c.l.b16 %v2621
  %v2638 = vunpack.c.l.b16 %v2622
  %v2639 = vunpack.c.l.b16 %v2623
  %v2640 = vpack.c.b16 %v2633, %v2632
  %v2641 = vpack.c.b16 %v2635, %v2634
  %v2642 = vpack.c.b16 %v2637, %v2636
  %v2643 = vpack.c.b16 %v2639, %v2638
  %v2649 = vsel %vm1235, %v2615, 0
  %2651 = vmatprep.subr.bf16.mxu0 0
  %2652 = vmatpush1.bf16.msra.mxu0 %v2640
  %2653 = vmatprep.subr.bf16.mxu0 0
  %2654 = vmatpush1.bf16.msra.mxu0 %v2641
  %2655 = vmatprep.subr.bf16.mxu0 0
  %2656 = vmatpush1.bf16.msra.mxu0 %v2642
  %2657 = vmatprep.subr.bf16.mxu0 0
  %2658 = vmatpush1.bf16.msra.mxu0 %v2643
  %2659 = vmatprep.subr.bf16.mxu0 0
  %2660 = vmatpush1.bf16.msra.mxu0 0
  %2661 = vmatprep.subr.bf16.mxu0 0
  %2662 = vmatpush1.bf16.msra.mxu0 0
  %2663 = vmatprep.subr.bf16.mxu0 0
  %2664 = vmatpush1.bf16.msra.mxu0 0
  %2665 = vmatprep.subr.bf16.mxu0 0
  %2666 = vmatpush1.bf16.msra.mxu0 0
  %2667 = vmatprep.subr.bf16.mxu0 0
  %2668 = vmatpush1.bf16.msra.mxu0 0
  %2669 = vmatprep.subr.bf16.mxu0 0
  %2670 = vmatpush1.bf16.msra.mxu0 0
  %2671 = vmatprep.subr.bf16.mxu0 0
  %2672 = vmatpush1.bf16.msra.mxu0 0
  %2673 = vmatprep.subr.bf16.mxu0 0
  %2674 = vmatpush1.bf16.msra.mxu0 0
  %2675 = vmatprep.subr.bf16.mxu0 0
  %2676 = vmatpush1.bf16.msra.mxu0 0
  %2677 = vmatprep.subr.bf16.mxu0 0
  %2678 = vmatpush1.bf16.msra.mxu0 0
  %2679 = vmatprep.subr.bf16.mxu0 0
  %2680 = vmatpush1.bf16.msra.mxu0 0
  %2681 = vmatprep.subr.bf16.mxu0 0
  %2682 = vmatpush1.bf16.msra.mxu0 0
  %2683 = vmatprep.mubr.bf16.mxu0 0
  %2684 = vmatmul.mubr.bf16.gmra.mrb[0].mxu0 %v2649
  %v2685 = vpop.f32.mrb[0].mxu0
  %v2686 = vadd.f32 0.0, %v2685
  %v2687 = vpop.f32.mrb[0].mxu0
  %v2688 = vpop.f32.mrb[0].mxu0
  %v2689 = vpop.f32.mrb[0].mxu0
  %2690 = vdwg.mxu0
  %v2691 = vadd.f32 %v2189, %v2686
  %v2692 = vmul.f32 %v762, %v1573
  %v2693 = vmul.f32 %v789, %v1578
  %v2694 = vadd.f32 %v2692, %v2693
  %v2695 = vmul.f32 %v816, %v1584
  %v2696 = vmul.f32 %v843, %v1589
  %v2697 = vadd.f32 %v2695, %v2696
  %v2698 = vpack.c.bf16 %v2694, %v2694
  %v2699 = vpack.c.bf16 %v2697, %v2697
  %v2701 = vcombine.high %v2694, %v2694
  %v2703 = vunpack.c.l.s4 1966171168
  %v2704 = vunpack.c.0.s8 %v2703
  %v2705 = vlaneseq
  %v2706 = vshrl.u32 %v2705, 7
  %v2707 = vsub.s32 %v2704, %v2706
  %v2708 = vrot.slane %v2694, %v2707
  %v2710 = vunpack.c.l.s4 1966171168
  %v2711 = vunpack.c.0.s8 %v2710
  %v2712 = vlaneseq
  %v2713 = vshrl.u32 %v2712, 7
  %v2714 = vsub.s32 %v2711, %v2713
  %v2715 = vrot.slane %v2701, %v2714
  %v2716 = vcombine.high %v2708, %v2708
  %v2717 = vcombine.high %v2715, %v2715
  %v2719 = vunpack.c.l.s4 1966171168
  %v2720 = vunpack.c.0.s8 %v2719
  %v2721 = vlaneseq
  %v2722 = vshrl.u32 %v2721, 7
  %v2723 = vsub.s32 %v2720, %v2722
  %v2724 = vrot.slane %v2708, %v2723
  %v2726 = vunpack.c.l.s4 1966171168
  %v2727 = vunpack.c.0.s8 %v2726
  %v2728 = vlaneseq
  %v2729 = vshrl.u32 %v2728, 7
  %v2730 = vsub.s32 %v2727, %v2729
  %v2731 = vrot.slane %v2715, %v2730
  %v2733 = vunpack.c.l.s4 1966171168
  %v2734 = vunpack.c.0.s8 %v2733
  %v2735 = vlaneseq
  %v2736 = vshrl.u32 %v2735, 7
  %v2737 = vsub.s32 %v2734, %v2736
  %v2738 = vrot.slane %v2716, %v2737
  %v2740 = vunpack.c.l.s4 1966171168
  %v2741 = vunpack.c.0.s8 %v2740
  %v2742 = vlaneseq
  %v2743 = vshrl.u32 %v2742, 7
  %v2744 = vsub.s32 %v2741, %v2743
  %v2745 = vrot.slane %v2717, %v2744
  %v2746 = vcombine.high %v2724, %v2724
  %v2747 = vcombine.high %v2731, %v2731
  %v2748 = vcombine.high %v2738, %v2738
  %v2749 = vcombine.high %v2745, %v2745
  %v2750 = vlaneseq
  %v2751 = vshrl.u32 %v2750, 7
  %v2752 = vsub.s32 0, %v2751
  %v2753 = vrot.slane %v2724, %v2752
  %v2754 = vlaneseq
  %v2755 = vshrl.u32 %v2754, 7
  %v2756 = vsub.s32 0, %v2755
  %v2757 = vrot.slane %v2738, %v2756
  %v2758 = vlaneseq
  %v2759 = vshrl.u32 %v2758, 7
  %v2760 = vsub.s32 0, %v2759
  %v2761 = vrot.slane %v2746, %v2760
  %v2762 = vlaneseq
  %v2763 = vshrl.u32 %v2762, 7
  %v2764 = vsub.s32 0, %v2763
  %v2765 = vrot.slane %v2748, %v2764
  %v2766 = vlaneseq
  %v2767 = vshrl.u32 %v2766, 7
  %v2768 = vsub.s32 0, %v2767
  %v2769 = vrot.slane %v2731, %v2768
  %v2770 = vlaneseq
  %v2771 = vshrl.u32 %v2770, 7
  %v2772 = vsub.s32 0, %v2771
  %v2773 = vrot.slane %v2745, %v2772
  %v2774 = vlaneseq
  %v2775 = vshrl.u32 %v2774, 7
  %v2776 = vsub.s32 0, %v2775
  %v2777 = vrot.slane %v2747, %v2776
  %v2778 = vlaneseq
  %v2779 = vshrl.u32 %v2778, 7
  %v2780 = vsub.s32 0, %v2779
  %v2781 = vrot.slane %v2749, %v2780
  %v2790 = vmul.f32 %v2753, %v998
  %v2791 = vmul.f32 %v2757, %v1002
  %v2792 = vmul.f32 %v2761, %v1008
  %v2793 = vmul.f32 %v2765, %v1012
  %v2794 = vmul.f32 %v2769, %v1018
  %v2795 = vmul.f32 %v2773, %v1022
  %v2796 = vmul.f32 %v2777, %v1028
  %v2797 = vmul.f32 %v2781, %v1032
  %2806 = vrot.lane.b32.xlu0 %v2790, 64
  %v2807 = vpop.permute.xlu0 %2806
  %2808 = vrot.lane.b32.xlu0 %v2791, 64
  %v2809 = vpop.permute.xlu0 %2808
  %2810 = vrot.lane.b32.xlu0 %v2792, 64
  %v2811 = vpop.permute.xlu0 %2810
  %2812 = vrot.lane.b32.xlu0 %v2793, 64
  %v2813 = vpop.permute.xlu0 %2812
  %2814 = vrot.lane.b32.xlu0 %v2794, 64
  %v2815 = vpop.permute.xlu0 %2814
  %2816 = vrot.lane.b32.xlu0 %v2795, 64
  %v2817 = vpop.permute.xlu0 %2816
  %2818 = vrot.lane.b32.xlu0 %v2796, 64
  %v2819 = vpop.permute.xlu0 %2818
  %2820 = vrot.lane.b32.xlu0 %v2797, 64
  %v2821 = vpop.permute.xlu0 %2820
  %v2830 = vsel %vm1235, %v2807, 0.0
  %2831 = vadd.xlane.f32.xlu0 %v2830
  %v2832 = vpop.xlane.xlu0 %2831
  %v2833 = vsel %vm1235, %v2809, 0.0
  %2834 = vadd.xlane.f32.xlu0 %v2833
  %v2835 = vpop.xlane.xlu0 %2834
  %v2836 = vsel %vm1235, %v2811, 0.0
  %2837 = vadd.xlane.f32.xlu0 %v2836
  %v2838 = vpop.xlane.xlu0 %2837
  %v2839 = vsel %vm1235, %v2813, 0.0
  %2840 = vadd.xlane.f32.xlu0 %v2839
  %v2841 = vpop.xlane.xlu0 %2840
  %v2842 = vsel %vm1235, %v2815, 0.0
  %2843 = vadd.xlane.f32.xlu0 %v2842
  %v2844 = vpop.xlane.xlu0 %2843
  %v2845 = vsel %vm1235, %v2817, 0.0
  %2846 = vadd.xlane.f32.xlu0 %v2845
  %v2847 = vpop.xlane.xlu0 %2846
  %v2848 = vsel %vm1235, %v2819, 0.0
  %2849 = vadd.xlane.f32.xlu0 %v2848
  %v2850 = vpop.xlane.xlu0 %2849
  %v2851 = vsel %vm1235, %v2821, 0.0
  %2852 = vadd.xlane.f32.xlu0 %v2851
  %v2853 = vpop.xlane.xlu0 %2852
  %2855 = vrot.lane.b32.xlu0 %v2698, 64
  %v2856 = vpop.permute.xlu0 %2855
  %2858 = vrot.lane.b32.xlu0 %v2699, 64
  %v2859 = vpop.permute.xlu0 %2858
  %v2868 = vlaneseq
  %v2869 = vshrl.u32 %v2868, 7
  %v2870 = vsub.s32 %v1269, %v2869
  %v2871 = vrot.slane %v2832, %v2870
  %v2872 = vlaneseq
  %v2873 = vshrl.u32 %v2872, 7
  %v2874 = vsub.s32 %v1269, %v2873
  %v2875 = vrot.slane %v2835, %v2874
  %v2876 = vlaneseq
  %v2877 = vshrl.u32 %v2876, 7
  %v2878 = vsub.s32 %v1269, %v2877
  %v2879 = vrot.slane %v2838, %v2878
  %v2880 = vlaneseq
  %v2881 = vshrl.u32 %v2880, 7
  %v2882 = vsub.s32 %v1269, %v2881
  %v2883 = vrot.slane %v2841, %v2882
  %v2884 = vlaneseq
  %v2885 = vshrl.u32 %v2884, 7
  %v2886 = vsub.s32 %v1269, %v2885
  %v2887 = vrot.slane %v2844, %v2886
  %v2888 = vlaneseq
  %v2889 = vshrl.u32 %v2888, 7
  %v2890 = vsub.s32 %v1269, %v2889
  %v2891 = vrot.slane %v2847, %v2890
  %v2892 = vlaneseq
  %v2893 = vshrl.u32 %v2892, 7
  %v2894 = vsub.s32 %v1269, %v2893
  %v2895 = vrot.slane %v2850, %v2894
  %v2896 = vlaneseq
  %v2897 = vshrl.u32 %v2896, 7
  %v2898 = vsub.s32 %v1269, %v2897
  %v2899 = vrot.slane %v2853, %v2898
  %v2900 = vsel %vm1302, %v2875, %v2871
  %v2901 = vsel %vm1304, %v2879, %v2900
  %v2902 = vsel %vm1306, %v2883, %v2901
  %v2903 = vsel %vm1308, %v2887, %v2902
  %v2904 = vsel %vm1310, %v2891, %v2903
  %v2905 = vsel %vm1312, %v2895, %v2904
  %v2906 = vsel %vm1314, %v2899, %v2905
  %v2909 = vsel %vm1235, %v2856, 0
  %v2912 = vsel %vm1235, %v2859, 0
  %2914 = vmatprep.subr.bf16.mxu0 0
  %2915 = vmatpush1.bf16.xpose.msra.mxu0 %v2912
  %2916 = vmatprep.subr.bf16.mxu0 0
  %2917 = vmatpush1.bf16.xpose.msra.mxu0 0
  %2918 = vmatprep.subr.bf16.mxu0 0
  %2919 = vmatpush1.bf16.xpose.msra.mxu0 0
  %2920 = vmatprep.subr.bf16.mxu0 0
  %2921 = vmatpush1.bf16.xpose.msra.mxu0 0
  %2922 = vmatprep.subr.bf16.mxu0 0
  %2923 = vmatpush1.bf16.xpose.msra.mxu0 0
  %2924 = vmatprep.subr.bf16.mxu0 0
  %2925 = vmatpush1.bf16.xpose.msra.mxu0 0
  %2926 = vmatprep.subr.bf16.mxu0 0
  %2927 = vmatpush1.bf16.xpose.msra.mxu0 0
  %2928 = vmatprep.subr.bf16.mxu0 0
  %2929 = vmatpush1.bf16.xpose.msra.mxu0 0
  %2930 = vmatprep.subr.bf16.mxu0 0
  %2931 = vmatpush1.bf16.xpose.msra.mxu0 0
  %2932 = vmatprep.subr.bf16.mxu0 0
  %2933 = vmatpush1.bf16.xpose.msra.mxu0 0
  %2934 = vmatprep.subr.bf16.mxu0 0
  %2935 = vmatpush1.bf16.xpose.msra.mxu0 0
  %2936 = vmatprep.subr.bf16.mxu0 0
  %2937 = vmatpush1.bf16.xpose.msra.mxu0 0
  %2938 = vmatprep.subr.bf16.mxu0 0
  %2939 = vmatpush1.bf16.xpose.msra.mxu0 0
  %2940 = vmatprep.subr.bf16.mxu0 0
  %2941 = vmatpush1.bf16.xpose.msra.mxu0 0
  %2942 = vmatprep.subr.bf16.mxu0 0
  %2943 = vmatpush1.bf16.xpose.msra.mxu0 0
  %2944 = vmatprep.subr.bf16.mxu0 0
  %2945 = vmatpush1.bf16.xpose.msra.mxu0 0
  %2946 = vmatprep.mubr.bf16.mxu0 0
  %2947 = vmatmul.mubr.bf16.gmra.mrb[0].mxu0 %v2909
  %v2948 = vpop.f32.mrb[0].mxu0
  %v2949 = vadd.f32 %v2906, %v2948
  %v2950 = vpop.f32.mrb[0].mxu0
  %v2951 = vpop.f32.mrb[0].mxu0
  %v2952 = vpop.f32.mrb[0].mxu0
  %2953 = vdwg.mxu0
  %v2954 = vmul.f32 %v2949, 0.125
  %v2955 = vsel %vm1128, %v2954, -3.4028235e+38
  %v2956 = vsel %vm1365, %v2955, -inf
  %2957 = vmax.xlane.f32.xlu0 %v2956
  %v2958 = vpop.xlane.xlu0 %2957
  %v2959 = vsub.f32 %v2955, %v2958
  %v2960 = vmul.f32 %v2959, 1.442695
  %v2961 = vpow.pop %v2960
  %v2962 = vsel %vm1365, %v2961, 0.0
  %2963 = vadd.xlane.f32.xlu0 %v2962
  %v2964 = vpop.xlane.xlu0 %2963
  %v2965 = vrcp.pop %v2964
  %v2966 = vmul.f32 %v2961, %v2965
  %v2967 = vpack.c.bf16 %v2966, %v2966
  %v2968 = vlaneseq
  %v2969 = vshrl.u32 %v2968, 7
  %v2970 = vsub.s32 0, %v2969
  %v2971 = vrot.slane %v2966, %v2970
  %2973 = vbcast.lane.b32.xlu0 %v2971, 256
  %v2974 = vpop.permute.xlu0 %2973
  %v2975 = vlaneseq
  %v2976 = vshrl.u32 %v2975, 7
  %v2977 = vsub.s32 1, %v2976
  %v2978 = vrot.slane %v2966, %v2977
  %2980 = vbcast.lane.b32.xlu0 %v2978, 256
  %v2981 = vpop.permute.xlu0 %2980
  %v2982 = vlaneseq
  %v2983 = vshrl.u32 %v2982, 7
  %v2984 = vsub.s32 2, %v2983
  %v2985 = vrot.slane %v2966, %v2984
  %2987 = vbcast.lane.b32.xlu0 %v2985, 256
  %v2988 = vpop.permute.xlu0 %2987
  %v2989 = vlaneseq
  %v2990 = vshrl.u32 %v2989, 7
  %v2991 = vsub.s32 3, %v2990
  %v2992 = vrot.slane %v2966, %v2991
  %2994 = vbcast.lane.b32.xlu0 %v2992, 256
  %v2995 = vpop.permute.xlu0 %2994
  %v2996 = vlaneseq
  %v2997 = vshrl.u32 %v2996, 7
  %v2998 = vsub.s32 4, %v2997
  %v2999 = vrot.slane %v2966, %v2998
  %3001 = vbcast.lane.b32.xlu0 %v2999, 256
  %v3002 = vpop.permute.xlu0 %3001
  %v3003 = vlaneseq
  %v3004 = vshrl.u32 %v3003, 7
  %v3005 = vsub.s32 5, %v3004
  %v3006 = vrot.slane %v2966, %v3005
  %3008 = vbcast.lane.b32.xlu0 %v3006, 256
  %v3009 = vpop.permute.xlu0 %3008
  %v3010 = vlaneseq
  %v3011 = vshrl.u32 %v3010, 7
  %v3012 = vsub.s32 6, %v3011
  %v3013 = vrot.slane %v2966, %v3012
  %3015 = vbcast.lane.b32.xlu0 %v3013, 256
  %v3016 = vpop.permute.xlu0 %3015
  %v3017 = vlaneseq
  %v3018 = vshrl.u32 %v3017, 7
  %v3019 = vsub.s32 7, %v3018
  %v3020 = vrot.slane %v2966, %v3019
  %3022 = vbcast.lane.b32.xlu0 %v3020, 256
  %v3023 = vpop.permute.xlu0 %3022
  %v3024 = vmul.f32 %v2974, %v998
  %v3025 = vmul.f32 %v2981, %v1002
  %v3026 = vmul.f32 %v2988, %v1008
  %v3027 = vmul.f32 %v2995, %v1012
  %v3028 = vmul.f32 %v3002, %v1018
  %v3029 = vmul.f32 %v3009, %v1022
  %v3030 = vmul.f32 %v3016, %v1028
  %v3031 = vmul.f32 %v3023, %v1032
  %v3032 = vsel %vm1927, %v3024, 0.0
  %v3033 = vrot.slane %v3032, 4
  %v3034 = vadd.f32 %v3032, %v3033
  %v3035 = vrot.slane %v3034, 2
  %v3036 = vadd.f32 %v3034, %v3035
  %v3037 = vrot.slane %v3036, 1
  %v3038 = vadd.f32 %v3036, %v3037
  %v3039 = vsel %vm1927, %v3025, 0.0
  %v3040 = vrot.slane %v3039, 4
  %v3041 = vadd.f32 %v3039, %v3040
  %v3042 = vrot.slane %v3041, 2
  %v3043 = vadd.f32 %v3041, %v3042
  %v3044 = vrot.slane %v3043, 1
  %v3045 = vadd.f32 %v3043, %v3044
  %v3046 = vsel %vm1927, %v3026, 0.0
  %v3047 = vrot.slane %v3046, 4
  %v3048 = vadd.f32 %v3046, %v3047
  %v3049 = vrot.slane %v3048, 2
  %v3050 = vadd.f32 %v3048, %v3049
  %v3051 = vrot.slane %v3050, 1
  %v3052 = vadd.f32 %v3050, %v3051
  %v3053 = vsel %vm1927, %v3027, 0.0
  %v3054 = vrot.slane %v3053, 4
  %v3055 = vadd.f32 %v3053, %v3054
  %v3056 = vrot.slane %v3055, 2
  %v3057 = vadd.f32 %v3055, %v3056
  %v3058 = vrot.slane %v3057, 1
  %v3059 = vadd.f32 %v3057, %v3058
  %v3060 = vsel %vm1927, %v3028, 0.0
  %v3061 = vrot.slane %v3060, 4
  %v3062 = vadd.f32 %v3060, %v3061
  %v3063 = vrot.slane %v3062, 2
  %v3064 = vadd.f32 %v3062, %v3063
  %v3065 = vrot.slane %v3064, 1
  %v3066 = vadd.f32 %v3064, %v3065
  %v3067 = vsel %vm1927, %v3029, 0.0
  %v3068 = vrot.slane %v3067, 4
  %v3069 = vadd.f32 %v3067, %v3068
  %v3070 = vrot.slane %v3069, 2
  %v3071 = vadd.f32 %v3069, %v3070
  %v3072 = vrot.slane %v3071, 1
  %v3073 = vadd.f32 %v3071, %v3072
  %v3074 = vsel %vm1927, %v3030, 0.0
  %v3075 = vrot.slane %v3074, 4
  %v3076 = vadd.f32 %v3074, %v3075
  %v3077 = vrot.slane %v3076, 2
  %v3078 = vadd.f32 %v3076, %v3077
  %v3079 = vrot.slane %v3078, 1
  %v3080 = vadd.f32 %v3078, %v3079
  %v3081 = vsel %vm1927, %v3031, 0.0
  %v3082 = vrot.slane %v3081, 4
  %v3083 = vadd.f32 %v3081, %v3082
  %v3084 = vrot.slane %v3083, 2
  %v3085 = vadd.f32 %v3083, %v3084
  %v3086 = vrot.slane %v3085, 1
  %v3087 = vadd.f32 %v3085, %v3086
  %3089 = vrot.lane.b32.xlu0 %v2432, 64
  %v3090 = vpop.permute.xlu0 %3089
  %v3099 = vsel %vm1302, %v3045, %v3038
  %v3100 = vsel %vm1304, %v3052, %v3099
  %v3101 = vsel %vm1306, %v3059, %v3100
  %v3102 = vsel %vm1308, %v3066, %v3101
  %v3103 = vsel %vm1310, %v3073, %v3102
  %v3104 = vsel %vm1312, %v3080, %v3103
  %v3105 = vsel %vm1314, %v3087, %v3104
  %3106 = vrot.lane.b32.xlu0 %v3105, 64
  %v3107 = vpop.permute.xlu0 %3106
  %v3110 = vsel %vm1365, %v2967, 0
  %v3113 = vsel %vm1518, %v3090, 0
  %3115 = vmatprep.subr.bf16.mxu0 0
  %3116 = vmatpush1.bf16.msra.mxu0 %v3113
  %3117 = vmatprep.subr.bf16.mxu0 0
  %3118 = vmatpush1.bf16.msra.mxu0 0
  %3119 = vmatprep.subr.bf16.mxu0 0
  %3120 = vmatpush1.bf16.msra.mxu0 0
  %3121 = vmatprep.subr.bf16.mxu0 0
  %3122 = vmatpush1.bf16.msra.mxu0 0
  %3123 = vmatprep.subr.bf16.mxu0 0
  %3124 = vmatpush1.bf16.msra.mxu0 0
  %3125 = vmatprep.subr.bf16.mxu0 0
  %3126 = vmatpush1.bf16.msra.mxu0 0
  %3127 = vmatprep.subr.bf16.mxu0 0
  %3128 = vmatpush1.bf16.msra.mxu0 0
  %3129 = vmatprep.subr.bf16.mxu0 0
  %3130 = vmatpush1.bf16.msra.mxu0 0
  %3131 = vmatprep.subr.bf16.mxu0 0
  %3132 = vmatpush1.bf16.msra.mxu0 0
  %3133 = vmatprep.subr.bf16.mxu0 0
  %3134 = vmatpush1.bf16.msra.mxu0 0
  %3135 = vmatprep.subr.bf16.mxu0 0
  %3136 = vmatpush1.bf16.msra.mxu0 0
  %3137 = vmatprep.subr.bf16.mxu0 0
  %3138 = vmatpush1.bf16.msra.mxu0 0
  %3139 = vmatprep.subr.bf16.mxu0 0
  %3140 = vmatpush1.bf16.msra.mxu0 0
  %3141 = vmatprep.subr.bf16.mxu0 0
  %3142 = vmatpush1.bf16.msra.mxu0 0
  %3143 = vmatprep.subr.bf16.mxu0 0
  %3144 = vmatpush1.bf16.msra.mxu0 0
  %3145 = vmatprep.subr.bf16.mxu0 0
  %3146 = vmatpush1.bf16.msra.mxu0 0
  %3147 = vmatprep.mubr.bf16.mxu0 0
  %3148 = vmatmul.mubr.bf16.gmra.mrb[0].mxu0 %v3110
  %v3149 = vpop.f32.mrb[0].mxu0
  %v3150 = vadd.f32 %v3107, %v3149
  %v3151 = vpop.f32.mrb[0].mxu0
  %v3152 = vpop.f32.mrb[0].mxu0
  %v3153 = vpop.f32.mrb[0].mxu0
  %3154 = vdwg.mxu0
  %v3155 = vpack.c.bf16 %v3150, %v3150
  %v3156 = vld [vmem:[%s9 + $0x60] sm:$0xf]
  %v3157 = vld [vmem:[%s9 + $0x64] sm:$0xf]
  %v3158 = vld [vmem:[%s9 + $0x68] sm:$0xf]
  %v3159 = vld [vmem:[%s9 + $0x6c] sm:$0xf]
  %v3160 = vld [vmem:[%s9 + $0x70] sm:$0xf]
  %v3161 = vld [vmem:[%s9 + $0x74] sm:$0xf]
  %v3162 = vld [vmem:[%s9 + $0x78] sm:$0xf]
  %v3163 = vld [vmem:[%s9 + $0x7c] sm:$0xf]
  %v3172 = vunpack.c.l.b16 %v3156
  %v3173 = vunpack.c.l.b16 %v3157
  %v3174 = vunpack.c.l.b16 %v3158
  %v3175 = vunpack.c.l.b16 %v3159
  %v3176 = vunpack.c.l.b16 %v3160
  %v3177 = vunpack.c.l.b16 %v3161
  %v3178 = vunpack.c.l.b16 %v3162
  %v3179 = vunpack.c.l.b16 %v3163
  %v3180 = vpack.c.b16 %v3173, %v3172
  %v3181 = vpack.c.b16 %v3175, %v3174
  %v3182 = vpack.c.b16 %v3177, %v3176
  %v3183 = vpack.c.b16 %v3179, %v3178
  %v3189 = vsel %vm1235, %v3155, 0
  %3191 = vmatprep.subr.bf16.mxu0 0
  %3192 = vmatpush1.bf16.msra.mxu0 %v3180
  %3193 = vmatprep.subr.bf16.mxu0 0
  %3194 = vmatpush1.bf16.msra.mxu0 %v3181
  %3195 = vmatprep.subr.bf16.mxu0 0
  %3196 = vmatpush1.bf16.msra.mxu0 %v3182
  %3197 = vmatprep.subr.bf16.mxu0 0
  %3198 = vmatpush1.bf16.msra.mxu0 %v3183
  %3199 = vmatprep.subr.bf16.mxu0 0
  %3200 = vmatpush1.bf16.msra.mxu0 0
  %3201 = vmatprep.subr.bf16.mxu0 0
  %3202 = vmatpush1.bf16.msra.mxu0 0
  %3203 = vmatprep.subr.bf16.mxu0 0
  %3204 = vmatpush1.bf16.msra.mxu0 0
  %3205 = vmatprep.subr.bf16.mxu0 0
  %3206 = vmatpush1.bf16.msra.mxu0 0
  %3207 = vmatprep.subr.bf16.mxu0 0
  %3208 = vmatpush1.bf16.msra.mxu0 0
  %3209 = vmatprep.subr.bf16.mxu0 0
  %3210 = vmatpush1.bf16.msra.mxu0 0
  %3211 = vmatprep.subr.bf16.mxu0 0
  %3212 = vmatpush1.bf16.msra.mxu0 0
  %3213 = vmatprep.subr.bf16.mxu0 0
  %3214 = vmatpush1.bf16.msra.mxu0 0
  %3215 = vmatprep.subr.bf16.mxu0 0
  %3216 = vmatpush1.bf16.msra.mxu0 0
  %3217 = vmatprep.subr.bf16.mxu0 0
  %3218 = vmatpush1.bf16.msra.mxu0 0
  %3219 = vmatprep.subr.bf16.mxu0 0
  %3220 = vmatpush1.bf16.msra.mxu0 0
  %3221 = vmatprep.subr.bf16.mxu0 0
  %3222 = vmatpush1.bf16.msra.mxu0 0
  %3223 = vmatprep.mubr.bf16.mxu0 0
  %3224 = vmatmul.mubr.bf16.gmra.mrb[0].mxu0 %v3189
  %v3225 = vpop.f32.mrb[0].mxu0
  %v3226 = vadd.f32 0.0, %v3225
  %v3227 = vpop.f32.mrb[0].mxu0
  %v3228 = vpop.f32.mrb[0].mxu0
  %v3229 = vpop.f32.mrb[0].mxu0
  %3230 = vdwg.mxu0
  %v3231 = vadd.f32 %v2691, %v3226
  %v3232 = vmul.f32 %v763, %v1108
  %v3233 = vmul.f32 %v790, %v1110
  %v3234 = vadd.f32 %v3232, %v3233
  %v3235 = vmul.f32 %v817, %v1111
  %v3236 = vmul.f32 %v844, %v1112
  %v3237 = vadd.f32 %v3235, %v3236
  %v3238 = vpack.c.bf16 %v3234, %v3234
  %v3239 = vpack.c.bf16 %v3237, %v3237
  %v3241 = vcombine.high %v3234, %v3234
  %v3243 = vunpack.c.l.s4 1966171168
  %v3244 = vunpack.c.0.s8 %v3243
  %v3245 = vlaneseq
  %v3246 = vshrl.u32 %v3245, 7
  %v3247 = vsub.s32 %v3244, %v3246
  %v3248 = vrot.slane %v3234, %v3247
  %v3250 = vunpack.c.l.s4 1966171168
  %v3251 = vunpack.c.0.s8 %v3250
  %v3252 = vlaneseq
  %v3253 = vshrl.u32 %v3252, 7
  %v3254 = vsub.s32 %v3251, %v3253
  %v3255 = vrot.slane %v3241, %v3254
  %v3256 = vcombine.high %v3248, %v3248
  %v3257 = vcombine.high %v3255, %v3255
  %v3259 = vunpack.c.l.s4 1966171168
  %v3260 = vunpack.c.0.s8 %v3259
  %v3261 = vlaneseq
  %v3262 = vshrl.u32 %v3261, 7
  %v3263 = vsub.s32 %v3260, %v3262
  %v3264 = vrot.slane %v3248, %v3263
  %v3266 = vunpack.c.l.s4 1966171168
  %v3267 = vunpack.c.0.s8 %v3266
  %v3268 = vlaneseq
  %v3269 = vshrl.u32 %v3268, 7
  %v3270 = vsub.s32 %v3267, %v3269
  %v3271 = vrot.slane %v3255, %v3270
  %v3273 = vunpack.c.l.s4 1966171168
  %v3274 = vunpack.c.0.s8 %v3273
  %v3275 = vlaneseq
  %v3276 = vshrl.u32 %v3275, 7
  %v3277 = vsub.s32 %v3274, %v3276
  %v3278 = vrot.slane %v3256, %v3277
  %v3280 = vunpack.c.l.s4 1966171168
  %v3281 = vunpack.c.0.s8 %v3280
  %v3282 = vlaneseq
  %v3283 = vshrl.u32 %v3282, 7
  %v3284 = vsub.s32 %v3281, %v3283
  %v3285 = vrot.slane %v3257, %v3284
  %v3286 = vcombine.high %v3264, %v3264
  %v3287 = vcombine.high %v3271, %v3271
  %v3288 = vcombine.high %v3278, %v3278
  %v3289 = vcombine.high %v3285, %v3285
  %v3290 = vlaneseq
  %v3291 = vshrl.u32 %v3290, 7
  %v3292 = vsub.s32 0, %v3291
  %v3293 = vrot.slane %v3264, %v3292
  %v3294 = vlaneseq
  %v3295 = vshrl.u32 %v3294, 7
  %v3296 = vsub.s32 0, %v3295
  %v3297 = vrot.slane %v3278, %v3296
  %v3298 = vlaneseq
  %v3299 = vshrl.u32 %v3298, 7
  %v3300 = vsub.s32 0, %v3299
  %v3301 = vrot.slane %v3286, %v3300
  %v3302 = vlaneseq
  %v3303 = vshrl.u32 %v3302, 7
  %v3304 = vsub.s32 0, %v3303
  %v3305 = vrot.slane %v3288, %v3304
  %v3306 = vlaneseq
  %v3307 = vshrl.u32 %v3306, 7
  %v3308 = vsub.s32 0, %v3307
  %v3309 = vrot.slane %v3271, %v3308
  %v3310 = vlaneseq
  %v3311 = vshrl.u32 %v3310, 7
  %v3312 = vsub.s32 0, %v3311
  %v3313 = vrot.slane %v3285, %v3312
  %v3314 = vlaneseq
  %v3315 = vshrl.u32 %v3314, 7
  %v3316 = vsub.s32 0, %v3315
  %v3317 = vrot.slane %v3287, %v3316
  %v3318 = vlaneseq
  %v3319 = vshrl.u32 %v3318, 7
  %v3320 = vsub.s32 0, %v3319
  %v3321 = vrot.slane %v3289, %v3320
  %v3330 = vmul.f32 %v3293, %v1069
  %v3331 = vmul.f32 %v3297, %v1073
  %v3332 = vmul.f32 %v3301, %v1079
  %v3333 = vmul.f32 %v3305, %v1083
  %v3334 = vmul.f32 %v3309, %v1089
  %v3335 = vmul.f32 %v3313, %v1093
  %v3336 = vmul.f32 %v3317, %v1099
  %v3337 = vmul.f32 %v3321, %v1103
  %v3338 = vsel %vm1235, %v3330, 0.0
  %3339 = vadd.xlane.f32.xlu0 %v3338
  %v3340 = vpop.xlane.xlu0 %3339
  %v3341 = vsel %vm1235, %v3331, 0.0
  %3342 = vadd.xlane.f32.xlu0 %v3341
  %v3343 = vpop.xlane.xlu0 %3342
  %v3344 = vsel %vm1235, %v3332, 0.0
  %3345 = vadd.xlane.f32.xlu0 %v3344
  %v3346 = vpop.xlane.xlu0 %3345
  %v3347 = vsel %vm1235, %v3333, 0.0
  %3348 = vadd.xlane.f32.xlu0 %v3347
  %v3349 = vpop.xlane.xlu0 %3348
  %v3350 = vsel %vm1235, %v3334, 0.0
  %3351 = vadd.xlane.f32.xlu0 %v3350
  %v3352 = vpop.xlane.xlu0 %3351
  %v3353 = vsel %vm1235, %v3335, 0.0
  %3354 = vadd.xlane.f32.xlu0 %v3353
  %v3355 = vpop.xlane.xlu0 %3354
  %v3356 = vsel %vm1235, %v3336, 0.0
  %3357 = vadd.xlane.f32.xlu0 %v3356
  %v3358 = vpop.xlane.xlu0 %3357
  %v3359 = vsel %vm1235, %v3337, 0.0
  %3360 = vadd.xlane.f32.xlu0 %v3359
  %v3361 = vpop.xlane.xlu0 %3360
  %v3370 = vlaneseq
  %v3371 = vshrl.u32 %v3370, 7
  %v3372 = vsub.s32 %v1269, %v3371
  %v3373 = vrot.slane %v3340, %v3372
  %v3374 = vlaneseq
  %v3375 = vshrl.u32 %v3374, 7
  %v3376 = vsub.s32 %v1269, %v3375
  %v3377 = vrot.slane %v3343, %v3376
  %v3378 = vlaneseq
  %v3379 = vshrl.u32 %v3378, 7
  %v3380 = vsub.s32 %v1269, %v3379
  %v3381 = vrot.slane %v3346, %v3380
  %v3382 = vlaneseq
  %v3383 = vshrl.u32 %v3382, 7
  %v3384 = vsub.s32 %v1269, %v3383
  %v3385 = vrot.slane %v3349, %v3384
  %v3386 = vlaneseq
  %v3387 = vshrl.u32 %v3386, 7
  %v3388 = vsub.s32 %v1269, %v3387
  %v3389 = vrot.slane %v3352, %v3388
  %v3390 = vlaneseq
  %v3391 = vshrl.u32 %v3390, 7
  %v3392 = vsub.s32 %v1269, %v3391
  %v3393 = vrot.slane %v3355, %v3392
  %v3394 = vlaneseq
  %v3395 = vshrl.u32 %v3394, 7
  %v3396 = vsub.s32 %v1269, %v3395
  %v3397 = vrot.slane %v3358, %v3396
  %v3398 = vlaneseq
  %v3399 = vshrl.u32 %v3398, 7
  %v3400 = vsub.s32 %v1269, %v3399
  %v3401 = vrot.slane %v3361, %v3400
  %v3402 = vsel %vm1302, %v3377, %v3373
  %v3403 = vsel %vm1304, %v3381, %v3402
  %v3404 = vsel %vm1306, %v3385, %v3403
  %v3405 = vsel %vm1308, %v3389, %v3404
  %v3406 = vsel %vm1310, %v3393, %v3405
  %v3407 = vsel %vm1312, %v3397, %v3406
  %v3408 = vsel %vm1314, %v3401, %v3407
  %v3411 = vsel %vm1235, %v3238, 0
  %v3414 = vsel %vm1235, %v3239, 0
  %3416 = vmatprep.subr.bf16.mxu0 0
  %3417 = vmatpush1.bf16.xpose.msra.mxu0 %v3414
  %3418 = vmatprep.subr.bf16.mxu0 0
  %3419 = vmatpush1.bf16.xpose.msra.mxu0 0
  %3420 = vmatprep.subr.bf16.mxu0 0
  %3421 = vmatpush1.bf16.xpose.msra.mxu0 0
  %3422 = vmatprep.subr.bf16.mxu0 0
  %3423 = vmatpush1.bf16.xpose.msra.mxu0 0
  %3424 = vmatprep.subr.bf16.mxu0 0
  %3425 = vmatpush1.bf16.xpose.msra.mxu0 0
  %3426 = vmatprep.subr.bf16.mxu0 0
  %3427 = vmatpush1.bf16.xpose.msra.mxu0 0
  %3428 = vmatprep.subr.bf16.mxu0 0
  %3429 = vmatpush1.bf16.xpose.msra.mxu0 0
  %3430 = vmatprep.subr.bf16.mxu0 0
  %3431 = vmatpush1.bf16.xpose.msra.mxu0 0
  %3432 = vmatprep.subr.bf16.mxu0 0
  %3433 = vmatpush1.bf16.xpose.msra.mxu0 0
  %3434 = vmatprep.subr.bf16.mxu0 0
  %3435 = vmatpush1.bf16.xpose.msra.mxu0 0
  %3436 = vmatprep.subr.bf16.mxu0 0
  %3437 = vmatpush1.bf16.xpose.msra.mxu0 0
  %3438 = vmatprep.subr.bf16.mxu0 0
  %3439 = vmatpush1.bf16.xpose.msra.mxu0 0
  %3440 = vmatprep.subr.bf16.mxu0 0
  %3441 = vmatpush1.bf16.xpose.msra.mxu0 0
  %3442 = vmatprep.subr.bf16.mxu0 0
  %3443 = vmatpush1.bf16.xpose.msra.mxu0 0
  %3444 = vmatprep.subr.bf16.mxu0 0
  %3445 = vmatpush1.bf16.xpose.msra.mxu0 0
  %3446 = vmatprep.subr.bf16.mxu0 0
  %3447 = vmatpush1.bf16.xpose.msra.mxu0 0
  %3448 = vmatprep.mubr.bf16.mxu0 0
  %3449 = vmatmul.mubr.bf16.gmra.mrb[0].mxu0 %v3411
  %v3450 = vpop.f32.mrb[0].mxu0
  %v3451 = vadd.f32 %v3408, %v3450
  %v3452 = vpop.f32.mrb[0].mxu0
  %v3453 = vpop.f32.mrb[0].mxu0
  %v3454 = vpop.f32.mrb[0].mxu0
  %3455 = vdwg.mxu0
  %v3456 = vmul.f32 %v3451, 0.125
  %v3457 = vsel %vm1128, %v3456, -3.4028235e+38
  %v3458 = vsel %vm1365, %v3457, -inf
  %3459 = vmax.xlane.f32.xlu0 %v3458
  %v3460 = vpop.xlane.xlu0 %3459
  %v3461 = vsub.f32 %v3457, %v3460
  %v3462 = vmul.f32 %v3461, 1.442695
  %v3463 = vpow.pop %v3462
  %v3464 = vsel %vm1365, %v3463, 0.0
  %3465 = vadd.xlane.f32.xlu0 %v3464
  %v3466 = vpop.xlane.xlu0 %3465
  %v3467 = vrcp.pop %v3466
  %v3468 = vmul.f32 %v3463, %v3467
  %v3469 = vpack.c.bf16 %v3468, %v3468
  %v3470 = vpack.c.bf16 %v871, %v871
  %v3471 = vlaneseq
  %v3472 = vshrl.u32 %v3471, 7
  %v3473 = vsub.s32 0, %v3472
  %v3474 = vrot.slane %v3468, %v3473
  %3476 = vbcast.lane.b32.xlu0 %v3474, 256
  %v3477 = vpop.permute.xlu0 %3476
  %v3478 = vlaneseq
  %v3479 = vshrl.u32 %v3478, 7
  %v3480 = vsub.s32 1, %v3479
  %v3481 = vrot.slane %v3468, %v3480
  %3483 = vbcast.lane.b32.xlu0 %v3481, 256
  %v3484 = vpop.permute.xlu0 %3483
  %v3485 = vlaneseq
  %v3486 = vshrl.u32 %v3485, 7
  %v3487 = vsub.s32 2, %v3486
  %v3488 = vrot.slane %v3468, %v3487
  %3490 = vbcast.lane.b32.xlu0 %v3488, 256
  %v3491 = vpop.permute.xlu0 %3490
  %v3492 = vlaneseq
  %v3493 = vshrl.u32 %v3492, 7
  %v3494 = vsub.s32 3, %v3493
  %v3495 = vrot.slane %v3468, %v3494
  %3497 = vbcast.lane.b32.xlu0 %v3495, 256
  %v3498 = vpop.permute.xlu0 %3497
  %v3499 = vlaneseq
  %v3500 = vshrl.u32 %v3499, 7
  %v3501 = vsub.s32 4, %v3500
  %v3502 = vrot.slane %v3468, %v3501
  %3504 = vbcast.lane.b32.xlu0 %v3502, 256
  %v3505 = vpop.permute.xlu0 %3504
  %v3506 = vlaneseq
  %v3507 = vshrl.u32 %v3506, 7
  %v3508 = vsub.s32 5, %v3507
  %v3509 = vrot.slane %v3468, %v3508
  %3511 = vbcast.lane.b32.xlu0 %v3509, 256
  %v3512 = vpop.permute.xlu0 %3511
  %v3513 = vlaneseq
  %v3514 = vshrl.u32 %v3513, 7
  %v3515 = vsub.s32 6, %v3514
  %v3516 = vrot.slane %v3468, %v3515
  %3518 = vbcast.lane.b32.xlu0 %v3516, 256
  %v3519 = vpop.permute.xlu0 %3518
  %v3520 = vlaneseq
  %v3521 = vshrl.u32 %v3520, 7
  %v3522 = vsub.s32 7, %v3521
  %v3523 = vrot.slane %v3468, %v3522
  %3525 = vbcast.lane.b32.xlu0 %v3523, 256
  %v3526 = vpop.permute.xlu0 %3525
  %v3527 = vmul.f32 %v3477, %v1069
  %v3528 = vmul.f32 %v3484, %v1073
  %v3529 = vmul.f32 %v3491, %v1079
  %v3530 = vmul.f32 %v3498, %v1083
  %v3531 = vmul.f32 %v3505, %v1089
  %v3532 = vmul.f32 %v3512, %v1093
  %v3533 = vmul.f32 %v3519, %v1099
  %v3534 = vmul.f32 %v3526, %v1103
  %v3535 = vsel %vm1235, %v3527, 0.0
  %v3536 = vrot.slane %v3535, 4
  %v3537 = vadd.f32 %v3535, %v3536
  %v3538 = vrot.slane %v3537, 2
  %v3539 = vadd.f32 %v3537, %v3538
  %v3540 = vrot.slane %v3539, 1
  %v3541 = vadd.f32 %v3539, %v3540
  %v3542 = vsel %vm1235, %v3528, 0.0
  %v3543 = vrot.slane %v3542, 4
  %v3544 = vadd.f32 %v3542, %v3543
  %v3545 = vrot.slane %v3544, 2
  %v3546 = vadd.f32 %v3544, %v3545
  %v3547 = vrot.slane %v3546, 1
  %v3548 = vadd.f32 %v3546, %v3547
  %v3549 = vsel %vm1235, %v3529, 0.0
  %v3550 = vrot.slane %v3549, 4
  %v3551 = vadd.f32 %v3549, %v3550
  %v3552 = vrot.slane %v3551, 2
  %v3553 = vadd.f32 %v3551, %v3552
  %v3554 = vrot.slane %v3553, 1
  %v3555 = vadd.f32 %v3553, %v3554
  %v3556 = vsel %vm1235, %v3530, 0.0
  %v3557 = vrot.slane %v3556, 4
  %v3558 = vadd.f32 %v3556, %v3557
  %v3559 = vrot.slane %v3558, 2
  %v3560 = vadd.f32 %v3558, %v3559
  %v3561 = vrot.slane %v3560, 1
  %v3562 = vadd.f32 %v3560, %v3561
  %v3563 = vsel %vm1235, %v3531, 0.0
  %v3564 = vrot.slane %v3563, 4
  %v3565 = vadd.f32 %v3563, %v3564
  %v3566 = vrot.slane %v3565, 2
  %v3567 = vadd.f32 %v3565, %v3566
  %v3568 = vrot.slane %v3567, 1
  %v3569 = vadd.f32 %v3567, %v3568
  %v3570 = vsel %vm1235, %v3532, 0.0
  %v3571 = vrot.slane %v3570, 4
  %v3572 = vadd.f32 %v3570, %v3571
  %v3573 = vrot.slane %v3572, 2
  %v3574 = vadd.f32 %v3572, %v3573
  %v3575 = vrot.slane %v3574, 1
  %v3576 = vadd.f32 %v3574, %v3575
  %v3577 = vsel %vm1235, %v3533, 0.0
  %v3578 = vrot.slane %v3577, 4
  %v3579 = vadd.f32 %v3577, %v3578
  %v3580 = vrot.slane %v3579, 2
  %v3581 = vadd.f32 %v3579, %v3580
  %v3582 = vrot.slane %v3581, 1
  %v3583 = vadd.f32 %v3581, %v3582
  %v3584 = vsel %vm1235, %v3534, 0.0
  %v3585 = vrot.slane %v3584, 4
  %v3586 = vadd.f32 %v3584, %v3585
  %v3587 = vrot.slane %v3586, 2
  %v3588 = vadd.f32 %v3586, %v3587
  %v3589 = vrot.slane %v3588, 1
  %v3590 = vadd.f32 %v3588, %v3589
  %v3599 = vsel %vm1302, %v3548, %v3541
  %v3600 = vsel %vm1304, %v3555, %v3599
  %v3601 = vsel %vm1306, %v3562, %v3600
  %v3602 = vsel %vm1308, %v3569, %v3601
  %v3603 = vsel %vm1310, %v3576, %v3602
  %v3604 = vsel %vm1312, %v3583, %v3603
  %v3605 = vsel %vm1314, %v3590, %v3604
  %v3608 = vsel %vm1365, %v3469, 0
  %v3611 = vsel %vm1518, %v3470, 0
  %3613 = vmatprep.subr.bf16.mxu0 0
  %3614 = vmatpush1.bf16.msra.mxu0 %v3611
  %3615 = vmatprep.subr.bf16.mxu0 0
  %3616 = vmatpush1.bf16.msra.mxu0 0
  %3617 = vmatprep.subr.bf16.mxu0 0
  %3618 = vmatpush1.bf16.msra.mxu0 0
  %3619 = vmatprep.subr.bf16.mxu0 0
  %3620 = vmatpush1.bf16.msra.mxu0 0
  %3621 = vmatprep.subr.bf16.mxu0 0
  %3622 = vmatpush1.bf16.msra.mxu0 0
  %3623 = vmatprep.subr.bf16.mxu0 0
  %3624 = vmatpush1.bf16.msra.mxu0 0
  %3625 = vmatprep.subr.bf16.mxu0 0
  %3626 = vmatpush1.bf16.msra.mxu0 0
  %3627 = vmatprep.subr.bf16.mxu0 0
  %3628 = vmatpush1.bf16.msra.mxu0 0
  %3629 = vmatprep.subr.bf16.mxu0 0
  %3630 = vmatpush1.bf16.msra.mxu0 0
  %3631 = vmatprep.subr.bf16.mxu0 0
  %3632 = vmatpush1.bf16.msra.mxu0 0
  %3633 = vmatprep.subr.bf16.mxu0 0
  %3634 = vmatpush1.bf16.msra.mxu0 0
  %3635 = vmatprep.subr.bf16.mxu0 0
  %3636 = vmatpush1.bf16.msra.mxu0 0
  %3637 = vmatprep.subr.bf16.mxu0 0
  %3638 = vmatpush1.bf16.msra.mxu0 0
  %3639 = vmatprep.subr.bf16.mxu0 0
  %3640 = vmatpush1.bf16.msra.mxu0 0
  %3641 = vmatprep.subr.bf16.mxu0 0
  %3642 = vmatpush1.bf16.msra.mxu0 0
  %3643 = vmatprep.subr.bf16.mxu0 0
  %3644 = vmatpush1.bf16.msra.mxu0 0
  %3645 = vmatprep.mubr.bf16.mxu0 0
  %3646 = vmatmul.mubr.bf16.gmra.mrb[0].mxu0 %v3608
  %v3647 = vpop.f32.mrb[0].mxu0
  %v3648 = vadd.f32 %v3605, %v3647
  %v3649 = vpop.f32.mrb[0].mxu0
  %v3650 = vpop.f32.mrb[0].mxu0
  %v3651 = vpop.f32.mrb[0].mxu0
  %3652 = vdwg.mxu0
  %v3653 = vpack.c.bf16 %v3648, %v3648
  %v3654 = vld [vmem:[%s9 + $0x80] sm:$0xf]
  %v3655 = vld [vmem:[%s9 + $0x84] sm:$0xf]
  %v3656 = vld [vmem:[%s9 + $0x88] sm:$0xf]
  %v3657 = vld [vmem:[%s9 + $0x8c] sm:$0xf]
  %v3658 = vld [vmem:[%s9 + $0x90] sm:$0xf]
  %v3659 = vld [vmem:[%s9 + $0x94] sm:$0xf]
  %v3660 = vld [vmem:[%s9 + $0x98] sm:$0xf]
  %v3661 = vld [vmem:[%s9 + $0x9c] sm:$0xf]
  %v3670 = vunpack.c.l.b16 %v3654
  %v3671 = vunpack.c.l.b16 %v3655
  %v3672 = vunpack.c.l.b16 %v3656
  %v3673 = vunpack.c.l.b16 %v3657
  %v3674 = vunpack.c.l.b16 %v3658
  %v3675 = vunpack.c.l.b16 %v3659
  %v3676 = vunpack.c.l.b16 %v3660
  %v3677 = vunpack.c.l.b16 %v3661
  %v3678 = vpack.c.b16 %v3671, %v3670
  %v3679 = vpack.c.b16 %v3673, %v3672
  %v3680 = vpack.c.b16 %v3675, %v3674
  %v3681 = vpack.c.b16 %v3677, %v3676
  %v3687 = vsel %vm1235, %v3653, 0
  %3689 = vmatprep.subr.bf16.mxu0 0
  %3690 = vmatpush1.bf16.msra.mxu0 %v3678
  %3691 = vmatprep.subr.bf16.mxu0 0
  %3692 = vmatpush1.bf16.msra.mxu0 %v3679
  %3693 = vmatprep.subr.bf16.mxu0 0
  %3694 = vmatpush1.bf16.msra.mxu0 %v3680
  %3695 = vmatprep.subr.bf16.mxu0 0
  %3696 = vmatpush1.bf16.msra.mxu0 %v3681
  %3697 = vmatprep.subr.bf16.mxu0 0
  %3698 = vmatpush1.bf16.msra.mxu0 0
  %3699 = vmatprep.subr.bf16.mxu0 0
  %3700 = vmatpush1.bf16.msra.mxu0 0
  %3701 = vmatprep.subr.bf16.mxu0 0
  %3702 = vmatpush1.bf16.msra.mxu0 0
  %3703 = vmatprep.subr.bf16.mxu0 0
  %3704 = vmatpush1.bf16.msra.mxu0 0
  %3705 = vmatprep.subr.bf16.mxu0 0
  %3706 = vmatpush1.bf16.msra.mxu0 0
  %3707 = vmatprep.subr.bf16.mxu0 0
  %3708 = vmatpush1.bf16.msra.mxu0 0
  %3709 = vmatprep.subr.bf16.mxu0 0
  %3710 = vmatpush1.bf16.msra.mxu0 0
  %3711 = vmatprep.subr.bf16.mxu0 0
  %3712 = vmatpush1.bf16.msra.mxu0 0
  %3713 = vmatprep.subr.bf16.mxu0 0
  %3714 = vmatpush1.bf16.msra.mxu0 0
  %3715 = vmatprep.subr.bf16.mxu0 0
  %3716 = vmatpush1.bf16.msra.mxu0 0
  %3717 = vmatprep.subr.bf16.mxu0 0
  %3718 = vmatpush1.bf16.msra.mxu0 0
  %3719 = vmatprep.subr.bf16.mxu0 0
  %3720 = vmatpush1.bf16.msra.mxu0 0
  %3721 = vmatprep.mubr.bf16.mxu0 0
  %3722 = vmatmul.mubr.bf16.gmra.mrb[0].mxu0 %v3687
  %v3723 = vpop.f32.mrb[0].mxu0
  %v3724 = vadd.f32 0.0, %v3723
  %v3725 = vpop.f32.mrb[0].mxu0
  %v3726 = vpop.f32.mrb[0].mxu0
  %v3727 = vpop.f32.mrb[0].mxu0
  %3728 = vdwg.mxu0
  %v3729 = vadd.f32 %v3231, %v3724
  %v3730 = vmul.f32 %v763, %v1573
  %v3731 = vmul.f32 %v790, %v1578
  %v3732 = vadd.f32 %v3730, %v3731
  %v3733 = vmul.f32 %v817, %v1584
  %v3734 = vmul.f32 %v844, %v1589
  %v3735 = vadd.f32 %v3733, %v3734
  %v3736 = vpack.c.bf16 %v3732, %v3732
  %v3737 = vpack.c.bf16 %v3735, %v3735
  %v3739 = vcombine.high %v3732, %v3732
  %v3741 = vunpack.c.l.s4 1966171168
  %v3742 = vunpack.c.0.s8 %v3741
  %v3743 = vlaneseq
  %v3744 = vshrl.u32 %v3743, 7
  %v3745 = vsub.s32 %v3742, %v3744
  %v3746 = vrot.slane %v3732, %v3745
  %v3748 = vunpack.c.l.s4 1966171168
  %v3749 = vunpack.c.0.s8 %v3748
  %v3750 = vlaneseq
  %v3751 = vshrl.u32 %v3750, 7
  %v3752 = vsub.s32 %v3749, %v3751
  %v3753 = vrot.slane %v3739, %v3752
  %v3754 = vcombine.high %v3746, %v3746
  %v3755 = vcombine.high %v3753, %v3753
  %v3757 = vunpack.c.l.s4 1966171168
  %v3758 = vunpack.c.0.s8 %v3757
  %v3759 = vlaneseq
  %v3760 = vshrl.u32 %v3759, 7
  %v3761 = vsub.s32 %v3758, %v3760
  %v3762 = vrot.slane %v3746, %v3761
  %v3764 = vunpack.c.l.s4 1966171168
  %v3765 = vunpack.c.0.s8 %v3764
  %v3766 = vlaneseq
  %v3767 = vshrl.u32 %v3766, 7
  %v3768 = vsub.s32 %v3765, %v3767
  %v3769 = vrot.slane %v3753, %v3768
  %v3771 = vunpack.c.l.s4 1966171168
  %v3772 = vunpack.c.0.s8 %v3771
  %v3773 = vlaneseq
  %v3774 = vshrl.u32 %v3773, 7
  %v3775 = vsub.s32 %v3772, %v3774
  %v3776 = vrot.slane %v3754, %v3775
  %v3778 = vunpack.c.l.s4 1966171168
  %v3779 = vunpack.c.0.s8 %v3778
  %v3780 = vlaneseq
  %v3781 = vshrl.u32 %v3780, 7
  %v3782 = vsub.s32 %v3779, %v3781
  %v3783 = vrot.slane %v3755, %v3782
  %v3784 = vcombine.high %v3762, %v3762
  %v3785 = vcombine.high %v3769, %v3769
  %v3786 = vcombine.high %v3776, %v3776
  %v3787 = vcombine.high %v3783, %v3783
  %v3788 = vlaneseq
  %v3789 = vshrl.u32 %v3788, 7
  %v3790 = vsub.s32 0, %v3789
  %v3791 = vrot.slane %v3762, %v3790
  %v3792 = vlaneseq
  %v3793 = vshrl.u32 %v3792, 7
  %v3794 = vsub.s32 0, %v3793
  %v3795 = vrot.slane %v3776, %v3794
  %v3796 = vlaneseq
  %v3797 = vshrl.u32 %v3796, 7
  %v3798 = vsub.s32 0, %v3797
  %v3799 = vrot.slane %v3784, %v3798
  %v3800 = vlaneseq
  %v3801 = vshrl.u32 %v3800, 7
  %v3802 = vsub.s32 0, %v3801
  %v3803 = vrot.slane %v3786, %v3802
  %v3804 = vlaneseq
  %v3805 = vshrl.u32 %v3804, 7
  %v3806 = vsub.s32 0, %v3805
  %v3807 = vrot.slane %v3769, %v3806
  %v3808 = vlaneseq
  %v3809 = vshrl.u32 %v3808, 7
  %v3810 = vsub.s32 0, %v3809
  %v3811 = vrot.slane %v3783, %v3810
  %v3812 = vlaneseq
  %v3813 = vshrl.u32 %v3812, 7
  %v3814 = vsub.s32 0, %v3813
  %v3815 = vrot.slane %v3785, %v3814
  %v3816 = vlaneseq
  %v3817 = vshrl.u32 %v3816, 7
  %v3818 = vsub.s32 0, %v3817
  %v3819 = vrot.slane %v3787, %v3818
  %v3828 = vmul.f32 %v3791, %v1069
  %v3829 = vmul.f32 %v3795, %v1073
  %v3830 = vmul.f32 %v3799, %v1079
  %v3831 = vmul.f32 %v3803, %v1083
  %v3832 = vmul.f32 %v3807, %v1089
  %v3833 = vmul.f32 %v3811, %v1093
  %v3834 = vmul.f32 %v3815, %v1099
  %v3835 = vmul.f32 %v3819, %v1103
  %3844 = vrot.lane.b32.xlu0 %v3828, 64
  %v3845 = vpop.permute.xlu0 %3844
  %3846 = vrot.lane.b32.xlu0 %v3829, 64
  %v3847 = vpop.permute.xlu0 %3846
  %3848 = vrot.lane.b32.xlu0 %v3830, 64
  %v3849 = vpop.permute.xlu0 %3848
  %3850 = vrot.lane.b32.xlu0 %v3831, 64
  %v3851 = vpop.permute.xlu0 %3850
  %3852 = vrot.lane.b32.xlu0 %v3832, 64
  %v3853 = vpop.permute.xlu0 %3852
  %3854 = vrot.lane.b32.xlu0 %v3833, 64
  %v3855 = vpop.permute.xlu0 %3854
  %3856 = vrot.lane.b32.xlu0 %v3834, 64
  %v3857 = vpop.permute.xlu0 %3856
  %3858 = vrot.lane.b32.xlu0 %v3835, 64
  %v3859 = vpop.permute.xlu0 %3858
  %v3868 = vsel %vm1235, %v3845, 0.0
  %3869 = vadd.xlane.f32.xlu0 %v3868
  %v3870 = vpop.xlane.xlu0 %3869
  %v3871 = vsel %vm1235, %v3847, 0.0
  %3872 = vadd.xlane.f32.xlu0 %v3871
  %v3873 = vpop.xlane.xlu0 %3872
  %v3874 = vsel %vm1235, %v3849, 0.0
  %3875 = vadd.xlane.f32.xlu0 %v3874
  %v3876 = vpop.xlane.xlu0 %3875
  %v3877 = vsel %vm1235, %v3851, 0.0
  %3878 = vadd.xlane.f32.xlu0 %v3877
  %v3879 = vpop.xlane.xlu0 %3878
  %v3880 = vsel %vm1235, %v3853, 0.0
  %3881 = vadd.xlane.f32.xlu0 %v3880
  %v3882 = vpop.xlane.xlu0 %3881
  %v3883 = vsel %vm1235, %v3855, 0.0
  %3884 = vadd.xlane.f32.xlu0 %v3883
  %v3885 = vpop.xlane.xlu0 %3884
  %v3886 = vsel %vm1235, %v3857, 0.0
  %3887 = vadd.xlane.f32.xlu0 %v3886
  %v3888 = vpop.xlane.xlu0 %3887
  %v3889 = vsel %vm1235, %v3859, 0.0
  %3890 = vadd.xlane.f32.xlu0 %v3889
  %v3891 = vpop.xlane.xlu0 %3890
  %3893 = vrot.lane.b32.xlu0 %v3736, 64
  %v3894 = vpop.permute.xlu0 %3893
  %3896 = vrot.lane.b32.xlu0 %v3737, 64
  %v3897 = vpop.permute.xlu0 %3896
  %v3906 = vlaneseq
  %v3907 = vshrl.u32 %v3906, 7
  %v3908 = vsub.s32 %v1269, %v3907
  %v3909 = vrot.slane %v3870, %v3908
  %v3910 = vlaneseq
  %v3911 = vshrl.u32 %v3910, 7
  %v3912 = vsub.s32 %v1269, %v3911
  %v3913 = vrot.slane %v3873, %v3912
  %v3914 = vlaneseq
  %v3915 = vshrl.u32 %v3914, 7
  %v3916 = vsub.s32 %v1269, %v3915
  %v3917 = vrot.slane %v3876, %v3916
  %v3918 = vlaneseq
  %v3919 = vshrl.u32 %v3918, 7
  %v3920 = vsub.s32 %v1269, %v3919
  %v3921 = vrot.slane %v3879, %v3920
  %v3922 = vlaneseq
  %v3923 = vshrl.u32 %v3922, 7
  %v3924 = vsub.s32 %v1269, %v3923
  %v3925 = vrot.slane %v3882, %v3924
  %v3926 = vlaneseq
  %v3927 = vshrl.u32 %v3926, 7
  %v3928 = vsub.s32 %v1269, %v3927
  %v3929 = vrot.slane %v3885, %v3928
  %v3930 = vlaneseq
  %v3931 = vshrl.u32 %v3930, 7
  %v3932 = vsub.s32 %v1269, %v3931
  %v3933 = vrot.slane %v3888, %v3932
  %v3934 = vlaneseq
  %v3935 = vshrl.u32 %v3934, 7
  %v3936 = vsub.s32 %v1269, %v3935
  %v3937 = vrot.slane %v3891, %v3936
  %v3938 = vsel %vm1302, %v3913, %v3909
  %v3939 = vsel %vm1304, %v3917, %v3938
  %v3940 = vsel %vm1306, %v3921, %v3939
  %v3941 = vsel %vm1308, %v3925, %v3940
  %v3942 = vsel %vm1310, %v3929, %v3941
  %v3943 = vsel %vm1312, %v3933, %v3942
  %v3944 = vsel %vm1314, %v3937, %v3943
  %v3947 = vsel %vm1235, %v3894, 0
  %v3950 = vsel %vm1235, %v3897, 0
  %3952 = vmatprep.subr.bf16.mxu0 0
  %3953 = vmatpush1.bf16.xpose.msra.mxu0 %v3950
  %3954 = vmatprep.subr.bf16.mxu0 0
  %3955 = vmatpush1.bf16.xpose.msra.mxu0 0
  %3956 = vmatprep.subr.bf16.mxu0 0
  %3957 = vmatpush1.bf16.xpose.msra.mxu0 0
  %3958 = vmatprep.subr.bf16.mxu0 0
  %3959 = vmatpush1.bf16.xpose.msra.mxu0 0
  %3960 = vmatprep.subr.bf16.mxu0 0
  %3961 = vmatpush1.bf16.xpose.msra.mxu0 0
  %3962 = vmatprep.subr.bf16.mxu0 0
  %3963 = vmatpush1.bf16.xpose.msra.mxu0 0
  %3964 = vmatprep.subr.bf16.mxu0 0
  %3965 = vmatpush1.bf16.xpose.msra.mxu0 0
  %3966 = vmatprep.subr.bf16.mxu0 0
  %3967 = vmatpush1.bf16.xpose.msra.mxu0 0
  %3968 = vmatprep.subr.bf16.mxu0 0
  %3969 = vmatpush1.bf16.xpose.msra.mxu0 0
  %3970 = vmatprep.subr.bf16.mxu0 0
  %3971 = vmatpush1.bf16.xpose.msra.mxu0 0
  %3972 = vmatprep.subr.bf16.mxu0 0
  %3973 = vmatpush1.bf16.xpose.msra.mxu0 0
  %3974 = vmatprep.subr.bf16.mxu0 0
  %3975 = vmatpush1.bf16.xpose.msra.mxu0 0
  %3976 = vmatprep.subr.bf16.mxu0 0
  %3977 = vmatpush1.bf16.xpose.msra.mxu0 0
  %3978 = vmatprep.subr.bf16.mxu0 0
  %3979 = vmatpush1.bf16.xpose.msra.mxu0 0
  %3980 = vmatprep.subr.bf16.mxu0 0
  %3981 = vmatpush1.bf16.xpose.msra.mxu0 0
  %3982 = vmatprep.subr.bf16.mxu0 0
  %3983 = vmatpush1.bf16.xpose.msra.mxu0 0
  %3984 = vmatprep.mubr.bf16.mxu0 0
  %3985 = vmatmul.mubr.bf16.gmra.mrb[0].mxu0 %v3947
  %v3986 = vpop.f32.mrb[0].mxu0
  %v3987 = vadd.f32 %v3944, %v3986
  %v3988 = vpop.f32.mrb[0].mxu0
  %v3989 = vpop.f32.mrb[0].mxu0
  %v3990 = vpop.f32.mrb[0].mxu0
  %3991 = vdwg.mxu0
  %v3992 = vmul.f32 %v3987, 0.125
  %v3993 = vsel %vm1128, %v3992, -3.4028235e+38
  %v3994 = vsel %vm1365, %v3993, -inf
  %3995 = vmax.xlane.f32.xlu0 %v3994
  %v3996 = vpop.xlane.xlu0 %3995
  %v3997 = vsub.f32 %v3993, %v3996
  %v3998 = vmul.f32 %v3997, 1.442695
  %v3999 = vpow.pop %v3998
  %v4000 = vsel %vm1365, %v3999, 0.0
  %4001 = vadd.xlane.f32.xlu0 %v4000
  %v4002 = vpop.xlane.xlu0 %4001
  %v4003 = vrcp.pop %v4002
  %v4004 = vmul.f32 %v3999, %v4003
  %v4005 = vpack.c.bf16 %v4004, %v4004
  %v4006 = vlaneseq
  %v4007 = vshrl.u32 %v4006, 7
  %v4008 = vsub.s32 0, %v4007
  %v4009 = vrot.slane %v4004, %v4008
  %4011 = vbcast.lane.b32.xlu0 %v4009, 256
  %v4012 = vpop.permute.xlu0 %4011
  %v4013 = vlaneseq
  %v4014 = vshrl.u32 %v4013, 7
  %v4015 = vsub.s32 1, %v4014
  %v4016 = vrot.slane %v4004, %v4015
  %4018 = vbcast.lane.b32.xlu0 %v4016, 256
  %v4019 = vpop.permute.xlu0 %4018
  %v4020 = vlaneseq
  %v4021 = vshrl.u32 %v4020, 7
  %v4022 = vsub.s32 2, %v4021
  %v4023 = vrot.slane %v4004, %v4022
  %4025 = vbcast.lane.b32.xlu0 %v4023, 256
  %v4026 = vpop.permute.xlu0 %4025
  %v4027 = vlaneseq
  %v4028 = vshrl.u32 %v4027, 7
  %v4029 = vsub.s32 3, %v4028
  %v4030 = vrot.slane %v4004, %v4029
  %4032 = vbcast.lane.b32.xlu0 %v4030, 256
  %v4033 = vpop.permute.xlu0 %4032
  %v4034 = vlaneseq
  %v4035 = vshrl.u32 %v4034, 7
  %v4036 = vsub.s32 4, %v4035
  %v4037 = vrot.slane %v4004, %v4036
  %4039 = vbcast.lane.b32.xlu0 %v4037, 256
  %v4040 = vpop.permute.xlu0 %4039
  %v4041 = vlaneseq
  %v4042 = vshrl.u32 %v4041, 7
  %v4043 = vsub.s32 5, %v4042
  %v4044 = vrot.slane %v4004, %v4043
  %4046 = vbcast.lane.b32.xlu0 %v4044, 256
  %v4047 = vpop.permute.xlu0 %4046
  %v4048 = vlaneseq
  %v4049 = vshrl.u32 %v4048, 7
  %v4050 = vsub.s32 6, %v4049
  %v4051 = vrot.slane %v4004, %v4050
  %4053 = vbcast.lane.b32.xlu0 %v4051, 256
  %v4054 = vpop.permute.xlu0 %4053
  %v4055 = vlaneseq
  %v4056 = vshrl.u32 %v4055, 7
  %v4057 = vsub.s32 7, %v4056
  %v4058 = vrot.slane %v4004, %v4057
  %4060 = vbcast.lane.b32.xlu0 %v4058, 256
  %v4061 = vpop.permute.xlu0 %4060
  %v4062 = vmul.f32 %v4012, %v1069
  %v4063 = vmul.f32 %v4019, %v1073
  %v4064 = vmul.f32 %v4026, %v1079
  %v4065 = vmul.f32 %v4033, %v1083
  %v4066 = vmul.f32 %v4040, %v1089
  %v4067 = vmul.f32 %v4047, %v1093
  %v4068 = vmul.f32 %v4054, %v1099
  %v4069 = vmul.f32 %v4061, %v1103
  %v4070 = vsel %vm1927, %v4062, 0.0
  %v4071 = vrot.slane %v4070, 4
  %v4072 = vadd.f32 %v4070, %v4071
  %v4073 = vrot.slane %v4072, 2
  %v4074 = vadd.f32 %v4072, %v4073
  %v4075 = vrot.slane %v4074, 1
  %v4076 = vadd.f32 %v4074, %v4075
  %v4077 = vsel %vm1927, %v4063, 0.0
  %v4078 = vrot.slane %v4077, 4
  %v4079 = vadd.f32 %v4077, %v4078
  %v4080 = vrot.slane %v4079, 2
  %v4081 = vadd.f32 %v4079, %v4080
  %v4082 = vrot.slane %v4081, 1
  %v4083 = vadd.f32 %v4081, %v4082
  %v4084 = vsel %vm1927, %v4064, 0.0
  %v4085 = vrot.slane %v4084, 4
  %v4086 = vadd.f32 %v4084, %v4085
  %v4087 = vrot.slane %v4086, 2
  %v4088 = vadd.f32 %v4086, %v4087
  %v4089 = vrot.slane %v4088, 1
  %v4090 = vadd.f32 %v4088, %v4089
  %v4091 = vsel %vm1927, %v4065, 0.0
  %v4092 = vrot.slane %v4091, 4
  %v4093 = vadd.f32 %v4091, %v4092
  %v4094 = vrot.slane %v4093, 2
  %v4095 = vadd.f32 %v4093, %v4094
  %v4096 = vrot.slane %v4095, 1
  %v4097 = vadd.f32 %v4095, %v4096
  %v4098 = vsel %vm1927, %v4066, 0.0
  %v4099 = vrot.slane %v4098, 4
  %v4100 = vadd.f32 %v4098, %v4099
  %v4101 = vrot.slane %v4100, 2
  %v4102 = vadd.f32 %v4100, %v4101
  %v4103 = vrot.slane %v4102, 1
  %v4104 = vadd.f32 %v4102, %v4103
  %v4105 = vsel %vm1927, %v4067, 0.0
  %v4106 = vrot.slane %v4105, 4
  %v4107 = vadd.f32 %v4105, %v4106
  %v4108 = vrot.slane %v4107, 2
  %v4109 = vadd.f32 %v4107, %v4108
  %v4110 = vrot.slane %v4109, 1
  %v4111 = vadd.f32 %v4109, %v4110
  %v4112 = vsel %vm1927, %v4068, 0.0
  %v4113 = vrot.slane %v4112, 4
  %v4114 = vadd.f32 %v4112, %v4113
  %v4115 = vrot.slane %v4114, 2
  %v4116 = vadd.f32 %v4114, %v4115
  %v4117 = vrot.slane %v4116, 1
  %v4118 = vadd.f32 %v4116, %v4117
  %v4119 = vsel %vm1927, %v4069, 0.0
  %v4120 = vrot.slane %v4119, 4
  %v4121 = vadd.f32 %v4119, %v4120
  %v4122 = vrot.slane %v4121, 2
  %v4123 = vadd.f32 %v4121, %v4122
  %v4124 = vrot.slane %v4123, 1
  %v4125 = vadd.f32 %v4123, %v4124
  %4127 = vrot.lane.b32.xlu0 %v3470, 64
  %v4128 = vpop.permute.xlu0 %4127
  %v4137 = vsel %vm1302, %v4083, %v4076
  %v4138 = vsel %vm1304, %v4090, %v4137
  %v4139 = vsel %vm1306, %v4097, %v4138
  %v4140 = vsel %vm1308, %v4104, %v4139
  %v4141 = vsel %vm1310, %v4111, %v4140
  %v4142 = vsel %vm1312, %v4118, %v4141
  %v4143 = vsel %vm1314, %v4125, %v4142
  %4144 = vrot.lane.b32.xlu0 %v4143, 64
  %v4145 = vpop.permute.xlu0 %4144
  %v4148 = vsel %vm1365, %v4005, 0
  %v4151 = vsel %vm1518, %v4128, 0
  %4153 = vmatprep.subr.bf16.mxu0 0
  %4154 = vmatpush1.bf16.msra.mxu0 %v4151
  %4155 = vmatprep.subr.bf16.mxu0 0
  %4156 = vmatpush1.bf16.msra.mxu0 0
  %4157 = vmatprep.subr.bf16.mxu0 0
  %4158 = vmatpush1.bf16.msra.mxu0 0
  %4159 = vmatprep.subr.bf16.mxu0 0
  %4160 = vmatpush1.bf16.msra.mxu0 0
  %4161 = vmatprep.subr.bf16.mxu0 0
  %4162 = vmatpush1.bf16.msra.mxu0 0
  %4163 = vmatprep.subr.bf16.mxu0 0
  %4164 = vmatpush1.bf16.msra.mxu0 0
  %4165 = vmatprep.subr.bf16.mxu0 0
  %4166 = vmatpush1.bf16.msra.mxu0 0
  %4167 = vmatprep.subr.bf16.mxu0 0
  %4168 = vmatpush1.bf16.msra.mxu0 0
  %4169 = vmatprep.subr.bf16.mxu0 0
  %4170 = vmatpush1.bf16.msra.mxu0 0
  %4171 = vmatprep.subr.bf16.mxu0 0
  %4172 = vmatpush1.bf16.msra.mxu0 0
  %4173 = vmatprep.subr.bf16.mxu0 0
  %4174 = vmatpush1.bf16.msra.mxu0 0
  %4175 = vmatprep.subr.bf16.mxu0 0
  %4176 = vmatpush1.bf16.msra.mxu0 0
  %4177 = vmatprep.subr.bf16.mxu0 0
  %4178 = vmatpush1.bf16.msra.mxu0 0
  %4179 = vmatprep.subr.bf16.mxu0 0
  %4180 = vmatpush1.bf16.msra.mxu0 0
  %4181 = vmatprep.subr.bf16.mxu0 0
  %4182 = vmatpush1.bf16.msra.mxu0 0
  %4183 = vmatprep.subr.bf16.mxu0 0
  %4184 = vmatpush1.bf16.msra.mxu0 0
  %4185 = vmatprep.mubr.bf16.mxu0 0
  %4186 = vmatmul.mubr.bf16.gmra.mrb[0].mxu0 %v4148
  %v4187 = vpop.f32.mrb[0].mxu0
  %v4188 = vadd.f32 %v4145, %v4187
  %v4189 = vpop.f32.mrb[0].mxu0
  %v4190 = vpop.f32.mrb[0].mxu0
  %v4191 = vpop.f32.mrb[0].mxu0
  %4192 = vdwg.mxu0
  %v4193 = vpack.c.bf16 %v4188, %v4188
  %v4194 = vld [vmem:[%s9 + $0xa0] sm:$0xf]
  %v4195 = vld [vmem:[%s9 + $0xa4] sm:$0xf]
  %v4196 = vld [vmem:[%s9 + $0xa8] sm:$0xf]
  %v4197 = vld [vmem:[%s9 + $0xac] sm:$0xf]
  %v4198 = vld [vmem:[%s9 + $0xb0] sm:$0xf]
  %v4199 = vld [vmem:[%s9 + $0xb4] sm:$0xf]
  %v4200 = vld [vmem:[%s9 + $0xb8] sm:$0xf]
  %v4201 = vld [vmem:[%s9 + $0xbc] sm:$0xf]
  %v4210 = vunpack.c.l.b16 %v4194
  %v4211 = vunpack.c.l.b16 %v4195
  %v4212 = vunpack.c.l.b16 %v4196
  %v4213 = vunpack.c.l.b16 %v4197
  %v4214 = vunpack.c.l.b16 %v4198
  %v4215 = vunpack.c.l.b16 %v4199
  %v4216 = vunpack.c.l.b16 %v4200
  %v4217 = vunpack.c.l.b16 %v4201
  %v4218 = vpack.c.b16 %v4211, %v4210
  %v4219 = vpack.c.b16 %v4213, %v4212
  %v4220 = vpack.c.b16 %v4215, %v4214
  %v4221 = vpack.c.b16 %v4217, %v4216
  %v4227 = vsel %vm1235, %v4193, 0
  %4229 = vmatprep.subr.bf16.mxu0 0
  %4230 = vmatpush1.bf16.msra.mxu0 %v4218
  %4231 = vmatprep.subr.bf16.mxu0 0
  %4232 = vmatpush1.bf16.msra.mxu0 %v4219
  %4233 = vmatprep.subr.bf16.mxu0 0
  %4234 = vmatpush1.bf16.msra.mxu0 %v4220
  %4235 = vmatprep.subr.bf16.mxu0 0
  %4236 = vmatpush1.bf16.msra.mxu0 %v4221
  %4237 = vmatprep.subr.bf16.mxu0 0
  %4238 = vmatpush1.bf16.msra.mxu0 0
  %4239 = vmatprep.subr.bf16.mxu0 0
  %4240 = vmatpush1.bf16.msra.mxu0 0
  %4241 = vmatprep.subr.bf16.mxu0 0
  %4242 = vmatpush1.bf16.msra.mxu0 0
  %4243 = vmatprep.subr.bf16.mxu0 0
  %4244 = vmatpush1.bf16.msra.mxu0 0
  %4245 = vmatprep.subr.bf16.mxu0 0
  %4246 = vmatpush1.bf16.msra.mxu0 0
  %4247 = vmatprep.subr.bf16.mxu0 0
  %4248 = vmatpush1.bf16.msra.mxu0 0
  %4249 = vmatprep.subr.bf16.mxu0 0
  %4250 = vmatpush1.bf16.msra.mxu0 0
  %4251 = vmatprep.subr.bf16.mxu0 0
  %4252 = vmatpush1.bf16.msra.mxu0 0
  %4253 = vmatprep.subr.bf16.mxu0 0
  %4254 = vmatpush1.bf16.msra.mxu0 0
  %4255 = vmatprep.subr.bf16.mxu0 0
  %4256 = vmatpush1.bf16.msra.mxu0 0
  %4257 = vmatprep.subr.bf16.mxu0 0
  %4258 = vmatpush1.bf16.msra.mxu0 0
  %4259 = vmatprep.subr.bf16.mxu0 0
  %4260 = vmatpush1.bf16.msra.mxu0 0
  %4261 = vmatprep.mubr.bf16.mxu0 0
  %4262 = vmatmul.mubr.bf16.gmra.mrb[0].mxu0 %v4227
  %v4263 = vpop.f32.mrb[0].mxu0
  %v4264 = vadd.f32 0.0, %v4263
  %v4265 = vpop.f32.mrb[0].mxu0
  %v4266 = vpop.f32.mrb[0].mxu0
  %v4267 = vpop.f32.mrb[0].mxu0
  %4268 = vdwg.mxu0
  %v4269 = vadd.f32 %v3729, %v4264
  %v4270 = vmul.f32 %v764, %v1108
  %v4271 = vmul.f32 %v791, %v1110
  %v4272 = vadd.f32 %v4270, %v4271
  %v4273 = vmul.f32 %v818, %v1111
  %v4274 = vmul.f32 %v845, %v1112
  %v4275 = vadd.f32 %v4273, %v4274
  %v4276 = vpack.c.bf16 %v4272, %v4272
  %v4277 = vpack.c.bf16 %v4275, %v4275
  %v4279 = vcombine.high %v4272, %v4272
  %v4281 = vunpack.c.l.s4 1966171168
  %v4282 = vunpack.c.0.s8 %v4281
  %v4283 = vlaneseq
  %v4284 = vshrl.u32 %v4283, 7
  %v4285 = vsub.s32 %v4282, %v4284
  %v4286 = vrot.slane %v4272, %v4285
  %v4288 = vunpack.c.l.s4 1966171168
  %v4289 = vunpack.c.0.s8 %v4288
  %v4290 = vlaneseq
  %v4291 = vshrl.u32 %v4290, 7
  %v4292 = vsub.s32 %v4289, %v4291
  %v4293 = vrot.slane %v4279, %v4292
  %v4294 = vcombine.high %v4286, %v4286
  %v4295 = vcombine.high %v4293, %v4293
  %v4297 = vunpack.c.l.s4 1966171168
  %v4298 = vunpack.c.0.s8 %v4297
  %v4299 = vlaneseq
  %v4300 = vshrl.u32 %v4299, 7
  %v4301 = vsub.s32 %v4298, %v4300
  %v4302 = vrot.slane %v4286, %v4301
  %v4304 = vunpack.c.l.s4 1966171168
  %v4305 = vunpack.c.0.s8 %v4304
  %v4306 = vlaneseq
  %v4307 = vshrl.u32 %v4306, 7
  %v4308 = vsub.s32 %v4305, %v4307
  %v4309 = vrot.slane %v4293, %v4308
  %v4311 = vunpack.c.l.s4 1966171168
  %v4312 = vunpack.c.0.s8 %v4311
  %v4313 = vlaneseq
  %v4314 = vshrl.u32 %v4313, 7
  %v4315 = vsub.s32 %v4312, %v4314
  %v4316 = vrot.slane %v4294, %v4315
  %v4318 = vunpack.c.l.s4 1966171168
  %v4319 = vunpack.c.0.s8 %v4318
  %v4320 = vlaneseq
  %v4321 = vshrl.u32 %v4320, 7
  %v4322 = vsub.s32 %v4319, %v4321
  %v4323 = vrot.slane %v4295, %v4322
  %v4324 = vcombine.high %v4302, %v4302
  %v4325 = vcombine.high %v4309, %v4309
  %v4326 = vcombine.high %v4316, %v4316
  %v4327 = vcombine.high %v4323, %v4323
  %v4328 = vlaneseq
  %v4329 = vshrl.u32 %v4328, 7
  %v4330 = vsub.s32 0, %v4329
  %v4331 = vrot.slane %v4302, %v4330
  %v4332 = vlaneseq
  %v4333 = vshrl.u32 %v4332, 7
  %v4334 = vsub.s32 0, %v4333
  %v4335 = vrot.slane %v4316, %v4334
  %v4336 = vlaneseq
  %v4337 = vshrl.u32 %v4336, 7
  %v4338 = vsub.s32 0, %v4337
  %v4339 = vrot.slane %v4324, %v4338
  %v4340 = vlaneseq
  %v4341 = vshrl.u32 %v4340, 7
  %v4342 = vsub.s32 0, %v4341
  %v4343 = vrot.slane %v4326, %v4342
  %v4344 = vlaneseq
  %v4345 = vshrl.u32 %v4344, 7
  %v4346 = vsub.s32 0, %v4345
  %v4347 = vrot.slane %v4309, %v4346
  %v4348 = vlaneseq
  %v4349 = vshrl.u32 %v4348, 7
  %v4350 = vsub.s32 0, %v4349
  %v4351 = vrot.slane %v4323, %v4350
  %v4352 = vlaneseq
  %v4353 = vshrl.u32 %v4352, 7
  %v4354 = vsub.s32 0, %v4353
  %v4355 = vrot.slane %v4325, %v4354
  %v4356 = vlaneseq
  %v4357 = vshrl.u32 %v4356, 7
  %v4358 = vsub.s32 0, %v4357
  %v4359 = vrot.slane %v4327, %v4358
  %v4368 = vmul.f32 %v4331, %v1071
  %v4369 = vmul.f32 %v4335, %v1075
  %v4370 = vmul.f32 %v4339, %v1081
  %v4371 = vmul.f32 %v4343, %v1085
  %v4372 = vmul.f32 %v4347, %v1091
  %v4373 = vmul.f32 %v4351, %v1095
  %v4374 = vmul.f32 %v4355, %v1101
  %v4375 = vmul.f32 %v4359, %v1105
  %v4376 = vsel %vm1235, %v4368, 0.0
  %4377 = vadd.xlane.f32.xlu0 %v4376
  %v4378 = vpop.xlane.xlu0 %4377
  %v4379 = vsel %vm1235, %v4369, 0.0
  %4380 = vadd.xlane.f32.xlu0 %v4379
  %v4381 = vpop.xlane.xlu0 %4380
  %v4382 = vsel %vm1235, %v4370, 0.0
  %4383 = vadd.xlane.f32.xlu0 %v4382
  %v4384 = vpop.xlane.xlu0 %4383
  %v4385 = vsel %vm1235, %v4371, 0.0
  %4386 = vadd.xlane.f32.xlu0 %v4385
  %v4387 = vpop.xlane.xlu0 %4386
  %v4388 = vsel %vm1235, %v4372, 0.0
  %4389 = vadd.xlane.f32.xlu0 %v4388
  %v4390 = vpop.xlane.xlu0 %4389
  %v4391 = vsel %vm1235, %v4373, 0.0
  %4392 = vadd.xlane.f32.xlu0 %v4391
  %v4393 = vpop.xlane.xlu0 %4392
  %v4394 = vsel %vm1235, %v4374, 0.0
  %4395 = vadd.xlane.f32.xlu0 %v4394
  %v4396 = vpop.xlane.xlu0 %4395
  %v4397 = vsel %vm1235, %v4375, 0.0
  %4398 = vadd.xlane.f32.xlu0 %v4397
  %v4399 = vpop.xlane.xlu0 %4398
  %v4408 = vlaneseq
  %v4409 = vshrl.u32 %v4408, 7
  %v4410 = vsub.s32 %v1269, %v4409
  %v4411 = vrot.slane %v4378, %v4410
  %v4412 = vlaneseq
  %v4413 = vshrl.u32 %v4412, 7
  %v4414 = vsub.s32 %v1269, %v4413
  %v4415 = vrot.slane %v4381, %v4414
  %v4416 = vlaneseq
  %v4417 = vshrl.u32 %v4416, 7
  %v4418 = vsub.s32 %v1269, %v4417
  %v4419 = vrot.slane %v4384, %v4418
  %v4420 = vlaneseq
  %v4421 = vshrl.u32 %v4420, 7
  %v4422 = vsub.s32 %v1269, %v4421
  %v4423 = vrot.slane %v4387, %v4422
  %v4424 = vlaneseq
  %v4425 = vshrl.u32 %v4424, 7
  %v4426 = vsub.s32 %v1269, %v4425
  %v4427 = vrot.slane %v4390, %v4426
  %v4428 = vlaneseq
  %v4429 = vshrl.u32 %v4428, 7
  %v4430 = vsub.s32 %v1269, %v4429
  %v4431 = vrot.slane %v4393, %v4430
  %v4432 = vlaneseq
  %v4433 = vshrl.u32 %v4432, 7
  %v4434 = vsub.s32 %v1269, %v4433
  %v4435 = vrot.slane %v4396, %v4434
  %v4436 = vlaneseq
  %v4437 = vshrl.u32 %v4436, 7
  %v4438 = vsub.s32 %v1269, %v4437
  %v4439 = vrot.slane %v4399, %v4438
  %v4440 = vsel %vm1302, %v4415, %v4411
  %v4441 = vsel %vm1304, %v4419, %v4440
  %v4442 = vsel %vm1306, %v4423, %v4441
  %v4443 = vsel %vm1308, %v4427, %v4442
  %v4444 = vsel %vm1310, %v4431, %v4443
  %v4445 = vsel %vm1312, %v4435, %v4444
  %v4446 = vsel %vm1314, %v4439, %v4445
  %v4449 = vsel %vm1235, %v4276, 0
  %v4452 = vsel %vm1235, %v4277, 0
  %4454 = vmatprep.subr.bf16.mxu0 0
  %4455 = vmatpush1.bf16.xpose.msra.mxu0 %v4452
  %4456 = vmatprep.subr.bf16.mxu0 0
  %4457 = vmatpush1.bf16.xpose.msra.mxu0 0
  %4458 = vmatprep.subr.bf16.mxu0 0
  %4459 = vmatpush1.bf16.xpose.msra.mxu0 0
  %4460 = vmatprep.subr.bf16.mxu0 0
  %4461 = vmatpush1.bf16.xpose.msra.mxu0 0
  %4462 = vmatprep.subr.bf16.mxu0 0
  %4463 = vmatpush1.bf16.xpose.msra.mxu0 0
  %4464 = vmatprep.subr.bf16.mxu0 0
  %4465 = vmatpush1.bf16.xpose.msra.mxu0 0
  %4466 = vmatprep.subr.bf16.mxu0 0
  %4467 = vmatpush1.bf16.xpose.msra.mxu0 0
  %4468 = vmatprep.subr.bf16.mxu0 0
  %4469 = vmatpush1.bf16.xpose.msra.mxu0 0
  %4470 = vmatprep.subr.bf16.mxu0 0
  %4471 = vmatpush1.bf16.xpose.msra.mxu0 0
  %4472 = vmatprep.subr.bf16.mxu0 0
  %4473 = vmatpush1.bf16.xpose.msra.mxu0 0
  %4474 = vmatprep.subr.bf16.mxu0 0
  %4475 = vmatpush1.bf16.xpose.msra.mxu0 0
  %4476 = vmatprep.subr.bf16.mxu0 0
  %4477 = vmatpush1.bf16.xpose.msra.mxu0 0
  %4478 = vmatprep.subr.bf16.mxu0 0
  %4479 = vmatpush1.bf16.xpose.msra.mxu0 0
  %4480 = vmatprep.subr.bf16.mxu0 0
  %4481 = vmatpush1.bf16.xpose.msra.mxu0 0
  %4482 = vmatprep.subr.bf16.mxu0 0
  %4483 = vmatpush1.bf16.xpose.msra.mxu0 0
  %4484 = vmatprep.subr.bf16.mxu0 0
  %4485 = vmatpush1.bf16.xpose.msra.mxu0 0
  %4486 = vmatprep.mubr.bf16.mxu0 0
  %4487 = vmatmul.mubr.bf16.gmra.mrb[0].mxu0 %v4449
  %v4488 = vpop.f32.mrb[0].mxu0
  %v4489 = vadd.f32 %v4446, %v4488
  %v4490 = vpop.f32.mrb[0].mxu0
  %v4491 = vpop.f32.mrb[0].mxu0
  %v4492 = vpop.f32.mrb[0].mxu0
  %4493 = vdwg.mxu0
  %v4494 = vmul.f32 %v4489, 0.125
  %v4495 = vsel %vm1128, %v4494, -3.4028235e+38
  %v4496 = vsel %vm1365, %v4495, -inf
  %4497 = vmax.xlane.f32.xlu0 %v4496
  %v4498 = vpop.xlane.xlu0 %4497
  %v4499 = vsub.f32 %v4495, %v4498
  %v4500 = vmul.f32 %v4499, 1.442695
  %v4501 = vpow.pop %v4500
  %v4502 = vsel %vm1365, %v4501, 0.0
  %4503 = vadd.xlane.f32.xlu0 %v4502
  %v4504 = vpop.xlane.xlu0 %4503
  %v4505 = vrcp.pop %v4504
  %v4506 = vmul.f32 %v4501, %v4505
  %v4507 = vpack.c.bf16 %v4506, %v4506
  %v4508 = vpack.c.bf16 %v872, %v872
  %v4509 = vlaneseq
  %v4510 = vshrl.u32 %v4509, 7
  %v4511 = vsub.s32 0, %v4510
  %v4512 = vrot.slane %v4506, %v4511
  %4514 = vbcast.lane.b32.xlu0 %v4512, 256
  %v4515 = vpop.permute.xlu0 %4514
  %v4516 = vlaneseq
  %v4517 = vshrl.u32 %v4516, 7
  %v4518 = vsub.s32 1, %v4517
  %v4519 = vrot.slane %v4506, %v4518
  %4521 = vbcast.lane.b32.xlu0 %v4519, 256
  %v4522 = vpop.permute.xlu0 %4521
  %v4523 = vlaneseq
  %v4524 = vshrl.u32 %v4523, 7
  %v4525 = vsub.s32 2, %v4524
  %v4526 = vrot.slane %v4506, %v4525
  %4528 = vbcast.lane.b32.xlu0 %v4526, 256
  %v4529 = vpop.permute.xlu0 %4528
  %v4530 = vlaneseq
  %v4531 = vshrl.u32 %v4530, 7
  %v4532 = vsub.s32 3, %v4531
  %v4533 = vrot.slane %v4506, %v4532
  %4535 = vbcast.lane.b32.xlu0 %v4533, 256
  %v4536 = vpop.permute.xlu0 %4535
  %v4537 = vlaneseq
  %v4538 = vshrl.u32 %v4537, 7
  %v4539 = vsub.s32 4, %v4538
  %v4540 = vrot.slane %v4506, %v4539
  %4542 = vbcast.lane.b32.xlu0 %v4540, 256
  %v4543 = vpop.permute.xlu0 %4542
  %v4544 = vlaneseq
  %v4545 = vshrl.u32 %v4544, 7
  %v4546 = vsub.s32 5, %v4545
  %v4547 = vrot.slane %v4506, %v4546
  %4549 = vbcast.lane.b32.xlu0 %v4547, 256
  %v4550 = vpop.permute.xlu0 %4549
  %v4551 = vlaneseq
  %v4552 = vshrl.u32 %v4551, 7
  %v4553 = vsub.s32 6, %v4552
  %v4554 = vrot.slane %v4506, %v4553
  %4556 = vbcast.lane.b32.xlu0 %v4554, 256
  %v4557 = vpop.permute.xlu0 %4556
  %v4558 = vlaneseq
  %v4559 = vshrl.u32 %v4558, 7
  %v4560 = vsub.s32 7, %v4559
  %v4561 = vrot.slane %v4506, %v4560
  %4563 = vbcast.lane.b32.xlu0 %v4561, 256
  %v4564 = vpop.permute.xlu0 %4563
  %v4565 = vmul.f32 %v4515, %v1071
  %v4566 = vmul.f32 %v4522, %v1075
  %v4567 = vmul.f32 %v4529, %v1081
  %v4568 = vmul.f32 %v4536, %v1085
  %v4569 = vmul.f32 %v4543, %v1091
  %v4570 = vmul.f32 %v4550, %v1095
  %v4571 = vmul.f32 %v4557, %v1101
  %v4572 = vmul.f32 %v4564, %v1105
  %v4573 = vsel %vm1235, %v4565, 0.0
  %v4574 = vrot.slane %v4573, 4
  %v4575 = vadd.f32 %v4573, %v4574
  %v4576 = vrot.slane %v4575, 2
  %v4577 = vadd.f32 %v4575, %v4576
  %v4578 = vrot.slane %v4577, 1
  %v4579 = vadd.f32 %v4577, %v4578
  %v4580 = vsel %vm1235, %v4566, 0.0
  %v4581 = vrot.slane %v4580, 4
  %v4582 = vadd.f32 %v4580, %v4581
  %v4583 = vrot.slane %v4582, 2
  %v4584 = vadd.f32 %v4582, %v4583
  %v4585 = vrot.slane %v4584, 1
  %v4586 = vadd.f32 %v4584, %v4585
  %v4587 = vsel %vm1235, %v4567, 0.0
  %v4588 = vrot.slane %v4587, 4
  %v4589 = vadd.f32 %v4587, %v4588
  %v4590 = vrot.slane %v4589, 2
  %v4591 = vadd.f32 %v4589, %v4590
  %v4592 = vrot.slane %v4591, 1
  %v4593 = vadd.f32 %v4591, %v4592
  %v4594 = vsel %vm1235, %v4568, 0.0
  %v4595 = vrot.slane %v4594, 4
  %v4596 = vadd.f32 %v4594, %v4595
  %v4597 = vrot.slane %v4596, 2
  %v4598 = vadd.f32 %v4596, %v4597
  %v4599 = vrot.slane %v4598, 1
  %v4600 = vadd.f32 %v4598, %v4599
  %v4601 = vsel %vm1235, %v4569, 0.0
  %v4602 = vrot.slane %v4601, 4
  %v4603 = vadd.f32 %v4601, %v4602
  %v4604 = vrot.slane %v4603, 2
  %v4605 = vadd.f32 %v4603, %v4604
  %v4606 = vrot.slane %v4605, 1
  %v4607 = vadd.f32 %v4605, %v4606
  %v4608 = vsel %vm1235, %v4570, 0.0
  %v4609 = vrot.slane %v4608, 4
  %v4610 = vadd.f32 %v4608, %v4609
  %v4611 = vrot.slane %v4610, 2
  %v4612 = vadd.f32 %v4610, %v4611
  %v4613 = vrot.slane %v4612, 1
  %v4614 = vadd.f32 %v4612, %v4613
  %v4615 = vsel %vm1235, %v4571, 0.0
  %v4616 = vrot.slane %v4615, 4
  %v4617 = vadd.f32 %v4615, %v4616
  %v4618 = vrot.slane %v4617, 2
  %v4619 = vadd.f32 %v4617, %v4618
  %v4620 = vrot.slane %v4619, 1
  %v4621 = vadd.f32 %v4619, %v4620
  %v4622 = vsel %vm1235, %v4572, 0.0
  %v4623 = vrot.slane %v4622, 4
  %v4624 = vadd.f32 %v4622, %v4623
  %v4625 = vrot.slane %v4624, 2
  %v4626 = vadd.f32 %v4624, %v4625
  %v4627 = vrot.slane %v4626, 1
  %v4628 = vadd.f32 %v4626, %v4627
  %v4637 = vsel %vm1302, %v4586, %v4579
  %v4638 = vsel %vm1304, %v4593, %v4637
  %v4639 = vsel %vm1306, %v4600, %v4638
  %v4640 = vsel %vm1308, %v4607, %v4639
  %v4641 = vsel %vm1310, %v4614, %v4640
  %v4642 = vsel %vm1312, %v4621, %v4641
  %v4643 = vsel %vm1314, %v4628, %v4642
  %v4646 = vsel %vm1365, %v4507, 0
  %v4649 = vsel %vm1518, %v4508, 0
  %4651 = vmatprep.subr.bf16.mxu0 0
  %4652 = vmatpush1.bf16.msra.mxu0 %v4649
  %4653 = vmatprep.subr.bf16.mxu0 0
  %4654 = vmatpush1.bf16.msra.mxu0 0
  %4655 = vmatprep.subr.bf16.mxu0 0
  %4656 = vmatpush1.bf16.msra.mxu0 0
  %4657 = vmatprep.subr.bf16.mxu0 0
  %4658 = vmatpush1.bf16.msra.mxu0 0
  %4659 = vmatprep.subr.bf16.mxu0 0
  %4660 = vmatpush1.bf16.msra.mxu0 0
  %4661 = vmatprep.subr.bf16.mxu0 0
  %4662 = vmatpush1.bf16.msra.mxu0 0
  %4663 = vmatprep.subr.bf16.mxu0 0
  %4664 = vmatpush1.bf16.msra.mxu0 0
  %4665 = vmatprep.subr.bf16.mxu0 0
  %4666 = vmatpush1.bf16.msra.mxu0 0
  %4667 = vmatprep.subr.bf16.mxu0 0
  %4668 = vmatpush1.bf16.msra.mxu0 0
  %4669 = vmatprep.subr.bf16.mxu0 0
  %4670 = vmatpush1.bf16.msra.mxu0 0
  %4671 = vmatprep.subr.bf16.mxu0 0
  %4672 = vmatpush1.bf16.msra.mxu0 0
  %4673 = vmatprep.subr.bf16.mxu0 0
  %4674 = vmatpush1.bf16.msra.mxu0 0
  %4675 = vmatprep.subr.bf16.mxu0 0
  %4676 = vmatpush1.bf16.msra.mxu0 0
  %4677 = vmatprep.subr.bf16.mxu0 0
  %4678 = vmatpush1.bf16.msra.mxu0 0
  %4679 = vmatprep.subr.bf16.mxu0 0
  %4680 = vmatpush1.bf16.msra.mxu0 0
  %4681 = vmatprep.subr.bf16.mxu0 0
  %4682 = vmatpush1.bf16.msra.mxu0 0
  %4683 = vmatprep.mubr.bf16.mxu0 0
  %4684 = vmatmul.mubr.bf16.gmra.mrb[0].mxu0 %v4646
  %v4685 = vpop.f32.mrb[0].mxu0
  %v4686 = vadd.f32 %v4643, %v4685
  %v4687 = vpop.f32.mrb[0].mxu0
  %v4688 = vpop.f32.mrb[0].mxu0
  %v4689 = vpop.f32.mrb[0].mxu0
  %4690 = vdwg.mxu0
  %v4691 = vpack.c.bf16 %v4686, %v4686
  %v4692 = vld [vmem:[%s9 + $0xc0] sm:$0xf]
  %v4693 = vld [vmem:[%s9 + $0xc4] sm:$0xf]
  %v4694 = vld [vmem:[%s9 + $0xc8] sm:$0xf]
  %v4695 = vld [vmem:[%s9 + $0xcc] sm:$0xf]
  %v4696 = vld [vmem:[%s9 + $0xd0] sm:$0xf]
  %v4697 = vld [vmem:[%s9 + $0xd4] sm:$0xf]
  %v4698 = vld [vmem:[%s9 + $0xd8] sm:$0xf]
  %v4699 = vld [vmem:[%s9 + $0xdc] sm:$0xf]
  %v4708 = vunpack.c.l.b16 %v4692
  %v4709 = vunpack.c.l.b16 %v4693
  %v4710 = vunpack.c.l.b16 %v4694
  %v4711 = vunpack.c.l.b16 %v4695
  %v4712 = vunpack.c.l.b16 %v4696
  %v4713 = vunpack.c.l.b16 %v4697
  %v4714 = vunpack.c.l.b16 %v4698
  %v4715 = vunpack.c.l.b16 %v4699
  %v4716 = vpack.c.b16 %v4709, %v4708
  %v4717 = vpack.c.b16 %v4711, %v4710
  %v4718 = vpack.c.b16 %v4713, %v4712
  %v4719 = vpack.c.b16 %v4715, %v4714
  %v4725 = vsel %vm1235, %v4691, 0
  %4727 = vmatprep.subr.bf16.mxu0 0
  %4728 = vmatpush1.bf16.msra.mxu0 %v4716
  %4729 = vmatprep.subr.bf16.mxu0 0
  %4730 = vmatpush1.bf16.msra.mxu0 %v4717
  %4731 = vmatprep.subr.bf16.mxu0 0
  %4732 = vmatpush1.bf16.msra.mxu0 %v4718
  %4733 = vmatprep.subr.bf16.mxu0 0
  %4734 = vmatpush1.bf16.msra.mxu0 %v4719
  %4735 = vmatprep.subr.bf16.mxu0 0
  %4736 = vmatpush1.bf16.msra.mxu0 0
  %4737 = vmatprep.subr.bf16.mxu0 0
  %4738 = vmatpush1.bf16.msra.mxu0 0
  %4739 = vmatprep.subr.bf16.mxu0 0
  %4740 = vmatpush1.bf16.msra.mxu0 0
  %4741 = vmatprep.subr.bf16.mxu0 0
  %4742 = vmatpush1.bf16.msra.mxu0 0
  %4743 = vmatprep.subr.bf16.mxu0 0
  %4744 = vmatpush1.bf16.msra.mxu0 0
  %4745 = vmatprep.subr.bf16.mxu0 0
  %4746 = vmatpush1.bf16.msra.mxu0 0
  %4747 = vmatprep.subr.bf16.mxu0 0
  %4748 = vmatpush1.bf16.msra.mxu0 0
  %4749 = vmatprep.subr.bf16.mxu0 0
  %4750 = vmatpush1.bf16.msra.mxu0 0
  %4751 = vmatprep.subr.bf16.mxu0 0
  %4752 = vmatpush1.bf16.msra.mxu0 0
  %4753 = vmatprep.subr.bf16.mxu0 0
  %4754 = vmatpush1.bf16.msra.mxu0 0
  %4755 = vmatprep.subr.bf16.mxu0 0
  %4756 = vmatpush1.bf16.msra.mxu0 0
  %4757 = vmatprep.subr.bf16.mxu0 0
  %4758 = vmatpush1.bf16.msra.mxu0 0
  %4759 = vmatprep.mubr.bf16.mxu0 0
  %4760 = vmatmul.mubr.bf16.gmra.mrb[0].mxu0 %v4725
  %v4761 = vpop.f32.mrb[0].mxu0
  %v4762 = vadd.f32 0.0, %v4761
  %v4763 = vpop.f32.mrb[0].mxu0
  %v4764 = vpop.f32.mrb[0].mxu0
  %v4765 = vpop.f32.mrb[0].mxu0
  %4766 = vdwg.mxu0
  %v4767 = vadd.f32 %v4269, %v4762
  %v4768 = vmul.f32 %v764, %v1573
  %v4769 = vmul.f32 %v791, %v1578
  %v4770 = vadd.f32 %v4768, %v4769
  %v4771 = vmul.f32 %v818, %v1584
  %v4772 = vmul.f32 %v845, %v1589
  %v4773 = vadd.f32 %v4771, %v4772
  %v4774 = vpack.c.bf16 %v4770, %v4770
  %v4775 = vpack.c.bf16 %v4773, %v4773
  %v4777 = vcombine.high %v4770, %v4770
  %v4779 = vunpack.c.l.s4 1966171168
  %v4780 = vunpack.c.0.s8 %v4779
  %v4781 = vlaneseq
  %v4782 = vshrl.u32 %v4781, 7
  %v4783 = vsub.s32 %v4780, %v4782
  %v4784 = vrot.slane %v4770, %v4783
  %v4786 = vunpack.c.l.s4 1966171168
  %v4787 = vunpack.c.0.s8 %v4786
  %v4788 = vlaneseq
  %v4789 = vshrl.u32 %v4788, 7
  %v4790 = vsub.s32 %v4787, %v4789
  %v4791 = vrot.slane %v4777, %v4790
  %v4792 = vcombine.high %v4784, %v4784
  %v4793 = vcombine.high %v4791, %v4791
  %v4795 = vunpack.c.l.s4 1966171168
  %v4796 = vunpack.c.0.s8 %v4795
  %v4797 = vlaneseq
  %v4798 = vshrl.u32 %v4797, 7
  %v4799 = vsub.s32 %v4796, %v4798
  %v4800 = vrot.slane %v4784, %v4799
  %v4802 = vunpack.c.l.s4 1966171168
  %v4803 = vunpack.c.0.s8 %v4802
  %v4804 = vlaneseq
  %v4805 = vshrl.u32 %v4804, 7
  %v4806 = vsub.s32 %v4803, %v4805
  %v4807 = vrot.slane %v4791, %v4806
  %v4809 = vunpack.c.l.s4 1966171168
  %v4810 = vunpack.c.0.s8 %v4809
  %v4811 = vlaneseq
  %v4812 = vshrl.u32 %v4811, 7
  %v4813 = vsub.s32 %v4810, %v4812
  %v4814 = vrot.slane %v4792, %v4813
  %v4816 = vunpack.c.l.s4 1966171168
  %v4817 = vunpack.c.0.s8 %v4816
  %v4818 = vlaneseq
  %v4819 = vshrl.u32 %v4818, 7
  %v4820 = vsub.s32 %v4817, %v4819
  %v4821 = vrot.slane %v4793, %v4820
  %v4822 = vcombine.high %v4800, %v4800
  %v4823 = vcombine.high %v4807, %v4807
  %v4824 = vcombine.high %v4814, %v4814
  %v4825 = vcombine.high %v4821, %v4821
  %v4826 = vlaneseq
  %v4827 = vshrl.u32 %v4826, 7
  %v4828 = vsub.s32 0, %v4827
  %v4829 = vrot.slane %v4800, %v4828
  %v4830 = vlaneseq
  %v4831 = vshrl.u32 %v4830, 7
  %v4832 = vsub.s32 0, %v4831
  %v4833 = vrot.slane %v4814, %v4832
  %v4834 = vlaneseq
  %v4835 = vshrl.u32 %v4834, 7
  %v4836 = vsub.s32 0, %v4835
  %v4837 = vrot.slane %v4822, %v4836
  %v4838 = vlaneseq
  %v4839 = vshrl.u32 %v4838, 7
  %v4840 = vsub.s32 0, %v4839
  %v4841 = vrot.slane %v4824, %v4840
  %v4842 = vlaneseq
  %v4843 = vshrl.u32 %v4842, 7
  %v4844 = vsub.s32 0, %v4843
  %v4845 = vrot.slane %v4807, %v4844
  %v4846 = vlaneseq
  %v4847 = vshrl.u32 %v4846, 7
  %v4848 = vsub.s32 0, %v4847
  %v4849 = vrot.slane %v4821, %v4848
  %v4850 = vlaneseq
  %v4851 = vshrl.u32 %v4850, 7
  %v4852 = vsub.s32 0, %v4851
  %v4853 = vrot.slane %v4823, %v4852
  %v4854 = vlaneseq
  %v4855 = vshrl.u32 %v4854, 7
  %v4856 = vsub.s32 0, %v4855
  %v4857 = vrot.slane %v4825, %v4856
  %v4866 = vmul.f32 %v4829, %v1071
  %v4867 = vmul.f32 %v4833, %v1075
  %v4868 = vmul.f32 %v4837, %v1081
  %v4869 = vmul.f32 %v4841, %v1085
  %v4870 = vmul.f32 %v4845, %v1091
  %v4871 = vmul.f32 %v4849, %v1095
  %v4872 = vmul.f32 %v4853, %v1101
  %v4873 = vmul.f32 %v4857, %v1105
  %4882 = vrot.lane.b32.xlu0 %v4866, 64
  %v4883 = vpop.permute.xlu0 %4882
  %4884 = vrot.lane.b32.xlu0 %v4867, 64
  %v4885 = vpop.permute.xlu0 %4884
  %4886 = vrot.lane.b32.xlu0 %v4868, 64
  %v4887 = vpop.permute.xlu0 %4886
  %4888 = vrot.lane.b32.xlu0 %v4869, 64
  %v4889 = vpop.permute.xlu0 %4888
  %4890 = vrot.lane.b32.xlu0 %v4870, 64
  %v4891 = vpop.permute.xlu0 %4890
  %4892 = vrot.lane.b32.xlu0 %v4871, 64
  %v4893 = vpop.permute.xlu0 %4892
  %4894 = vrot.lane.b32.xlu0 %v4872, 64
  %v4895 = vpop.permute.xlu0 %4894
  %4896 = vrot.lane.b32.xlu0 %v4873, 64
  %v4897 = vpop.permute.xlu0 %4896
  %v4906 = vsel %vm1235, %v4883, 0.0
  %4907 = vadd.xlane.f32.xlu0 %v4906
  %v4908 = vpop.xlane.xlu0 %4907
  %v4909 = vsel %vm1235, %v4885, 0.0
  %4910 = vadd.xlane.f32.xlu0 %v4909
  %v4911 = vpop.xlane.xlu0 %4910
  %v4912 = vsel %vm1235, %v4887, 0.0
  %4913 = vadd.xlane.f32.xlu0 %v4912
  %v4914 = vpop.xlane.xlu0 %4913
  %v4915 = vsel %vm1235, %v4889, 0.0
  %4916 = vadd.xlane.f32.xlu0 %v4915
  %v4917 = vpop.xlane.xlu0 %4916
  %v4918 = vsel %vm1235, %v4891, 0.0
  %4919 = vadd.xlane.f32.xlu0 %v4918
  %v4920 = vpop.xlane.xlu0 %4919
  %v4921 = vsel %vm1235, %v4893, 0.0
  %4922 = vadd.xlane.f32.xlu0 %v4921
  %v4923 = vpop.xlane.xlu0 %4922
  %v4924 = vsel %vm1235, %v4895, 0.0
  %4925 = vadd.xlane.f32.xlu0 %v4924
  %v4926 = vpop.xlane.xlu0 %4925
  %v4927 = vsel %vm1235, %v4897, 0.0
  %4928 = vadd.xlane.f32.xlu0 %v4927
  %v4929 = vpop.xlane.xlu0 %4928
  %4931 = vrot.lane.b32.xlu0 %v4774, 64
  %v4932 = vpop.permute.xlu0 %4931
  %4934 = vrot.lane.b32.xlu0 %v4775, 64
  %v4935 = vpop.permute.xlu0 %4934
  %v4944 = vlaneseq
  %v4945 = vshrl.u32 %v4944, 7
  %v4946 = vsub.s32 %v1269, %v4945
  %v4947 = vrot.slane %v4908, %v4946
  %v4948 = vlaneseq
  %v4949 = vshrl.u32 %v4948, 7
  %v4950 = vsub.s32 %v1269, %v4949
  %v4951 = vrot.slane %v4911, %v4950
  %v4952 = vlaneseq
  %v4953 = vshrl.u32 %v4952, 7
  %v4954 = vsub.s32 %v1269, %v4953
  %v4955 = vrot.slane %v4914, %v4954
  %v4956 = vlaneseq
  %v4957 = vshrl.u32 %v4956, 7
  %v4958 = vsub.s32 %v1269, %v4957
  %v4959 = vrot.slane %v4917, %v4958
  %v4960 = vlaneseq
  %v4961 = vshrl.u32 %v4960, 7
  %v4962 = vsub.s32 %v1269, %v4961
  %v4963 = vrot.slane %v4920, %v4962
  %v4964 = vlaneseq
  %v4965 = vshrl.u32 %v4964, 7
  %v4966 = vsub.s32 %v1269, %v4965
  %v4967 = vrot.slane %v4923, %v4966
  %v4968 = vlaneseq
  %v4969 = vshrl.u32 %v4968, 7
  %v4970 = vsub.s32 %v1269, %v4969
  %v4971 = vrot.slane %v4926, %v4970
  %v4972 = vlaneseq
  %v4973 = vshrl.u32 %v4972, 7
  %v4974 = vsub.s32 %v1269, %v4973
  %v4975 = vrot.slane %v4929, %v4974
  %v4976 = vsel %vm1302, %v4951, %v4947
  %v4977 = vsel %vm1304, %v4955, %v4976
  %v4978 = vsel %vm1306, %v4959, %v4977
  %v4979 = vsel %vm1308, %v4963, %v4978
  %v4980 = vsel %vm1310, %v4967, %v4979
  %v4981 = vsel %vm1312, %v4971, %v4980
  %v4982 = vsel %vm1314, %v4975, %v4981
  %v4985 = vsel %vm1235, %v4932, 0
  %v4988 = vsel %vm1235, %v4935, 0
  %4990 = vmatprep.subr.bf16.mxu0 0
  %4991 = vmatpush1.bf16.xpose.msra.mxu0 %v4988
  %4992 = vmatprep.subr.bf16.mxu0 0
  %4993 = vmatpush1.bf16.xpose.msra.mxu0 0
  %4994 = vmatprep.subr.bf16.mxu0 0
  %4995 = vmatpush1.bf16.xpose.msra.mxu0 0
  %4996 = vmatprep.subr.bf16.mxu0 0
  %4997 = vmatpush1.bf16.xpose.msra.mxu0 0
  %4998 = vmatprep.subr.bf16.mxu0 0
  %4999 = vmatpush1.bf16.xpose.msra.mxu0 0
  %5000 = vmatprep.subr.bf16.mxu0 0
  %5001 = vmatpush1.bf16.xpose.msra.mxu0 0
  %5002 = vmatprep.subr.bf16.mxu0 0
  %5003 = vmatpush1.bf16.xpose.msra.mxu0 0
  %5004 = vmatprep.subr.bf16.mxu0 0
  %5005 = vmatpush1.bf16.xpose.msra.mxu0 0
  %5006 = vmatprep.subr.bf16.mxu0 0
  %5007 = vmatpush1.bf16.xpose.msra.mxu0 0
  %5008 = vmatprep.subr.bf16.mxu0 0
  %5009 = vmatpush1.bf16.xpose.msra.mxu0 0
  %5010 = vmatprep.subr.bf16.mxu0 0
  %5011 = vmatpush1.bf16.xpose.msra.mxu0 0
  %5012 = vmatprep.subr.bf16.mxu0 0
  %5013 = vmatpush1.bf16.xpose.msra.mxu0 0
  %5014 = vmatprep.subr.bf16.mxu0 0
  %5015 = vmatpush1.bf16.xpose.msra.mxu0 0
  %5016 = vmatprep.subr.bf16.mxu0 0
  %5017 = vmatpush1.bf16.xpose.msra.mxu0 0
  %5018 = vmatprep.subr.bf16.mxu0 0
  %5019 = vmatpush1.bf16.xpose.msra.mxu0 0
  %5020 = vmatprep.subr.bf16.mxu0 0
  %5021 = vmatpush1.bf16.xpose.msra.mxu0 0
  %5022 = vmatprep.mubr.bf16.mxu0 0
  %5023 = vmatmul.mubr.bf16.gmra.mrb[0].mxu0 %v4985
  %v5024 = vpop.f32.mrb[0].mxu0
  %v5025 = vadd.f32 %v4982, %v5024
  %v5026 = vpop.f32.mrb[0].mxu0
  %v5027 = vpop.f32.mrb[0].mxu0
  %v5028 = vpop.f32.mrb[0].mxu0
  %5029 = vdwg.mxu0
  %v5030 = vmul.f32 %v5025, 0.125
  %v5031 = vsel %vm1128, %v5030, -3.4028235e+38
  %v5032 = vsel %vm1365, %v5031, -inf
  %5033 = vmax.xlane.f32.xlu0 %v5032
  %v5034 = vpop.xlane.xlu0 %5033
  %v5035 = vsub.f32 %v5031, %v5034
  %v5036 = vmul.f32 %v5035, 1.442695
  %v5037 = vpow.pop %v5036
  %v5038 = vsel %vm1365, %v5037, 0.0
  %5039 = vadd.xlane.f32.xlu0 %v5038
  %v5040 = vpop.xlane.xlu0 %5039
  %v5041 = vrcp.pop %v5040
  %v5042 = vmul.f32 %v5037, %v5041
  %v5043 = vpack.c.bf16 %v5042, %v5042
  %v5044 = vlaneseq
  %v5045 = vshrl.u32 %v5044, 7
  %v5046 = vsub.s32 0, %v5045
  %v5047 = vrot.slane %v5042, %v5046
  %5049 = vbcast.lane.b32.xlu0 %v5047, 256
  %v5050 = vpop.permute.xlu0 %5049
  %v5051 = vlaneseq
  %v5052 = vshrl.u32 %v5051, 7
  %v5053 = vsub.s32 1, %v5052
  %v5054 = vrot.slane %v5042, %v5053
  %5056 = vbcast.lane.b32.xlu0 %v5054, 256
  %v5057 = vpop.permute.xlu0 %5056
  %v5058 = vlaneseq
  %v5059 = vshrl.u32 %v5058, 7
  %v5060 = vsub.s32 2, %v5059
  %v5061 = vrot.slane %v5042, %v5060
  %5063 = vbcast.lane.b32.xlu0 %v5061, 256
  %v5064 = vpop.permute.xlu0 %5063
  %v5065 = vlaneseq
  %v5066 = vshrl.u32 %v5065, 7
  %v5067 = vsub.s32 3, %v5066
  %v5068 = vrot.slane %v5042, %v5067
  %5070 = vbcast.lane.b32.xlu0 %v5068, 256
  %v5071 = vpop.permute.xlu0 %5070
  %v5072 = vlaneseq
  %v5073 = vshrl.u32 %v5072, 7
  %v5074 = vsub.s32 4, %v5073
  %v5075 = vrot.slane %v5042, %v5074
  %5077 = vbcast.lane.b32.xlu0 %v5075, 256
  %v5078 = vpop.permute.xlu0 %5077
  %v5079 = vlaneseq
  %v5080 = vshrl.u32 %v5079, 7
  %v5081 = vsub.s32 5, %v5080
  %v5082 = vrot.slane %v5042, %v5081
  %5084 = vbcast.lane.b32.xlu0 %v5082, 256
  %v5085 = vpop.permute.xlu0 %5084
  %v5086 = vlaneseq
  %v5087 = vshrl.u32 %v5086, 7
  %v5088 = vsub.s32 6, %v5087
  %v5089 = vrot.slane %v5042, %v5088
  %5091 = vbcast.lane.b32.xlu0 %v5089, 256
  %v5092 = vpop.permute.xlu0 %5091
  %v5093 = vlaneseq
  %v5094 = vshrl.u32 %v5093, 7
  %v5095 = vsub.s32 7, %v5094
  %v5096 = vrot.slane %v5042, %v5095
  %5098 = vbcast.lane.b32.xlu0 %v5096, 256
  %v5099 = vpop.permute.xlu0 %5098
  %v5100 = vmul.f32 %v5050, %v1071
  %v5101 = vmul.f32 %v5057, %v1075
  %v5102 = vmul.f32 %v5064, %v1081
  %v5103 = vmul.f32 %v5071, %v1085
  %v5104 = vmul.f32 %v5078, %v1091
  %v5105 = vmul.f32 %v5085, %v1095
  %v5106 = vmul.f32 %v5092, %v1101
  %v5107 = vmul.f32 %v5099, %v1105
  %v5108 = vsel %vm1927, %v5100, 0.0
  %v5109 = vrot.slane %v5108, 4
  %v5110 = vadd.f32 %v5108, %v5109
  %v5111 = vrot.slane %v5110, 2
  %v5112 = vadd.f32 %v5110, %v5111
  %v5113 = vrot.slane %v5112, 1
  %v5114 = vadd.f32 %v5112, %v5113
  %v5115 = vsel %vm1927, %v5101, 0.0
  %v5116 = vrot.slane %v5115, 4
  %v5117 = vadd.f32 %v5115, %v5116
  %v5118 = vrot.slane %v5117, 2
  %v5119 = vadd.f32 %v5117, %v5118
  %v5120 = vrot.slane %v5119, 1
  %v5121 = vadd.f32 %v5119, %v5120
  %v5122 = vsel %vm1927, %v5102, 0.0
  %v5123 = vrot.slane %v5122, 4
  %v5124 = vadd.f32 %v5122, %v5123
  %v5125 = vrot.slane %v5124, 2
  %v5126 = vadd.f32 %v5124, %v5125
  %v5127 = vrot.slane %v5126, 1
  %v5128 = vadd.f32 %v5126, %v5127
  %v5129 = vsel %vm1927, %v5103, 0.0
  %v5130 = vrot.slane %v5129, 4
  %v5131 = vadd.f32 %v5129, %v5130
  %v5132 = vrot.slane %v5131, 2
  %v5133 = vadd.f32 %v5131, %v5132
  %v5134 = vrot.slane %v5133, 1
  %v5135 = vadd.f32 %v5133, %v5134
  %v5136 = vsel %vm1927, %v5104, 0.0
  %v5137 = vrot.slane %v5136, 4
  %v5138 = vadd.f32 %v5136, %v5137
  %v5139 = vrot.slane %v5138, 2
  %v5140 = vadd.f32 %v5138, %v5139
  %v5141 = vrot.slane %v5140, 1
  %v5142 = vadd.f32 %v5140, %v5141
  %v5143 = vsel %vm1927, %v5105, 0.0
  %v5144 = vrot.slane %v5143, 4
  %v5145 = vadd.f32 %v5143, %v5144
  %v5146 = vrot.slane %v5145, 2
  %v5147 = vadd.f32 %v5145, %v5146
  %v5148 = vrot.slane %v5147, 1
  %v5149 = vadd.f32 %v5147, %v5148
  %v5150 = vsel %vm1927, %v5106, 0.0
  %v5151 = vrot.slane %v5150, 4
  %v5152 = vadd.f32 %v5150, %v5151
  %v5153 = vrot.slane %v5152, 2
  %v5154 = vadd.f32 %v5152, %v5153
  %v5155 = vrot.slane %v5154, 1
  %v5156 = vadd.f32 %v5154, %v5155
  %v5157 = vsel %vm1927, %v5107, 0.0
  %v5158 = vrot.slane %v5157, 4
  %v5159 = vadd.f32 %v5157, %v5158
  %v5160 = vrot.slane %v5159, 2
  %v5161 = vadd.f32 %v5159, %v5160
  %v5162 = vrot.slane %v5161, 1
  %v5163 = vadd.f32 %v5161, %v5162
  %5165 = vrot.lane.b32.xlu0 %v4508, 64
  %v5166 = vpop.permute.xlu0 %5165
  %v5175 = vsel %vm1302, %v5121, %v5114
  %v5176 = vsel %vm1304, %v5128, %v5175
  %v5177 = vsel %vm1306, %v5135, %v5176
  %v5178 = vsel %vm1308, %v5142, %v5177
  %v5179 = vsel %vm1310, %v5149, %v5178
  %v5180 = vsel %vm1312, %v5156, %v5179
  %v5181 = vsel %vm1314, %v5163, %v5180
  %5182 = vrot.lane.b32.xlu0 %v5181, 64
  %v5183 = vpop.permute.xlu0 %5182
  %v5186 = vsel %vm1365, %v5043, 0
  %v5189 = vsel %vm1518, %v5166, 0
  %5191 = vmatprep.subr.bf16.mxu0 0
  %5192 = vmatpush1.bf16.msra.mxu0 %v5189
  %5193 = vmatprep.subr.bf16.mxu0 0
  %5194 = vmatpush1.bf16.msra.mxu0 0
  %5195 = vmatprep.subr.bf16.mxu0 0
  %5196 = vmatpush1.bf16.msra.mxu0 0
  %5197 = vmatprep.subr.bf16.mxu0 0
  %5198 = vmatpush1.bf16.msra.mxu0 0
  %5199 = vmatprep.subr.bf16.mxu0 0
  %5200 = vmatpush1.bf16.msra.mxu0 0
  %5201 = vmatprep.subr.bf16.mxu0 0
  %5202 = vmatpush1.bf16.msra.mxu0 0
  %5203 = vmatprep.subr.bf16.mxu0 0
  %5204 = vmatpush1.bf16.msra.mxu0 0
  %5205 = vmatprep.subr.bf16.mxu0 0
  %5206 = vmatpush1.bf16.msra.mxu0 0
  %5207 = vmatprep.subr.bf16.mxu0 0
  %5208 = vmatpush1.bf16.msra.mxu0 0
  %5209 = vmatprep.subr.bf16.mxu0 0
  %5210 = vmatpush1.bf16.msra.mxu0 0
  %5211 = vmatprep.subr.bf16.mxu0 0
  %5212 = vmatpush1.bf16.msra.mxu0 0
  %5213 = vmatprep.subr.bf16.mxu0 0
  %5214 = vmatpush1.bf16.msra.mxu0 0
  %5215 = vmatprep.subr.bf16.mxu0 0
  %5216 = vmatpush1.bf16.msra.mxu0 0
  %5217 = vmatprep.subr.bf16.mxu0 0
  %5218 = vmatpush1.bf16.msra.mxu0 0
  %5219 = vmatprep.subr.bf16.mxu0 0
  %5220 = vmatpush1.bf16.msra.mxu0 0
  %5221 = vmatprep.subr.bf16.mxu0 0
  %5222 = vmatpush1.bf16.msra.mxu0 0
  %5223 = vmatprep.mubr.bf16.mxu0 0
  %5224 = vmatmul.mubr.bf16.gmra.mrb[0].mxu0 %v5186
  %v5225 = vpop.f32.mrb[0].mxu0
  %v5226 = vadd.f32 %v5183, %v5225
  %v5227 = vpop.f32.mrb[0].mxu0
  %v5228 = vpop.f32.mrb[0].mxu0
  %v5229 = vpop.f32.mrb[0].mxu0
  %5230 = vdwg.mxu0
  %v5231 = vpack.c.bf16 %v5226, %v5226
  %v5232 = vld [vmem:[%s9 + $0xe0] sm:$0xf]
  %v5233 = vld [vmem:[%s9 + $0xe4] sm:$0xf]
  %v5234 = vld [vmem:[%s9 + $0xe8] sm:$0xf]
  %v5235 = vld [vmem:[%s9 + $0xec] sm:$0xf]
  %v5236 = vld [vmem:[%s9 + $0xf0] sm:$0xf]
  %v5237 = vld [vmem:[%s9 + $0xf4] sm:$0xf]
  %v5238 = vld [vmem:[%s9 + $0xf8] sm:$0xf]
  %v5239 = vld [vmem:[%s9 + $0xfc] sm:$0xf]
  %v5248 = vunpack.c.l.b16 %v5232
  %v5249 = vunpack.c.l.b16 %v5233
  %v5250 = vunpack.c.l.b16 %v5234
  %v5251 = vunpack.c.l.b16 %v5235
  %v5252 = vunpack.c.l.b16 %v5236
  %v5253 = vunpack.c.l.b16 %v5237
  %v5254 = vunpack.c.l.b16 %v5238
  %v5255 = vunpack.c.l.b16 %v5239
  %v5256 = vpack.c.b16 %v5249, %v5248
  %v5257 = vpack.c.b16 %v5251, %v5250
  %v5258 = vpack.c.b16 %v5253, %v5252
  %v5259 = vpack.c.b16 %v5255, %v5254
  %v5265 = vsel %vm1235, %v5231, 0
  %5267 = vmatprep.subr.bf16.mxu0 0
  %5268 = vmatpush1.bf16.msra.mxu0 %v5256
  %5269 = vmatprep.subr.bf16.mxu0 0
  %5270 = vmatpush1.bf16.msra.mxu0 %v5257
  %5271 = vmatprep.subr.bf16.mxu0 0
  %5272 = vmatpush1.bf16.msra.mxu0 %v5258
  %5273 = vmatprep.subr.bf16.mxu0 0
  %5274 = vmatpush1.bf16.msra.mxu0 %v5259
  %5275 = vmatprep.subr.bf16.mxu0 0
  %5276 = vmatpush1.bf16.msra.mxu0 0
  %5277 = vmatprep.subr.bf16.mxu0 0
  %5278 = vmatpush1.bf16.msra.mxu0 0
  %5279 = vmatprep.subr.bf16.mxu0 0
  %5280 = vmatpush1.bf16.msra.mxu0 0
  %5281 = vmatprep.subr.bf16.mxu0 0
  %5282 = vmatpush1.bf16.msra.mxu0 0
  %5283 = vmatprep.subr.bf16.mxu0 0
  %5284 = vmatpush1.bf16.msra.mxu0 0
  %5285 = vmatprep.subr.bf16.mxu0 0
  %5286 = vmatpush1.bf16.msra.mxu0 0
  %5287 = vmatprep.subr.bf16.mxu0 0
  %5288 = vmatpush1.bf16.msra.mxu0 0
  %5289 = vmatprep.subr.bf16.mxu0 0
  %5290 = vmatpush1.bf16.msra.mxu0 0
  %5291 = vmatprep.subr.bf16.mxu0 0
  %5292 = vmatpush1.bf16.msra.mxu0 0
  %5293 = vmatprep.subr.bf16.mxu0 0
  %5294 = vmatpush1.bf16.msra.mxu0 0
  %5295 = vmatprep.subr.bf16.mxu0 0
  %5296 = vmatpush1.bf16.msra.mxu0 0
  %5297 = vmatprep.subr.bf16.mxu0 0
  %5298 = vmatpush1.bf16.msra.mxu0 0
  %5299 = vmatprep.mubr.bf16.mxu0 0
  %5300 = vmatmul.mubr.bf16.gmra.mrb[0].mxu0 %v5265
  %v5301 = vpop.f32.mrb[0].mxu0
  %v5302 = vadd.f32 0.0, %v5301
  %v5303 = vpop.f32.mrb[0].mxu0
  %v5304 = vpop.f32.mrb[0].mxu0
  %v5305 = vpop.f32.mrb[0].mxu0
  %5306 = vdwg.mxu0
  %v5307 = vadd.f32 %v4767, %v5302
  %v5308 = vld [vmem:[%s6 + $0x20] ss:$0 sm:$0xff]
  %v5309 = vadd.f32 %v5307, %v5308
  %v5310 = vld [vmem:[%s6 + $0x21] ss:$0 sm:$0xff]
  %v5311 = vmul.f32 %v5309, %v5310
  %v5312 = vsel %vm48, %v5311, 0.0
  %5313 = vadd.xlane.f32.xlu0 %v5312
  %v5314 = vpop.xlane.xlu0 %5313
  %v5315 = vld [vmem:[%s6 + $0x22] ss:$0 sm:$0xff]
  %v5316 = vmul.f32 %v45, %v5315
  %v5317 = vsel %vm48, %v5316, 0.0
  %5318 = vadd.xlane.f32.xlu0 %v5317
  %v5319 = vpop.xlane.xlu0 %5318
  %v5320 = vadd.f32 %v5314, %v5319
  %v5321 = vxor.u32 %v5320, 2147483648
  %v5322 = vmul.f32 %v5321, 1.442695
  %v5323 = vpow.pop %v5322
  %v5324 = vadd.f32 %v5323, 1.0
  %v5325 = vrcp.pop %v5324
  %v5326 = vmul.f32 1.0, %v5325
  %v5327 = vmul.f32 %v5309, %v5326
  %v5328 = vsub.f32 1.0, %v5326
  %v5329 = vmul.f32 %v45, %v5328
  %v5330 = vadd.f32 %v5327, %v5329
  %v5331 = vld [vmem:[%s6 + $0x23] ss:$0 sm:$0xff]
  %v5332 = vld [vmem:[%s6 + $0x24] ss:$0 sm:$0xff]
  %v5333 = vsel %vm48, %v5330, 0.0
  %5334 = vadd.xlane.f32.xlu0 %v5333
  %v5335 = vpop.xlane.xlu0 %5334
  %v5336 = vmul.f32 %v5335, %v52
  %v5337 = vsub.f32 %v5330, %v5336
  %v5338 = vmul.f32 %v5337, %v5337
  %v5339 = vsel %vm48, %v5338, 0.0
  %5340 = vadd.xlane.f32.xlu0 %v5339
  %v5341 = vpop.xlane.xlu0 %5340
  %v5342 = vmul.f32 %v5341, %v52
  %v5343 = vadd.f32 %v5342, 1e-05
  %v5344 = vrsqrt.pop %v5343
  %v5345 = vmul.f32 %v5337, %v5344
  %v5346 = vmul.f32 %v5345, %v5331
  %v5347 = vadd.f32 %v5346, %v5332
  %v5348 = vpack.c.bf16 %v5347, %v5347
  %v5349 = vld [vmem:[%s10] sm:$0xf]
  %v5350 = vld [vmem:[%s10 + $0x4] sm:$0xf]
  %v5351 = vld [vmem:[%s10 + $0x8] sm:$0xf]
  %v5352 = vld [vmem:[%s10 + $0xc] sm:$0xf]
  %v5353 = vld [vmem:[%s6 + $0x25] ss:$0 sm:$0xff]
  %v5358 = vunpack.c.l.b16 %v5349
  %v5359 = vunpack.c.l.b16 %v5350
  %v5360 = vunpack.c.l.b16 %v5351
  %v5361 = vunpack.c.l.b16 %v5352
  %v5362 = vpack.c.b16 %v5359, %v5358
  %v5363 = vpack.c.b16 %v5361, %v5360
  %v5367 = vsel %vm48, %v5348, 0
  %5369 = vmatprep.subr.bf16.mxu0 0
  %5370 = vmatpush1.bf16.msra.mxu0 %v5362
  %5371 = vmatprep.subr.bf16.mxu0 0
  %5372 = vmatpush1.bf16.msra.mxu0 %v5363
  %5373 = vmatprep.subr.bf16.mxu0 0
  %5374 = vmatpush1.bf16.msra.mxu0 0
  %5375 = vmatprep.subr.bf16.mxu0 0
  %5376 = vmatpush1.bf16.msra.mxu0 0
  %5377 = vmatprep.subr.bf16.mxu0 0
  %5378 = vmatpush1.bf16.msra.mxu0 0
  %5379 = vmatprep.subr.bf16.mxu0 0
  %5380 = vmatpush1.bf16.msra.mxu0 0
  %5381 = vmatprep.subr.bf16.mxu0 0
  %5382 = vmatpush1.bf16.msra.mxu0 0
  %5383 = vmatprep.subr.bf16.mxu0 0
  %5384 = vmatpush1.bf16.msra.mxu0 0
  %5385 = vmatprep.subr.bf16.mxu0 0
  %5386 = vmatpush1.bf16.msra.mxu0 0
  %5387 = vmatprep.subr.bf16.mxu0 0
  %5388 = vmatpush1.bf16.msra.mxu0 0
  %5389 = vmatprep.subr.bf16.mxu0 0
  %5390 = vmatpush1.bf16.msra.mxu0 0
  %5391 = vmatprep.subr.bf16.mxu0 0
  %5392 = vmatpush1.bf16.msra.mxu0 0
  %5393 = vmatprep.subr.bf16.mxu0 0
  %5394 = vmatpush1.bf16.msra.mxu0 0
  %5395 = vmatprep.subr.bf16.mxu0 0
  %5396 = vmatpush1.bf16.msra.mxu0 0
  %5397 = vmatprep.subr.bf16.mxu0 0
  %5398 = vmatpush1.bf16.msra.mxu0 0
  %5399 = vmatprep.subr.bf16.mxu0 0
  %5400 = vmatpush1.bf16.msra.mxu0 0
  %5401 = vmatprep.mubr.bf16.mxu0 0
  %5402 = vmatmul.mubr.bf16.gmra.mrb[0].mxu0 %v5367
  %v5403 = vpop.f32.mrb[0].mxu0
  %v5404 = vadd.f32 %v5353, %v5403
  %v5405 = vpop.f32.mrb[0].mxu0
  %v5406 = vpop.f32.mrb[0].mxu0
  %v5407 = vpop.f32.mrb[0].mxu0
  %5408 = vdwg.mxu0
  %v5409 = vmul.f32 %v5404, 0.5
  %v5410 = vmul.f32 %v5404, 0.044715
  %v5411 = vmul.f32 %v5410, %v5404
  %v5412 = vmul.f32 %v5411, %v5404
  %v5413 = vadd.f32 %v5404, %v5412
  %v5414 = vmul.f32 %v5413, 0.7978846
  %v5415 = vtanh.pop %v5414
  %v5416 = vadd.f32 %v5415, 1.0
  %v5417 = vmul.f32 %v5409, %v5416
  %v5418 = vpack.c.bf16 %v5417, %v5417
  %v5419 = vld [vmem:[%s11] sm:$0xf]
  %v5420 = vld [vmem:[%s11 + $0x4] sm:$0xf]
  %v5421 = vld [vmem:[%s11 + $0x8] sm:$0xf]
  %v5422 = vld [vmem:[%s11 + $0xc] sm:$0xf]
  %v5423 = vld [vmem:[%s11 + $0x10] sm:$0xf]
  %v5424 = vld [vmem:[%s11 + $0x14] sm:$0xf]
  %v5425 = vld [vmem:[%s11 + $0x18] sm:$0xf]
  %v5426 = vld [vmem:[%s11 + $0x1c] sm:$0xf]
  %v5427 = vld [vmem:[%s11 + $0x20] sm:$0xf]
  %v5428 = vld [vmem:[%s11 + $0x24] sm:$0xf]
  %v5429 = vld [vmem:[%s11 + $0x28] sm:$0xf]
  %v5430 = vld [vmem:[%s11 + $0x2c] sm:$0xf]
  %v5431 = vld [vmem:[%s11 + $0x30] sm:$0xf]
  %v5432 = vld [vmem:[%s11 + $0x34] sm:$0xf]
  %v5433 = vld [vmem:[%s11 + $0x38] sm:$0xf]
  %v5434 = vld [vmem:[%s11 + $0x3c] sm:$0xf]
  %v5435 = vld [vmem:[%s6 + $0x26] ss:$0 sm:$0xff]
  %v5452 = vunpack.c.l.b16 %v5419
  %v5453 = vunpack.c.l.b16 %v5420
  %v5454 = vunpack.c.l.b16 %v5421
  %v5455 = vunpack.c.l.b16 %v5422
  %v5456 = vunpack.c.l.b16 %v5423
  %v5457 = vunpack.c.l.b16 %v5424
  %v5458 = vunpack.c.l.b16 %v5425
  %v5459 = vunpack.c.l.b16 %v5426
  %v5460 = vunpack.c.l.b16 %v5427
  %v5461 = vunpack.c.l.b16 %v5428
  %v5462 = vunpack.c.l.b16 %v5429
  %v5463 = vunpack.c.l.b16 %v5430
  %v5464 = vunpack.c.l.b16 %v5431
  %v5465 = vunpack.c.l.b16 %v5432
  %v5466 = vunpack.c.l.b16 %v5433
  %v5467 = vunpack.c.l.b16 %v5434
  %v5468 = vpack.c.b16 %v5453, %v5452
  %v5469 = vpack.c.b16 %v5455, %v5454
  %v5470 = vpack.c.b16 %v5457, %v5456
  %v5471 = vpack.c.b16 %v5459, %v5458
  %v5472 = vpack.c.b16 %v5461, %v5460
  %v5473 = vpack.c.b16 %v5463, %v5462
  %v5474 = vpack.c.b16 %v5465, %v5464
  %v5475 = vpack.c.b16 %v5467, %v5466
  %5484 = vmatprep.subr.bf16.mxu0 0
  %5485 = vmatpush1.bf16.msra.mxu0 %v5468
  %5486 = vmatprep.subr.bf16.mxu0 0
  %5487 = vmatpush1.bf16.msra.mxu0 %v5469
  %5488 = vmatprep.subr.bf16.mxu0 0
  %5489 = vmatpush1.bf16.msra.mxu0 %v5470
  %5490 = vmatprep.subr.bf16.mxu0 0
  %5491 = vmatpush1.bf16.msra.mxu0 %v5471
  %5492 = vmatprep.subr.bf16.mxu0 0
  %5493 = vmatpush1.bf16.msra.mxu0 %v5472
  %5494 = vmatprep.subr.bf16.mxu0 0
  %5495 = vmatpush1.bf16.msra.mxu0 %v5473
  %5496 = vmatprep.subr.bf16.mxu0 0
  %5497 = vmatpush1.bf16.msra.mxu0 %v5474
  %5498 = vmatprep.subr.bf16.mxu0 0
  %5499 = vmatpush1.bf16.msra.mxu0 %v5475
  %5500 = vmatprep.subr.bf16.mxu0 0
  %5501 = vmatpush1.bf16.msra.mxu0 0
  %5502 = vmatprep.subr.bf16.mxu0 0
  %5503 = vmatpush1.bf16.msra.mxu0 0
  %5504 = vmatprep.subr.bf16.mxu0 0
  %5505 = vmatpush1.bf16.msra.mxu0 0
  %5506 = vmatprep.subr.bf16.mxu0 0
  %5507 = vmatpush1.bf16.msra.mxu0 0
  %5508 = vmatprep.subr.bf16.mxu0 0
  %5509 = vmatpush1.bf16.msra.mxu0 0
  %5510 = vmatprep.subr.bf16.mxu0 0
  %5511 = vmatpush1.bf16.msra.mxu0 0
  %5512 = vmatprep.subr.bf16.mxu0 0
  %5513 = vmatpush1.bf16.msra.mxu0 0
  %5514 = vmatprep.subr.bf16.mxu0 0
  %5515 = vmatpush1.bf16.msra.mxu0 0
  %5516 = vmatprep.mubr.bf16.mxu0 0
  %5517 = vmatmul.mubr.bf16.gmra.mrb[0].mxu0 %v5418
  %v5518 = vpop.f32.mrb[0].mxu0
  %v5519 = vadd.f32 %v5435, %v5518
  %v5520 = vpop.f32.mrb[0].mxu0
  %v5521 = vpop.f32.mrb[0].mxu0
  %v5522 = vpop.f32.mrb[0].mxu0
  %5523 = vdwg.mxu0
  %v5524 = vld [vmem:[%s6 + $0x27] ss:$0 sm:$0xff]
  %v5525 = vmul.f32 %v5519, %v5524
  %v5526 = vsel %vm48, %v5525, 0.0
  %5527 = vadd.xlane.f32.xlu0 %v5526
  %v5528 = vpop.xlane.xlu0 %5527
  %v5529 = vld [vmem:[%s6 + $0x40] ss:$0 sm:$0xff]
  %v5530 = vmul.f32 %v5330, %v5529
  %v5531 = vsel %vm48, %v5530, 0.0
  %5532 = vadd.xlane.f32.xlu0 %v5531
  %v5533 = vpop.xlane.xlu0 %5532
  %v5534 = vadd.f32 %v5528, %v5533
  %v5535 = vxor.u32 %v5534, 2147483648
  %v5536 = vmul.f32 %v5535, 1.442695
  %v5537 = vpow.pop %v5536
  %v5538 = vadd.f32 %v5537, 1.0
  %v5539 = vrcp.pop %v5538
  %v5540 = vmul.f32 1.0, %v5539
  %v5541 = vmul.f32 %v5519, %v5540
  %v5542 = vsub.f32 1.0, %v5540
  %v5543 = vmul.f32 %v5330, %v5542
  %v5544 = vadd.f32 %v5541, %v5543
  %5545 = vst.msk [vmem:[%s12] sm:$0xff] %vm48, %v5544
  // Predicated region
  $region50: #{forward.5} parent=0 // pred_check
    _
  $region51: #{forward.5} parent=0 // pred_check_branch
    %5547 = sbr.rel (0) target = $region53
  $region52: #{forward.5} parent=0 // pred_region
    _
  $region53: #{forward.5} parent=0 // pred_fallthru
    _
  // Predicated region
  $region54: #{forward.5} parent=0 // pred_check
    _
  $region55: #{forward.5} parent=0 // pred_check_branch
    %5549 = sbr.rel (0) target = $region57
  $region56: #{forward.5} parent=0 // pred_region
    _
  $region57: #{forward.5} parent=0 // pred_fallthru
    _

</llo_original>
